<compile_context>
chip_gen: v5e
topology: v5e:2x2
jax: 0.10.0
libtpu: 0.0.40
codegen_flags: <defaults>
</compile_context>

<pallas_src>
import jax
import jax.numpy as jnp
import numpy as np
from jax import lax
from jax.experimental import pallas as pl
from jax.experimental.pallas import tpu as pltpu

K = 4        # ConvTranspose2d kernel size
STRIDE = 2
PAD = 1
EPS = 1e-5


def _unet_up_kernel(xp_ref, w_ref, out_ref, lhs_ref):
    """One batch element per grid step.

    xp_ref : (1, H+2, W+2, Cin)   f32   NHWC input with a 1-pixel zero border
    w_ref  : (2, 2, 4*Cin, Cout)  bf16  fused per-(parity) weight matrices
    out_ref: (1, 2, 2, H*W, Cout) f32   per-parity conv -> IN -> ReLU planes
    lhs_ref: (H*W, 4*Cin)         bf16  VMEM scratch: fused-tap im2col LHS
    """
    _, Hp, Wp, Cin = xp_ref.shape
    H, W = Hp - 2, Wp - 2
    HW = H * W
    Cout = w_ref.shape[-1]

    # ---- pass 1: transposed conv via sub-pixel (parity) decomposition -------------------
    # Output pixel (2i+p, 2j+q) only depends on the 2x2 window of the padded input starting
    # at (i+p, j+q); tap (dh, dw) of parity (p, q) is ConvTranspose2d tap (3-p-2dh, 3-q-2dw).
    # All 4 taps are fused into one matmul with K = 4*Cin.
    ssum = jnp.zeros((1, Cout), jnp.float32)
    for p in range(2):
        # 6 shifted windows used by this row parity, sliced once and reused across q / dw.
        win = [[xp_ref[0, p + dh:p + dh + H, b:b + W, :]
                    .reshape(HW, Cin).astype(jnp.bfloat16)
                for b in range(3)] for dh in range(2)]
        for q in range(2):
            for dh in range(2):
                for dw in range(2):
                    t = 2 * dh + dw
                    lhs_ref[:, t * Cin:(t + 1) * Cin] = win[dh][q + dw]
            y = jnp.dot(lhs_ref[...], w_ref[p, q],
                        preferred_element_type=jnp.float32)          # (HW, Cout), f32 acc
            out_ref[0, p, q] = y                                      # raw plane, lane-dense
            ssum = ssum + jnp.sum(y, axis=0, keepdims=True)

    inv_n = 1.0 / float(4 * HW)                                       # 4*HW == Ho*Wo
    mean = ssum * inv_n                                               # (1, Cout)

    # ---- pass 2: centered (two-pass) variance over the resident raw planes --------------
    ssq = jnp.zeros((1, Cout), jnp.float32)
    for p in range(2):
        for q in range(2):
            d = out_ref[0, p, q] - mean
            ssq = ssq + jnp.sum(d * d, axis=0, keepdims=True)
    rstd = lax.rsqrt(ssq * inv_n + EPS)                               # biased var, eps=1e-5

    # ---- pass 3: InstanceNorm + ReLU in place --------------------------------------------
    for p in range(2):
        for q in range(2):
            out_ref[0, p, q] = jnp.maximum((out_ref[0, p, q] - mean) * rstd, 0.0)


@jax.jit
def unet_up_forward(x, skip, w_convT):
    """UNetUp.forward.

    x       : [N, Cin, H, W]    float32
    skip    : [N, Cs, 2H, 2W]   float32
    w_convT : [Cin, Cout, 4, 4] float32  (torch ConvTranspose2d weight layout)
    returns : [N, Cout + Cs, 2H, 2W]
    """
    N, Cin, H, W = x.shape
    Cout = w_convT.shape[1]
    Ho, Wo = STRIDE * H, STRIDE * W
    HW = H * W

    # Small-tensor glue: NHWC + 1-pixel zero border on the (small) input.
    xp = jnp.pad(jnp.transpose(x, (0, 2, 3, 1)), ((0, 0), (1, 1), (1, 1), (0, 0)))

    # w_taps[p, q, (2*dh+dw)*Cin + ci, co] = W[ci, co, 3-p-2dh, 3-q-2dw]
    w_khkw = jnp.transpose(w_convT, (2, 3, 0, 1))                  # (kh, kw, Cin, Cout)
    idx = 3 - np.arange(2)[:, None] - 2 * np.arange(2)[None, :]    # idx[p, dh] = 3 - p - 2dh
    w_taps = w_khkw[idx[:, None, :, None], idx[None, :, None, :]]  # (2, 2, 2, 2, Cin, Cout)
    w_taps = w_taps.reshape(2, 2, 4 * Cin, Cout).astype(jnp.bfloat16)

    y5 = pl.pallas_call(
        _unet_up_kernel,
        out_shape=jax.ShapeDtypeStruct((N, 2, 2, HW, Cout), x.dtype),
        grid_spec=pltpu.PrefetchScalarGridSpec(
            num_scalar_prefetch=0,
            grid=(N,),
            in_specs=[
                pl.BlockSpec((1, H + 2, W + 2, Cin), lambda n: (n, 0, 0, 0)),
                pl.BlockSpec((2, 2, 4 * Cin, Cout), lambda n: (0, 0, 0, 0)),
            ],
            out_specs=pl.BlockSpec((1, 2, 2, HW, Cout), lambda n: (n, 0, 0, 0, 0)),
            scratch_shapes=[pltpu.VMEM((HW, 4 * Cin), jnp.bfloat16)],
        ),
        compiler_params=pltpu.CompilerParams(
            dimension_semantics=("parallel",),
            vmem_limit_bytes=48 * 1024 * 1024,   # leaves headroom on v7x (64 MiB/core)
        ),
    )(xp, w_taps)

    # Layout glue in XLA (one copy pass, fused with the concat): interleave the 4 parity
    # planes into NCHW and concat the skip tensor, which never transits kernel VMEM.
    y = y5.reshape(N, 2, 2, H, W, Cout)
    y = jnp.transpose(y, (0, 5, 3, 1, 4, 2)).reshape(N, Cout, Ho, Wo)
    return jnp.concatenate([y, skip], axis=1)


if __name__ == "__main__":
    key = jax.random.PRNGKey(0)
    k1, k2, k3 = jax.random.split(key, 3)

    N, in_size, out_size, H, W = 2, 4, 4, 16, 16        # dropout=0.0 -> no dropout layer
    x = jax.random.normal(k1, (N, in_size, H, W), jnp.float32)
    skip = jax.random.normal(k2, (N, out_size, STRIDE * H, STRIDE * W), jnp.float32)
    # ConvTranspose2d weight shape: [in_channels, out_channels, 4, 4]
    w = 0.1 * jax.random.normal(k3, (in_size, out_size, K, K), jnp.float32)

    out = jax.block_until_ready(unet_up_forward(x, skip, w))

    # Pure-JAX reference using the same bf16 operand rounding and f32 accumulation.
    x_bf = x.astype(jnp.bfloat16).astype(jnp.float32)
    w_bf = w.astype(jnp.bfloat16).astype(jnp.float32)
    rhs = jnp.transpose(w_bf[:, :, ::-1, ::-1], (1, 0, 2, 3))      # OIHW
    y = lax.conv_general_dilated(
        x_bf, rhs, window_strides=(1, 1), padding=((2, 2), (2, 2)),
        lhs_dilation=(2, 2), dimension_numbers=("NCHW", "OIHW", "NCHW"),
        precision=lax.Precision.HIGHEST)
    mean = jnp.mean(y, axis=(2, 3), keepdims=True)
    var = jnp.mean(jnp.square(y - mean), axis=(2, 3), keepdims=True)
    yn = jnp.maximum((y - mean) * lax.rsqrt(var + EPS), 0.0)
    ref = jnp.concatenate([yn, skip], axis=1)

    np.testing.assert_allclose(np.asarray(out), np.asarray(ref), atol=1e-3, rtol=1e-3)
    assert out.shape == (N, out_size + out_size, STRIDE * H, STRIDE * W)
    print("KERNEL_OK")
</pallas_src>

<mosaic_0001>
module attributes {stable_mosaic.version = 11 : i64} {
  func.func @_unet_up_kernel(%arg0: i32, %arg1: memref<1x18x18x4xf32, #tpu.memory_space<vmem>>, %arg2: memref<2x2x16x4xbf16, #tpu.memory_space<vmem>>, %arg3: memref<1x2x2x256x4xf32, #tpu.memory_space<vmem>>, %arg4: memref<256x16xbf16, #tpu.memory_space<vmem>>) attributes {dimension_semantics = [#tpu.dimension_semantics<parallel>], iteration_bounds = array<i64: 2>, scalar_prefetch = 0 : i64, scratch_operands = 1 : i64, tpu.core_type = #tpu.core_type<tc>, window_params = [{transform_indices = @transform_0, window_bounds = array<i64: 1, 18, 18, 4>}, {pipeline_mode = #tpu.pipeline_mode<synchronous>, transform_indices = @transform_1, window_bounds = array<i64: 2, 2, 16, 4>}, {transform_indices = @transform_2, window_bounds = array<i64: 1, 2, 2, 256, 4>}]} {
    %cst = arith.constant 0.000000e+00 : f32
    %0 = vector.broadcast %cst : f32 to vector<1x4xf32>
    %c0 = arith.constant 0 : index
    %c0_0 = arith.constant 0 : index
    %c0_1 = arith.constant 0 : index
    %c0_2 = arith.constant 0 : index
    %1 = vector.load %arg1[%c0, %c0_0, %c0_1, %c0_2] : memref<1x18x18x4xf32, #tpu.memory_space<vmem>>, vector<1x16x16x4xf32>
    %2 = vector.shape_cast %1 : vector<1x16x16x4xf32> to vector<16x16x4xf32>
    %3 = vector.shape_cast %2 : vector<16x16x4xf32> to vector<256x4xf32>
    %4 = arith.truncf %3 : vector<256x4xf32> to vector<256x4xbf16>
    %c0_3 = arith.constant 0 : index
    %c0_4 = arith.constant 0 : index
    %c1 = arith.constant 1 : index
    %c0_5 = arith.constant 0 : index
    %5 = vector.load %arg1[%c0_3, %c0_4, %c1, %c0_5] : memref<1x18x18x4xf32, #tpu.memory_space<vmem>>, vector<1x16x16x4xf32>
    %6 = vector.shape_cast %5 : vector<1x16x16x4xf32> to vector<16x16x4xf32>
    %7 = vector.shape_cast %6 : vector<16x16x4xf32> to vector<256x4xf32>
    %8 = arith.truncf %7 : vector<256x4xf32> to vector<256x4xbf16>
    %c0_6 = arith.constant 0 : index
    %c0_7 = arith.constant 0 : index
    %c2 = arith.constant 2 : index
    %c0_8 = arith.constant 0 : index
    %9 = vector.load %arg1[%c0_6, %c0_7, %c2, %c0_8] : memref<1x18x18x4xf32, #tpu.memory_space<vmem>>, vector<1x16x16x4xf32>
    %10 = vector.shape_cast %9 : vector<1x16x16x4xf32> to vector<16x16x4xf32>
    %11 = vector.shape_cast %10 : vector<16x16x4xf32> to vector<256x4xf32>
    %12 = arith.truncf %11 : vector<256x4xf32> to vector<256x4xbf16>
    %c0_9 = arith.constant 0 : index
    %c1_10 = arith.constant 1 : index
    %c0_11 = arith.constant 0 : index
    %c0_12 = arith.constant 0 : index
    %13 = vector.load %arg1[%c0_9, %c1_10, %c0_11, %c0_12] : memref<1x18x18x4xf32, #tpu.memory_space<vmem>>, vector<1x16x16x4xf32>
    %14 = vector.shape_cast %13 : vector<1x16x16x4xf32> to vector<16x16x4xf32>
    %15 = vector.shape_cast %14 : vector<16x16x4xf32> to vector<256x4xf32>
    %16 = arith.truncf %15 : vector<256x4xf32> to vector<256x4xbf16>
    %c0_13 = arith.constant 0 : index
    %c1_14 = arith.constant 1 : index
    %c1_15 = arith.constant 1 : index
    %c0_16 = arith.constant 0 : index
    %17 = vector.load %arg1[%c0_13, %c1_14, %c1_15, %c0_16] : memref<1x18x18x4xf32, #tpu.memory_space<vmem>>, vector<1x16x16x4xf32>
    %18 = vector.shape_cast %17 : vector<1x16x16x4xf32> to vector<16x16x4xf32>
    %19 = vector.shape_cast %18 : vector<16x16x4xf32> to vector<256x4xf32>
    %20 = arith.truncf %19 : vector<256x4xf32> to vector<256x4xbf16>
    %c0_17 = arith.constant 0 : index
    %c1_18 = arith.constant 1 : index
    %c2_19 = arith.constant 2 : index
    %c0_20 = arith.constant 0 : index
    %21 = vector.load %arg1[%c0_17, %c1_18, %c2_19, %c0_20] : memref<1x18x18x4xf32, #tpu.memory_space<vmem>>, vector<1x16x16x4xf32>
    %22 = vector.shape_cast %21 : vector<1x16x16x4xf32> to vector<16x16x4xf32>
    %23 = vector.shape_cast %22 : vector<16x16x4xf32> to vector<256x4xf32>
    %24 = arith.truncf %23 : vector<256x4xf32> to vector<256x4xbf16>
    %c0_21 = arith.constant 0 : index
    %c0_22 = arith.constant 0 : index
    %25 = vector.load %arg4[%c0_21, %c0_22] : memref<256x16xbf16, #tpu.memory_space<vmem>>, vector<256x4xbf16>
    tpu.vector_store %arg4[%c0_21, %c0_22], %4 {strides = array<i32>} : memref<256x16xbf16, #tpu.memory_space<vmem>>, vector<256x4xbf16>,
    %c0_23 = arith.constant 0 : index
    %c4 = arith.constant 4 : index
    %26 = vector.load %arg4[%c0_23, %c4] : memref<256x16xbf16, #tpu.memory_space<vmem>>, vector<256x4xbf16>
    tpu.vector_store %arg4[%c0_23, %c4], %8 {strides = array<i32>} : memref<256x16xbf16, #tpu.memory_space<vmem>>, vector<256x4xbf16>,
    %c0_24 = arith.constant 0 : index
    %c8 = arith.constant 8 : index
    %27 = vector.load %arg4[%c0_24, %c8] : memref<256x16xbf16, #tpu.memory_space<vmem>>, vector<256x4xbf16>
    tpu.vector_store %arg4[%c0_24, %c8], %16 {strides = array<i32>} : memref<256x16xbf16, #tpu.memory_space<vmem>>, vector<256x4xbf16>,
    %c0_25 = arith.constant 0 : index
    %c12 = arith.constant 12 : index
    %28 = vector.load %arg4[%c0_25, %c12] : memref<256x16xbf16, #tpu.memory_space<vmem>>, vector<256x4xbf16>
    tpu.vector_store %arg4[%c0_25, %c12], %20 {strides = array<i32>} : memref<256x16xbf16, #tpu.memory_space<vmem>>, vector<256x4xbf16>,
    %c0_26 = arith.constant 0 : index
    %c0_27 = arith.constant 0 : index
    %29 = vector.load %arg4[%c0_26, %c0_27] : memref<256x16xbf16, #tpu.memory_space<vmem>>, vector<256x16xbf16>
    %c0_28 = arith.constant 0 : index
    %c0_29 = arith.constant 0 : index
    %c0_30 = arith.constant 0 : index
    %c0_31 = arith.constant 0 : index
    %30 = vector.load %arg2[%c0_28, %c0_29, %c0_30, %c0_31] : memref<2x2x16x4xbf16, #tpu.memory_space<vmem>>, vector<1x1x16x4xbf16>
    %31 = vector.shape_cast %30 : vector<1x1x16x4xbf16> to vector<16x4xbf16>
    %cst_32 = arith.constant dense<0.000000e+00> : vector<256x4xf32>
    %32 = tpu.matmul %29, %31, %cst_32 {dimension_numbers = #tpu.dot_dimension_numbers<[1], [0], [0], [1], [0, 0, 1, 1], [], []>} : vector<256x16xbf16>, vector<16x4xbf16>, vector<256x4xf32> -> vector<256x4xf32>
    %c0_33 = arith.constant 0 : index
    %c0_34 = arith.constant 0 : index
    %c0_35 = arith.constant 0 : index
    %c0_36 = arith.constant 0 : index
    %c0_37 = arith.constant 0 : index
    %33 = vector.load %arg3[%c0_33, %c0_34, %c0_35, %c0_36, %c0_37] : memref<1x2x2x256x4xf32, #tpu.memory_space<vmem>>, vector<1x1x1x256x4xf32>
    %34 = vector.shape_cast %33 : vector<1x1x1x256x4xf32> to vector<256x4xf32>
    %35 = vector.shape_cast %32 : vector<256x4xf32> to vector<1x1x1x256x4xf32>
    tpu.vector_store %arg3[%c0_33, %c0_34, %c0_35, %c0_36, %c0_37], %35 {strides = array<i32>} : memref<1x2x2x256x4xf32, #tpu.memory_space<vmem>>, vector<1x1x1x256x4xf32>,
    %cst_38 = arith.constant dense<0.000000e+00> : vector<4xf32>
    %36 = vector.multi_reduction <add>, %32, %cst_38 [0] : vector<256x4xf32> to vector<4xf32>
    %37 = vector.shape_cast %36 : vector<4xf32> to vector<1x4xf32>
    %38 = arith.addf %0, %37 : vector<1x4xf32>
    %c0_39 = arith.constant 0 : index
    %c0_40 = arith.constant 0 : index
    %39 = vector.load %arg4[%c0_39, %c0_40] : memref<256x16xbf16, #tpu.memory_space<vmem>>, vector<256x4xbf16>
    tpu.vector_store %arg4[%c0_39, %c0_40], %8 {strides = array<i32>} : memref<256x16xbf16, #tpu.memory_space<vmem>>, vector<256x4xbf16>,
    %c0_41 = arith.constant 0 : index
    %c4_42 = arith.constant 4 : index
    %40 = vector.load %arg4[%c0_41, %c4_42] : memref<256x16xbf16, #tpu.memory_space<vmem>>, vector<256x4xbf16>
    tpu.vector_store %arg4[%c0_41, %c4_42], %12 {strides = array<i32>} : memref<256x16xbf16, #tpu.memory_space<vmem>>, vector<256x4xbf16>,
    %c0_43 = arith.constant 0 : index
    %c8_44 = arith.constant 8 : index
    %41 = vector.load %arg4[%c0_43, %c8_44] : memref<256x16xbf16, #tpu.memory_space<vmem>>, vector<256x4xbf16>
    tpu.vector_store %arg4[%c0_43, %c8_44], %20 {strides = array<i32>} : memref<256x16xbf16, #tpu.memory_space<vmem>>, vector<256x4xbf16>,
    %c0_45 = arith.constant 0 : index
    %c12_46 = arith.constant 12 : index
    %42 = vector.load %arg4[%c0_45, %c12_46] : memref<256x16xbf16, #tpu.memory_space<vmem>>, vector<256x4xbf16>
    tpu.vector_store %arg4[%c0_45, %c12_46], %24 {strides = array<i32>} : memref<256x16xbf16, #tpu.memory_space<vmem>>, vector<256x4xbf16>,
    %c0_47 = arith.constant 0 : index
    %c0_48 = arith.constant 0 : index
    %43 = vector.load %arg4[%c0_47, %c0_48] : memref<256x16xbf16, #tpu.memory_space<vmem>>, vector<256x16xbf16>
    %c0_49 = arith.constant 0 : index
    %c1_50 = arith.constant 1 : index
    %c0_51 = arith.constant 0 : index
    %c0_52 = arith.constant 0 : index
    %44 = vector.load %arg2[%c0_49, %c1_50, %c0_51, %c0_52] : memref<2x2x16x4xbf16, #tpu.memory_space<vmem>>, vector<1x1x16x4xbf16>
    %45 = vector.shape_cast %44 : vector<1x1x16x4xbf16> to vector<16x4xbf16>
    %cst_53 = arith.constant dense<0.000000e+00> : vector<256x4xf32>
    %46 = tpu.matmul %43, %45, %cst_53 {dimension_numbers = #tpu.dot_dimension_numbers<[1], [0], [0], [1], [0, 0, 1, 1], [], []>} : vector<256x16xbf16>, vector<16x4xbf16>, vector<256x4xf32> -> vector<256x4xf32>
    %c0_54 = arith.constant 0 : index
    %c0_55 = arith.constant 0 : index
    %c1_56 = arith.constant 1 : index
    %c0_57 = arith.constant 0 : index
    %c0_58 = arith.constant 0 : index
    %47 = vector.load %arg3[%c0_54, %c0_55, %c1_56, %c0_57, %c0_58] : memref<1x2x2x256x4xf32, #tpu.memory_space<vmem>>, vector<1x1x1x256x4xf32>
    %48 = vector.shape_cast %47 : vector<1x1x1x256x4xf32> to vector<256x4xf32>
    %49 = vector.shape_cast %46 : vector<256x4xf32> to vector<1x1x1x256x4xf32>
    tpu.vector_store %arg3[%c0_54, %c0_55, %c1_56, %c0_57, %c0_58], %49 {strides = array<i32>} : memref<1x2x2x256x4xf32, #tpu.memory_space<vmem>>, vector<1x1x1x256x4xf32>,
    %cst_59 = arith.constant dense<0.000000e+00> : vector<4xf32>
    %50 = vector.multi_reduction <add>, %46, %cst_59 [0] : vector<256x4xf32> to vector<4xf32>
    %51 = vector.shape_cast %50 : vector<4xf32> to vector<1x4xf32>
    %52 = arith.addf %38, %51 : vector<1x4xf32>
    %c0_60 = arith.constant 0 : index
    %c1_61 = arith.constant 1 : index
    %c0_62 = arith.constant 0 : index
    %c0_63 = arith.constant 0 : index
    %53 = vector.load %arg1[%c0_60, %c1_61, %c0_62, %c0_63] : memref<1x18x18x4xf32, #tpu.memory_space<vmem>>, vector<1x16x16x4xf32>
    %54 = vector.shape_cast %53 : vector<1x16x16x4xf32> to vector<16x16x4xf32>
    %55 = vector.shape_cast %54 : vector<16x16x4xf32> to vector<256x4xf32>
    %56 = arith.truncf %55 : vector<256x4xf32> to vector<256x4xbf16>
    %c0_64 = arith.constant 0 : index
    %c1_65 = arith.constant 1 : index
    %c1_66 = arith.constant 1 : index
    %c0_67 = arith.constant 0 : index
    %57 = vector.load %arg1[%c0_64, %c1_65, %c1_66, %c0_67] : memref<1x18x18x4xf32, #tpu.memory_space<vmem>>, vector<1x16x16x4xf32>
    %58 = vector.shape_cast %57 : vector<1x16x16x4xf32> to vector<16x16x4xf32>
    %59 = vector.shape_cast %58 : vector<16x16x4xf32> to vector<256x4xf32>
    %60 = arith.truncf %59 : vector<256x4xf32> to vector<256x4xbf16>
    %c0_68 = arith.constant 0 : index
    %c1_69 = arith.constant 1 : index
    %c2_70 = arith.constant 2 : index
    %c0_71 = arith.constant 0 : index
    %61 = vector.load %arg1[%c0_68, %c1_69, %c2_70, %c0_71] : memref<1x18x18x4xf32, #tpu.memory_space<vmem>>, vector<1x16x16x4xf32>
    %62 = vector.shape_cast %61 : vector<1x16x16x4xf32> to vector<16x16x4xf32>
    %63 = vector.shape_cast %62 : vector<16x16x4xf32> to vector<256x4xf32>
    %64 = arith.truncf %63 : vector<256x4xf32> to vector<256x4xbf16>
    %c0_72 = arith.constant 0 : index
    %c2_73 = arith.constant 2 : index
    %c0_74 = arith.constant 0 : index
    %c0_75 = arith.constant 0 : index
    %65 = vector.load %arg1[%c0_72, %c2_73, %c0_74, %c0_75] : memref<1x18x18x4xf32, #tpu.memory_space<vmem>>, vector<1x16x16x4xf32>
    %66 = vector.shape_cast %65 : vector<1x16x16x4xf32> to vector<16x16x4xf32>
    %67 = vector.shape_cast %66 : vector<16x16x4xf32> to vector<256x4xf32>
    %68 = arith.truncf %67 : vector<256x4xf32> to vector<256x4xbf16>
    %c0_76 = arith.constant 0 : index
    %c2_77 = arith.constant 2 : index
    %c1_78 = arith.constant 1 : index
    %c0_79 = arith.constant 0 : index
    %69 = vector.load %arg1[%c0_76, %c2_77, %c1_78, %c0_79] : memref<1x18x18x4xf32, #tpu.memory_space<vmem>>, vector<1x16x16x4xf32>
    %70 = vector.shape_cast %69 : vector<1x16x16x4xf32> to vector<16x16x4xf32>
    %71 = vector.shape_cast %70 : vector<16x16x4xf32> to vector<256x4xf32>
    %72 = arith.truncf %71 : vector<256x4xf32> to vector<256x4xbf16>
    %c0_80 = arith.constant 0 : index
    %c2_81 = arith.constant 2 : index
    %c2_82 = arith.constant 2 : index
    %c0_83 = arith.constant 0 : index
    %73 = vector.load %arg1[%c0_80, %c2_81, %c2_82, %c0_83] : memref<1x18x18x4xf32, #tpu.memory_space<vmem>>, vector<1x16x16x4xf32>
    %74 = vector.shape_cast %73 : vector<1x16x16x4xf32> to vector<16x16x4xf32>
    %75 = vector.shape_cast %74 : vector<16x16x4xf32> to vector<256x4xf32>
    %76 = arith.truncf %75 : vector<256x4xf32> to vector<256x4xbf16>
    %c0_84 = arith.constant 0 : index
    %c0_85 = arith.constant 0 : index
    %77 = vector.load %arg4[%c0_84, %c0_85] : memref<256x16xbf16, #tpu.memory_space<vmem>>, vector<256x4xbf16>
    tpu.vector_store %arg4[%c0_84, %c0_85], %56 {strides = array<i32>} : memref<256x16xbf16, #tpu.memory_space<vmem>>, vector<256x4xbf16>,
    %c0_86 = arith.constant 0 : index
    %c4_87 = arith.constant 4 : index
    %78 = vector.load %arg4[%c0_86, %c4_87] : memref<256x16xbf16, #tpu.memory_space<vmem>>, vector<256x4xbf16>
    tpu.vector_store %arg4[%c0_86, %c4_87], %60 {strides = array<i32>} : memref<256x16xbf16, #tpu.memory_space<vmem>>, vector<256x4xbf16>,
    %c0_88 = arith.constant 0 : index
    %c8_89 = arith.constant 8 : index
    %79 = vector.load %arg4[%c0_88, %c8_89] : memref<256x16xbf16, #tpu.memory_space<vmem>>, vector<256x4xbf16>
    tpu.vector_store %arg4[%c0_88, %c8_89], %68 {strides = array<i32>} : memref<256x16xbf16, #tpu.memory_space<vmem>>, vector<256x4xbf16>,
    %c0_90 = arith.constant 0 : index
    %c12_91 = arith.constant 12 : index
    %80 = vector.load %arg4[%c0_90, %c12_91] : memref<256x16xbf16, #tpu.memory_space<vmem>>, vector<256x4xbf16>
    tpu.vector_store %arg4[%c0_90, %c12_91], %72 {strides = array<i32>} : memref<256x16xbf16, #tpu.memory_space<vmem>>, vector<256x4xbf16>,
    %c0_92 = arith.constant 0 : index
    %c0_93 = arith.constant 0 : index
    %81 = vector.load %arg4[%c0_92, %c0_93] : memref<256x16xbf16, #tpu.memory_space<vmem>>, vector<256x16xbf16>
    %c1_94 = arith.constant 1 : index
    %c0_95 = arith.constant 0 : index
    %c0_96 = arith.constant 0 : index
    %c0_97 = arith.constant 0 : index
    %82 = vector.load %arg2[%c1_94, %c0_95, %c0_96, %c0_97] : memref<2x2x16x4xbf16, #tpu.memory_space<vmem>>, vector<1x1x16x4xbf16>
    %83 = vector.shape_cast %82 : vector<1x1x16x4xbf16> to vector<16x4xbf16>
    %cst_98 = arith.constant dense<0.000000e+00> : vector<256x4xf32>
    %84 = tpu.matmul %81, %83, %cst_98 {dimension_numbers = #tpu.dot_dimension_numbers<[1], [0], [0], [1], [0, 0, 1, 1], [], []>} : vector<256x16xbf16>, vector<16x4xbf16>, vector<256x4xf32> -> vector<256x4xf32>
    %c0_99 = arith.constant 0 : index
    %c1_100 = arith.constant 1 : index
    %c0_101 = arith.constant 0 : index
    %c0_102 = arith.constant 0 : index
    %c0_103 = arith.constant 0 : index
    %85 = vector.load %arg3[%c0_99, %c1_100, %c0_101, %c0_102, %c0_103] : memref<1x2x2x256x4xf32, #tpu.memory_space<vmem>>, vector<1x1x1x256x4xf32>
    %86 = vector.shape_cast %85 : vector<1x1x1x256x4xf32> to vector<256x4xf32>
    %87 = vector.shape_cast %84 : vector<256x4xf32> to vector<1x1x1x256x4xf32>
    tpu.vector_store %arg3[%c0_99, %c1_100, %c0_101, %c0_102, %c0_103], %87 {strides = array<i32>} : memref<1x2x2x256x4xf32, #tpu.memory_space<vmem>>, vector<1x1x1x256x4xf32>,
    %cst_104 = arith.constant dense<0.000000e+00> : vector<4xf32>
    %88 = vector.multi_reduction <add>, %84, %cst_104 [0] : vector<256x4xf32> to vector<4xf32>
    %89 = vector.shape_cast %88 : vector<4xf32> to vector<1x4xf32>
    %90 = arith.addf %52, %89 : vector<1x4xf32>
    %c0_105 = arith.constant 0 : index
    %c0_106 = arith.constant 0 : index
    %91 = vector.load %arg4[%c0_105, %c0_106] : memref<256x16xbf16, #tpu.memory_space<vmem>>, vector<256x4xbf16>
    tpu.vector_store %arg4[%c0_105, %c0_106], %60 {strides = array<i32>} : memref<256x16xbf16, #tpu.memory_space<vmem>>, vector<256x4xbf16>,
    %c0_107 = arith.constant 0 : index
    %c4_108 = arith.constant 4 : index
    %92 = vector.load %arg4[%c0_107, %c4_108] : memref<256x16xbf16, #tpu.memory_space<vmem>>, vector<256x4xbf16>
    tpu.vector_store %arg4[%c0_107, %c4_108], %64 {strides = array<i32>} : memref<256x16xbf16, #tpu.memory_space<vmem>>, vector<256x4xbf16>,
    %c0_109 = arith.constant 0 : index
    %c8_110 = arith.constant 8 : index
    %93 = vector.load %arg4[%c0_109, %c8_110] : memref<256x16xbf16, #tpu.memory_space<vmem>>, vector<256x4xbf16>
    tpu.vector_store %arg4[%c0_109, %c8_110], %72 {strides = array<i32>} : memref<256x16xbf16, #tpu.memory_space<vmem>>, vector<256x4xbf16>,
    %c0_111 = arith.constant 0 : index
    %c12_112 = arith.constant 12 : index
    %94 = vector.load %arg4[%c0_111, %c12_112] : memref<256x16xbf16, #tpu.memory_space<vmem>>, vector<256x4xbf16>
    tpu.vector_store %arg4[%c0_111, %c12_112], %76 {strides = array<i32>} : memref<256x16xbf16, #tpu.memory_space<vmem>>, vector<256x4xbf16>,
    %c0_113 = arith.constant 0 : index
    %c0_114 = arith.constant 0 : index
    %95 = vector.load %arg4[%c0_113, %c0_114] : memref<256x16xbf16, #tpu.memory_space<vmem>>, vector<256x16xbf16>
    %c1_115 = arith.constant 1 : index
    %c1_116 = arith.constant 1 : index
    %c0_117 = arith.constant 0 : index
    %c0_118 = arith.constant 0 : index
    %96 = vector.load %arg2[%c1_115, %c1_116, %c0_117, %c0_118] : memref<2x2x16x4xbf16, #tpu.memory_space<vmem>>, vector<1x1x16x4xbf16>
    %97 = vector.shape_cast %96 : vector<1x1x16x4xbf16> to vector<16x4xbf16>
    %cst_119 = arith.constant dense<0.000000e+00> : vector<256x4xf32>
    %98 = tpu.matmul %95, %97, %cst_119 {dimension_numbers = #tpu.dot_dimension_numbers<[1], [0], [0], [1], [0, 0, 1, 1], [], []>} : vector<256x16xbf16>, vector<16x4xbf16>, vector<256x4xf32> -> vector<256x4xf32>
    %c0_120 = arith.constant 0 : index
    %c1_121 = arith.constant 1 : index
    %c1_122 = arith.constant 1 : index
    %c0_123 = arith.constant 0 : index
    %c0_124 = arith.constant 0 : index
    %99 = vector.load %arg3[%c0_120, %c1_121, %c1_122, %c0_123, %c0_124] : memref<1x2x2x256x4xf32, #tpu.memory_space<vmem>>, vector<1x1x1x256x4xf32>
    %100 = vector.shape_cast %99 : vector<1x1x1x256x4xf32> to vector<256x4xf32>
    %101 = vector.shape_cast %98 : vector<256x4xf32> to vector<1x1x1x256x4xf32>
    tpu.vector_store %arg3[%c0_120, %c1_121, %c1_122, %c0_123, %c0_124], %101 {strides = array<i32>} : memref<1x2x2x256x4xf32, #tpu.memory_space<vmem>>, vector<1x1x1x256x4xf32>,
    %cst_125 = arith.constant dense<0.000000e+00> : vector<4xf32>
    %102 = vector.multi_reduction <add>, %98, %cst_125 [0] : vector<256x4xf32> to vector<4xf32>
    %103 = vector.shape_cast %102 : vector<4xf32> to vector<1x4xf32>
    %104 = arith.addf %90, %103 : vector<1x4xf32>
    %cst_126 = arith.constant 9.765625E-4 : f32
    %105 = vector.broadcast %cst_126 : f32 to vector<1x4xf32>
    %106 = arith.mulf %104, %105 : vector<1x4xf32>
    %cst_127 = arith.constant 0.000000e+00 : f32
    %107 = vector.broadcast %cst_127 : f32 to vector<1x4xf32>
    %c0_128 = arith.constant 0 : index
    %c0_129 = arith.constant 0 : index
    %c0_130 = arith.constant 0 : index
    %c0_131 = arith.constant 0 : index
    %c0_132 = arith.constant 0 : index
    %108 = vector.load %arg3[%c0_128, %c0_129, %c0_130, %c0_131, %c0_132] : memref<1x2x2x256x4xf32, #tpu.memory_space<vmem>>, vector<1x1x1x256x4xf32>
    %109 = vector.shape_cast %108 : vector<1x1x1x256x4xf32> to vector<256x4xf32>
    %110 = vector.broadcast %106 : vector<1x4xf32> to vector<256x4xf32>
    %111 = arith.subf %109, %110 : vector<256x4xf32>
    %112 = arith.mulf %111, %111 : vector<256x4xf32>
    %cst_133 = arith.constant dense<0.000000e+00> : vector<4xf32>
    %113 = vector.multi_reduction <add>, %112, %cst_133 [0] : vector<256x4xf32> to vector<4xf32>
    %114 = vector.shape_cast %113 : vector<4xf32> to vector<1x4xf32>
    %115 = arith.addf %107, %114 : vector<1x4xf32>
    %c0_134 = arith.constant 0 : index
    %c0_135 = arith.constant 0 : index
    %c1_136 = arith.constant 1 : index
    %c0_137 = arith.constant 0 : index
    %c0_138 = arith.constant 0 : index
    %116 = vector.load %arg3[%c0_134, %c0_135, %c1_136, %c0_137, %c0_138] : memref<1x2x2x256x4xf32, #tpu.memory_space<vmem>>, vector<1x1x1x256x4xf32>
    %117 = vector.shape_cast %116 : vector<1x1x1x256x4xf32> to vector<256x4xf32>
    %118 = vector.broadcast %106 : vector<1x4xf32> to vector<256x4xf32>
    %119 = arith.subf %117, %118 : vector<256x4xf32>
    %120 = arith.mulf %119, %119 : vector<256x4xf32>
    %cst_139 = arith.constant dense<0.000000e+00> : vector<4xf32>
    %121 = vector.multi_reduction <add>, %120, %cst_139 [0] : vector<256x4xf32> to vector<4xf32>
    %122 = vector.shape_cast %121 : vector<4xf32> to vector<1x4xf32>
    %123 = arith.addf %115, %122 : vector<1x4xf32>
    %c0_140 = arith.constant 0 : index
    %c1_141 = arith.constant 1 : index
    %c0_142 = arith.constant 0 : index
    %c0_143 = arith.constant 0 : index
    %c0_144 = arith.constant 0 : index
    %124 = vector.load %arg3[%c0_140, %c1_141, %c0_142, %c0_143, %c0_144] : memref<1x2x2x256x4xf32, #tpu.memory_space<vmem>>, vector<1x1x1x256x4xf32>
    %125 = vector.shape_cast %124 : vector<1x1x1x256x4xf32> to vector<256x4xf32>
    %126 = vector.broadcast %106 : vector<1x4xf32> to vector<256x4xf32>
    %127 = arith.subf %125, %126 : vector<256x4xf32>
    %128 = arith.mulf %127, %127 : vector<256x4xf32>
    %cst_145 = arith.constant dense<0.000000e+00> : vector<4xf32>
    %129 = vector.multi_reduction <add>, %128, %cst_145 [0] : vector<256x4xf32> to vector<4xf32>
    %130 = vector.shape_cast %129 : vector<4xf32> to vector<1x4xf32>
    %131 = arith.addf %123, %130 : vector<1x4xf32>
    %c0_146 = arith.constant 0 : index
    %c1_147 = arith.constant 1 : index
    %c1_148 = arith.constant 1 : index
    %c0_149 = arith.constant 0 : index
    %c0_150 = arith.constant 0 : index
    %132 = vector.load %arg3[%c0_146, %c1_147, %c1_148, %c0_149, %c0_150] : memref<1x2x2x256x4xf32, #tpu.memory_space<vmem>>, vector<1x1x1x256x4xf32>
    %133 = vector.shape_cast %132 : vector<1x1x1x256x4xf32> to vector<256x4xf32>
    %134 = vector.broadcast %106 : vector<1x4xf32> to vector<256x4xf32>
    %135 = arith.subf %133, %134 : vector<256x4xf32>
    %136 = arith.mulf %135, %135 : vector<256x4xf32>
    %cst_151 = arith.constant dense<0.000000e+00> : vector<4xf32>
    %137 = vector.multi_reduction <add>, %136, %cst_151 [0] : vector<256x4xf32> to vector<4xf32>
    %138 = vector.shape_cast %137 : vector<4xf32> to vector<1x4xf32>
    %139 = arith.addf %131, %138 : vector<1x4xf32>
    %cst_152 = arith.constant 9.765625E-4 : f32
    %140 = vector.broadcast %cst_152 : f32 to vector<1x4xf32>
    %141 = arith.mulf %139, %140 : vector<1x4xf32>
    %cst_153 = arith.constant 9.99999974E-6 : f32
    %142 = vector.broadcast %cst_153 : f32 to vector<1x4xf32>
    %143 = arith.addf %141, %142 : vector<1x4xf32>
    %144 = math.rsqrt %143 : vector<1x4xf32>
    %c0_154 = arith.constant 0 : index
    %c0_155 = arith.constant 0 : index
    %c0_156 = arith.constant 0 : index
    %c0_157 = arith.constant 0 : index
    %c0_158 = arith.constant 0 : index
    %145 = vector.load %arg3[%c0_154, %c0_155, %c0_156, %c0_157, %c0_158] : memref<1x2x2x256x4xf32, #tpu.memory_space<vmem>>, vector<1x1x1x256x4xf32>
    %146 = vector.shape_cast %145 : vector<1x1x1x256x4xf32> to vector<256x4xf32>
    %147 = vector.broadcast %106 : vector<1x4xf32> to vector<256x4xf32>
    %148 = arith.subf %146, %147 : vector<256x4xf32>
    %149 = vector.broadcast %144 : vector<1x4xf32> to vector<256x4xf32>
    %150 = arith.mulf %148, %149 : vector<256x4xf32>
    %cst_159 = arith.constant 0.000000e+00 : f32
    %151 = vector.broadcast %cst_159 : f32 to vector<256x4xf32>
    %152 = arith.maximumf %150, %151 : vector<256x4xf32>
    %c0_160 = arith.constant 0 : index
    %c0_161 = arith.constant 0 : index
    %c0_162 = arith.constant 0 : index
    %c0_163 = arith.constant 0 : index
    %c0_164 = arith.constant 0 : index
    %153 = vector.load %arg3[%c0_160, %c0_161, %c0_162, %c0_163, %c0_164] : memref<1x2x2x256x4xf32, #tpu.memory_space<vmem>>, vector<1x1x1x256x4xf32>
    %154 = vector.shape_cast %153 : vector<1x1x1x256x4xf32> to vector<256x4xf32>
    %155 = vector.shape_cast %152 : vector<256x4xf32> to vector<1x1x1x256x4xf32>
    tpu.vector_store %arg3[%c0_160, %c0_161, %c0_162, %c0_163, %c0_164], %155 {strides = array<i32>} : memref<1x2x2x256x4xf32, #tpu.memory_space<vmem>>, vector<1x1x1x256x4xf32>,
    %c0_165 = arith.constant 0 : index
    %c0_166 = arith.constant 0 : index
    %c1_167 = arith.constant 1 : index
    %c0_168 = arith.constant 0 : index
    %c0_169 = arith.constant 0 : index
    %156 = vector.load %arg3[%c0_165, %c0_166, %c1_167, %c0_168, %c0_169] : memref<1x2x2x256x4xf32, #tpu.memory_space<vmem>>, vector<1x1x1x256x4xf32>
    %157 = vector.shape_cast %156 : vector<1x1x1x256x4xf32> to vector<256x4xf32>
    %158 = vector.broadcast %106 : vector<1x4xf32> to vector<256x4xf32>
    %159 = arith.subf %157, %158 : vector<256x4xf32>
    %160 = vector.broadcast %144 : vector<1x4xf32> to vector<256x4xf32>
    %161 = arith.mulf %159, %160 : vector<256x4xf32>
    %cst_170 = arith.constant 0.000000e+00 : f32
    %162 = vector.broadcast %cst_170 : f32 to vector<256x4xf32>
    %163 = arith.maximumf %161, %162 : vector<256x4xf32>
    %c0_171 = arith.constant 0 : index
    %c0_172 = arith.constant 0 : index
    %c1_173 = arith.constant 1 : index
    %c0_174 = arith.constant 0 : index
    %c0_175 = arith.constant 0 : index
    %164 = vector.load %arg3[%c0_171, %c0_172, %c1_173, %c0_174, %c0_175] : memref<1x2x2x256x4xf32, #tpu.memory_space<vmem>>, vector<1x1x1x256x4xf32>
    %165 = vector.shape_cast %164 : vector<1x1x1x256x4xf32> to vector<256x4xf32>
    %166 = vector.shape_cast %163 : vector<256x4xf32> to vector<1x1x1x256x4xf32>
    tpu.vector_store %arg3[%c0_171, %c0_172, %c1_173, %c0_174, %c0_175], %166 {strides = array<i32>} : memref<1x2x2x256x4xf32, #tpu.memory_space<vmem>>, vector<1x1x1x256x4xf32>,
    %c0_176 = arith.constant 0 : index
    %c1_177 = arith.constant 1 : index
    %c0_178 = arith.constant 0 : index
    %c0_179 = arith.constant 0 : index
    %c0_180 = arith.constant 0 : index
    %167 = vector.load %arg3[%c0_176, %c1_177, %c0_178, %c0_179, %c0_180] : memref<1x2x2x256x4xf32, #tpu.memory_space<vmem>>, vector<1x1x1x256x4xf32>
    %168 = vector.shape_cast %167 : vector<1x1x1x256x4xf32> to vector<256x4xf32>
    %169 = vector.broadcast %106 : vector<1x4xf32> to vector<256x4xf32>
    %170 = arith.subf %168, %169 : vector<256x4xf32>
    %171 = vector.broadcast %144 : vector<1x4xf32> to vector<256x4xf32>
    %172 = arith.mulf %170, %171 : vector<256x4xf32>
    %cst_181 = arith.constant 0.000000e+00 : f32
    %173 = vector.broadcast %cst_181 : f32 to vector<256x4xf32>
    %174 = arith.maximumf %172, %173 : vector<256x4xf32>
    %c0_182 = arith.constant 0 : index
    %c1_183 = arith.constant 1 : index
    %c0_184 = arith.constant 0 : index
    %c0_185 = arith.constant 0 : index
    %c0_186 = arith.constant 0 : index
    %175 = vector.load %arg3[%c0_182, %c1_183, %c0_184, %c0_185, %c0_186] : memref<1x2x2x256x4xf32, #tpu.memory_space<vmem>>, vector<1x1x1x256x4xf32>
    %176 = vector.shape_cast %175 : vector<1x1x1x256x4xf32> to vector<256x4xf32>
    %177 = vector.shape_cast %174 : vector<256x4xf32> to vector<1x1x1x256x4xf32>
    tpu.vector_store %arg3[%c0_182, %c1_183, %c0_184, %c0_185, %c0_186], %177 {strides = array<i32>} : memref<1x2x2x256x4xf32, #tpu.memory_space<vmem>>, vector<1x1x1x256x4xf32>,
    %c0_187 = arith.constant 0 : index
    %c1_188 = arith.constant 1 : index
    %c1_189 = arith.constant 1 : index
    %c0_190 = arith.constant 0 : index
    %c0_191 = arith.constant 0 : index
    %178 = vector.load %arg3[%c0_187, %c1_188, %c1_189, %c0_190, %c0_191] : memref<1x2x2x256x4xf32, #tpu.memory_space<vmem>>, vector<1x1x1x256x4xf32>
    %179 = vector.shape_cast %178 : vector<1x1x1x256x4xf32> to vector<256x4xf32>
    %180 = vector.broadcast %106 : vector<1x4xf32> to vector<256x4xf32>
    %181 = arith.subf %179, %180 : vector<256x4xf32>
    %182 = vector.broadcast %144 : vector<1x4xf32> to vector<256x4xf32>
    %183 = arith.mulf %181, %182 : vector<256x4xf32>
    %cst_192 = arith.constant 0.000000e+00 : f32
    %184 = vector.broadcast %cst_192 : f32 to vector<256x4xf32>
    %185 = arith.maximumf %183, %184 : vector<256x4xf32>
    %c0_193 = arith.constant 0 : index
    %c1_194 = arith.constant 1 : index
    %c1_195 = arith.constant 1 : index
    %c0_196 = arith.constant 0 : index
    %c0_197 = arith.constant 0 : index
    %186 = vector.load %arg3[%c0_193, %c1_194, %c1_195, %c0_196, %c0_197] : memref<1x2x2x256x4xf32, #tpu.memory_space<vmem>>, vector<1x1x1x256x4xf32>
    %187 = vector.shape_cast %186 : vector<1x1x1x256x4xf32> to vector<256x4xf32>
    %188 = vector.shape_cast %185 : vector<256x4xf32> to vector<1x1x1x256x4xf32>
    tpu.vector_store %arg3[%c0_193, %c1_194, %c1_195, %c0_196, %c0_197], %188 {strides = array<i32>} : memref<1x2x2x256x4xf32, #tpu.memory_space<vmem>>, vector<1x1x1x256x4xf32>,
    return
  }
  func.func @transform_0(%arg0: i32) -> (i32, i32, i32, i32) {
    %c0_i32 = arith.constant 0 : i32
    %c0_i32_0 = arith.constant 0 : i32
    %c0_i32_1 = arith.constant 0 : i32
    %c0_i32_2 = arith.constant 0 : i32
    return %arg0, %c0_i32, %c0_i32_0, %c0_i32_1 : i32, i32, i32, i32
  }
  func.func @transform_1(%arg0: i32) -> (i32, i32, i32, i32) {
    %c0_i32 = arith.constant 0 : i32
    %c0_i32_0 = arith.constant 0 : i32
    %c0_i32_1 = arith.constant 0 : i32
    %c0_i32_2 = arith.constant 0 : i32
    %c0_i32_3 = arith.constant 0 : i32
    return %c0_i32, %c0_i32_0, %c0_i32_1, %c0_i32_2 : i32, i32, i32, i32
  }
  func.func @transform_2(%arg0: i32) -> (i32, i32, i32, i32, i32) {
    %c0_i32 = arith.constant 0 : i32
    %c0_i32_0 = arith.constant 0 : i32
    %c0_i32_1 = arith.constant 0 : i32
    %c0_i32_2 = arith.constant 0 : i32
    %c0_i32_3 = arith.constant 0 : i32
    return %arg0, %c0_i32, %c0_i32_0, %c0_i32_1, %c0_i32_2 : i32, i32, i32, i32, i32
  }
}

</mosaic_0001>

<llo_original>
// kernel: unet_up_forward.1
$region0: #{unet_up_forward.1}
  #allocation0 [shape = 'u32[]', space=smem, size = 0x4, offset = 0x4, fixed_abs, tag = 'smem constant byte address 0x4 - core index']
  #allocation1 [shape = 'u32[72,128]{1,0:T(1,128)}', space=vmem, size = 0x9000, scoped, tag = 'internal scratch']
  #allocation2 [shape = 'bf16[256,16]{1,0:T(8,128)(2,1)}', space=vmem, size = 0x10000, scoped, tag = 'scratch operand']
  %s0 = inlined_call_operand.vmem [shape: f32[2,18,18,4], index: 0, kind: input, shape index: {}]
  %s1 = inlined_call_operand.vmem [shape: bf16[2,2,16,4], index: 1, kind: input, shape index: {}]
  %s2 = inlined_call_operand.vmem [shape: f32[2,2,2,256,4], index: 2, kind: output, shape index: {}]
  %s3 = sld [smem:[#allocation0]]
  $region41: #{unet_up_forward.1} parent=0
    _
  %s5 = ssub.s32 1, %s3
  %s6 = scalar_select 0, %s5, %s3
  loop: start=0, step=1, limit=4
  $region2: #{unet_up_forward.1} parent=0 // loop_pre_header
    _
  $region3: #{unet_up_forward.1} parent=0 // loop_header
    %s8 = sphi 0, %s12
    %p9 = scmp.ge.s32.totalorder %s8, 4
    %s18 = sphi 0, %s20
    %s21 = sphi 0, %s18
    %s22 = sphi 0, %s21
    %s38 = sphi 0, %s22
    %s42 = sphi 0, %s42
    %s44 = sphi 0, %s42
    %s45 = sphi 0, %s44
    %s59 = sphi 0, %s45
    %s65 = sphi 0, %s67
    %s68 = sphi 0, %s65
    %s69 = sphi 0, %s68
    %s85 = sphi 0, %s69
  $region4: #{unet_up_forward.1} parent=0 // loop_header_branch
    %11 = sbr.rel (%p9) target = $region8
  $region5: #{unet_up_forward.1} parent=0 // loop_body
    %s13 = ssub.s32 %s8, 1
    %s14 = ssub.s32 %s8, 2
    %s15 = sadd.s32 %s8, 1
    %s16 = ssub.s32 %s8, %s15
    %p17 = scmp.eq.s32.totalorder %s16, 0
    %s19 = sadd.s32 %s18, 1
    %s20 = scalar_select %p17, %s18, %s19
    %p23 = pneg %p17
    %p24 = scmp.eq.s32.totalorder %s8, 1
    %p25 = por %p23, %p24
    %p26 = scmp.ne.s32.totalorder %s18, %s21
    %p27 = scmp.eq.s32.totalorder %s8, 0
    %p28 = por %p26, %p27
    %p29 = scmp.ne.s32.totalorder %s18, %s21
    %p30 = scmp.eq.s32.totalorder %s13, 1
    %p31 = por %p29, %p30
    %p32 = scmp.ne.s32.totalorder %s21, %s22
    %p33 = scmp.eq.s32.totalorder %s13, 0
    %p34 = por %p32, %p33
    %p35 = scmp.ne.s32.totalorder %s21, %s22
    %p36 = scmp.eq.s32.totalorder %s14, 1
    %p37 = por %p35, %p36
    %p39 = scmp.ne.s32.totalorder %s22, %s38
    %p40 = scmp.eq.s32.totalorder %s14, 0
    %p41 = por %p39, %p40
    %s43 = sadd.s32 %s42, 1
    %p46 = scmp.eq.s32.totalorder %s8, 1
    %p47 = scmp.ne.s32.totalorder %s42, %s44
    %p48 = scmp.eq.s32.totalorder %s8, 0
    %p49 = por %p47, %p48
    %p50 = scmp.ne.s32.totalorder %s42, %s44
    %p51 = scmp.eq.s32.totalorder %s13, 1
    %p52 = por %p50, %p51
    %p53 = scmp.ne.s32.totalorder %s44, %s45
    %p54 = scmp.eq.s32.totalorder %s13, 0
    %p55 = por %p53, %p54
    %p56 = scmp.ne.s32.totalorder %s44, %s45
    %p57 = scmp.eq.s32.totalorder %s14, 1
    %p58 = por %p56, %p57
    %p60 = scmp.ne.s32.totalorder %s45, %s59
    %p61 = scmp.eq.s32.totalorder %s14, 0
    %p62 = por %p60, %p61
    %s63 = ssub.s32 %s8, %s15
    %p64 = scmp.eq.s32.totalorder %s63, 0
    %s66 = sadd.s32 %s65, 1
    %s67 = scalar_select %p64, %s65, %s66
    %p70 = pneg %p64
    %p71 = scmp.eq.s32.totalorder %s8, 1
    %p72 = por %p70, %p71
    %p73 = scmp.ne.s32.totalorder %s65, %s68
    %p74 = scmp.eq.s32.totalorder %s8, 0
    %p75 = por %p73, %p74
    %p76 = scmp.ne.s32.totalorder %s65, %s68
    %p77 = scmp.eq.s32.totalorder %s13, 1
    %p78 = por %p76, %p77
    %p79 = scmp.ne.s32.totalorder %s68, %s69
    %p80 = scmp.eq.s32.totalorder %s13, 0
    %p81 = por %p79, %p80
    %p82 = scmp.ne.s32.totalorder %s68, %s69
    %p83 = scmp.eq.s32.totalorder %s14, 1
    %p84 = por %p82, %p83
    %p86 = scmp.ne.s32.totalorder %s69, %s85
    %p87 = scmp.eq.s32.totalorder %s14, 0
    %p88 = por %p86, %p87
    %p89 = scmp.le.s32.totalorder 1, %s8
    %p90 = scmp.lt.s32.totalorder %s8, 3
    %p91 = pnand %p89, %p90
    %p92 = pneg %p91
    // Predicated region
    $region9: #{unet_up_forward.1} parent=5 // pred_check
      _
    $region10: #{unet_up_forward.1} parent=5 // pred_check_branch
      %94 = sbr.rel (%p91) target = $region12
    $region11: #{unet_up_forward.1} parent=5 // pred_region
      %s95 = ssub.s32 %s8, 1
      // Predicated region
      $region13: #{unet_up_forward.1} parent=11 // pred_check
        %p96 = pneg %p55
      $region14: #{unet_up_forward.1} parent=11 // pred_check_branch
        %98 = sbr.rel (%p96) target = $region16
      $region15: #{unet_up_forward.1} parent=11 // pred_region
        _
      $region16: #{unet_up_forward.1} parent=11 // pred_fallthru
        _
    $region12: #{unet_up_forward.1} parent=5 // pred_fallthru
      _
    %p99 = scmp.lt.s32.totalorder %s8, 2
    // Predicated region
    $region17: #{unet_up_forward.1} parent=5 // pred_check
      %p100 = pneg %p99
    $region18: #{unet_up_forward.1} parent=5 // pred_check_branch
      %102 = sbr.rel (%p100) target = $region20
    $region19: #{unet_up_forward.1} parent=5 // pred_region
      // Predicated region
      $region21: #{unet_up_forward.1} parent=19 // pred_check
        %p103 = pneg %p28
      $region22: #{unet_up_forward.1} parent=19 // pred_check_branch
        %105 = sbr.rel (%p103) target = $region24
      $region23: #{unet_up_forward.1} parent=19 // pred_region
        %p106 = scmp.lt.s32.totalorder %s8, 1
        %s107 = scalar_select %p106, %s8, 1
        %s108 = smul.addr %s107, 54
        %s109 = smul.addr %s108, 8
        %s110 = scalar_lea.vmem %s0, %s109
      $region24: #{unet_up_forward.1} parent=19 // pred_fallthru
        _
    $region20: #{unet_up_forward.1} parent=5 // pred_fallthru
      _
    %p111 = scmp.le.s32.totalorder 1, %s8
    %p112 = scmp.lt.s32.totalorder %s8, 3
    %p113 = pnand %p111, %p112
    %p114 = pneg %p113
    // Predicated region
    $region25: #{unet_up_forward.1} parent=5 // pred_check
      _
    $region26: #{unet_up_forward.1} parent=5 // pred_check_branch
      %116 = sbr.rel (%p113) target = $region28
    $region27: #{unet_up_forward.1} parent=5 // pred_region
      %s117 = ssub.s32 %s8, 1
      %p118 = scmp.lt.s32.totalorder %s13, 1
      %s119 = scalar_select %p118, %s13, 1
      %s120 = smul.addr %s119, 54
      %s121 = smul.addr %s120, 8
      %s122 = scalar_lea.vmem %s0, %s121
      %p123 = pneg %p34
      %p124 = pneg %p31
      %p125 = pneg %p55
      %p126 = pneg %p52
      %p127 = pneg %p81
      %p128 = pneg %p78
      %p129 = scmp.lt.s32.totalorder %s13, 1
      %s130 = scalar_select %p129, %s13, 1
      %s131 = smul.addr %s130, 128
      %s132 = smul.addr %s131, 8
      %s133 = scalar_lea.vmem %s2, %s132
      %p134 = scmp.lt.s32.totalorder %s13, 1
      %s135 = scalar_select %p134, %s13, 1
      %s136 = smul.addr %s135, 54
      %s137 = smul.addr %s136, 8
      %s138 = scalar_lea.vmem %s0, %s137
      %p139 = scmp.lt.s32.totalorder %s13, 1
      %s140 = scalar_select %p139, %s13, 1
      %s141 = smul.addr %s140, 128
      %s142 = smul.addr %s141, 8
      %s143 = scalar_lea.vmem %s2, %s142
      %v145 = vld [vmem:[%s138] sm:$0xff]
      %v146 = vld [vmem:[%s138 + $0x8] sm:$0xff]
      %v147 = vld [vmem:[%s138 + $0x18] sm:$0xff]
      %v148 = vld [vmem:[%s138 + $0x20] sm:$0xff]
      %v149 = vld [vmem:[%s138 + $0x30] sm:$0xff]
      %v150 = vld [vmem:[%s138 + $0x38] sm:$0xff]
      %v151 = vld [vmem:[%s138 + $0x48] sm:$0xff]
      %v152 = vld [vmem:[%s138 + $0x50] sm:$0xff]
      %v153 = vld [vmem:[%s138 + $0x60] sm:$0xff]
      %v154 = vld [vmem:[%s138 + $0x68] sm:$0xff]
      %v155 = vld [vmem:[%s138 + $0x78] sm:$0xff]
      %v156 = vld [vmem:[%s138 + $0x80] sm:$0xff]
      %v157 = vld [vmem:[%s138 + $0x90] sm:$0xff]
      %v158 = vld [vmem:[%s138 + $0x98] sm:$0xff]
      %v159 = vld [vmem:[%s138 + $0xa8] sm:$0xff]
      %v160 = vld [vmem:[%s138 + $0xb0] sm:$0xff]
      %v161 = vld [vmem:[%s138 + $0xc0] sm:$0xff]
      %v162 = vld [vmem:[%s138 + $0xc8] sm:$0xff]
      %v163 = vld [vmem:[%s138 + $0xd8] sm:$0xff]
      %v164 = vld [vmem:[%s138 + $0xe0] sm:$0xff]
      %v165 = vld [vmem:[%s138 + $0xf0] sm:$0xff]
      %v166 = vld [vmem:[%s138 + $0xf8] sm:$0xff]
      %v167 = vld [vmem:[%s138 + $0x108] sm:$0xff]
      %v168 = vld [vmem:[%s138 + $0x110] sm:$0xff]
      %v169 = vld [vmem:[%s138 + $0x120] sm:$0xff]
      %v170 = vld [vmem:[%s138 + $0x128] sm:$0xff]
      %v171 = vld [vmem:[%s138 + $0x138] sm:$0xff]
      %v172 = vld [vmem:[%s138 + $0x140] sm:$0xff]
      %v173 = vld [vmem:[%s138 + $0x150] sm:$0xff]
      %v174 = vld [vmem:[%s138 + $0x158] sm:$0xff]
      %v175 = vld [vmem:[%s138 + $0x168] sm:$0xff]
      %v176 = vld [vmem:[%s138 + $0x170] sm:$0xff]
      %v177 = vpack.c.bf16 %v145, %v145
      %v178 = vpack.c.bf16 %v146, %v146
      %v179 = vpack.c.bf16 %v147, %v147
      %v180 = vpack.c.bf16 %v148, %v148
      %v181 = vpack.c.bf16 %v149, %v149
      %v182 = vpack.c.bf16 %v150, %v150
      %v183 = vpack.c.bf16 %v151, %v151
      %v184 = vpack.c.bf16 %v152, %v152
      %v185 = vpack.c.bf16 %v153, %v153
      %v186 = vpack.c.bf16 %v154, %v154
      %v187 = vpack.c.bf16 %v155, %v155
      %v188 = vpack.c.bf16 %v156, %v156
      %v189 = vpack.c.bf16 %v157, %v157
      %v190 = vpack.c.bf16 %v158, %v158
      %v191 = vpack.c.bf16 %v159, %v159
      %v192 = vpack.c.bf16 %v160, %v160
      %v193 = vpack.c.bf16 %v161, %v161
      %v194 = vpack.c.bf16 %v162, %v162
      %v195 = vpack.c.bf16 %v163, %v163
      %v196 = vpack.c.bf16 %v164, %v164
      %v197 = vpack.c.bf16 %v165, %v165
      %v198 = vpack.c.bf16 %v166, %v166
      %v199 = vpack.c.bf16 %v167, %v167
      %v200 = vpack.c.bf16 %v168, %v168
      %v201 = vpack.c.bf16 %v169, %v169
      %v202 = vpack.c.bf16 %v170, %v170
      %v203 = vpack.c.bf16 %v171, %v171
      %v204 = vpack.c.bf16 %v172, %v172
      %v205 = vpack.c.bf16 %v173, %v173
      %v206 = vpack.c.bf16 %v174, %v174
      %v207 = vpack.c.bf16 %v175, %v175
      %v208 = vpack.c.bf16 %v176, %v176
      %v209 = vld [vmem:[%s138 + $0x1] sm:$0xff]
      %v210 = vld [vmem:[%s138 + $0x9] sm:$0xff]
      %v211 = vld [vmem:[%s138 + $0x19] sm:$0xff]
      %v212 = vld [vmem:[%s138 + $0x21] sm:$0xff]
      %v213 = vld [vmem:[%s138 + $0x31] sm:$0xff]
      %v214 = vld [vmem:[%s138 + $0x39] sm:$0xff]
      %v215 = vld [vmem:[%s138 + $0x49] sm:$0xff]
      %v216 = vld [vmem:[%s138 + $0x51] sm:$0xff]
      %v217 = vld [vmem:[%s138 + $0x61] sm:$0xff]
      %v218 = vld [vmem:[%s138 + $0x69] sm:$0xff]
      %v219 = vld [vmem:[%s138 + $0x79] sm:$0xff]
      %v220 = vld [vmem:[%s138 + $0x81] sm:$0xff]
      %v221 = vld [vmem:[%s138 + $0x91] sm:$0xff]
      %v222 = vld [vmem:[%s138 + $0x99] sm:$0xff]
      %v223 = vld [vmem:[%s138 + $0xa9] sm:$0xff]
      %v224 = vld [vmem:[%s138 + $0xb1] sm:$0xff]
      %v225 = vld [vmem:[%s138 + $0xc1] sm:$0xff]
      %v226 = vld [vmem:[%s138 + $0xc9] sm:$0xff]
      %v227 = vld [vmem:[%s138 + $0xd9] sm:$0xff]
      %v228 = vld [vmem:[%s138 + $0xe1] sm:$0xff]
      %v229 = vld [vmem:[%s138 + $0xf1] sm:$0xff]
      %v230 = vld [vmem:[%s138 + $0xf9] sm:$0xff]
      %v231 = vld [vmem:[%s138 + $0x109] sm:$0xff]
      %v232 = vld [vmem:[%s138 + $0x111] sm:$0xff]
      %v233 = vld [vmem:[%s138 + $0x121] sm:$0xff]
      %v234 = vld [vmem:[%s138 + $0x129] sm:$0xff]
      %v235 = vld [vmem:[%s138 + $0x139] sm:$0xff]
      %v236 = vld [vmem:[%s138 + $0x141] sm:$0xff]
      %v237 = vld [vmem:[%s138 + $0x151] sm:$0xff]
      %v238 = vld [vmem:[%s138 + $0x159] sm:$0xff]
      %v239 = vld [vmem:[%s138 + $0x169] sm:$0xff]
      %v240 = vld [vmem:[%s138 + $0x171] sm:$0xff]
      %v241 = vpack.c.bf16 %v209, %v209
      %v242 = vpack.c.bf16 %v210, %v210
      %v243 = vpack.c.bf16 %v211, %v211
      %v244 = vpack.c.bf16 %v212, %v212
      %v245 = vpack.c.bf16 %v213, %v213
      %v246 = vpack.c.bf16 %v214, %v214
      %v247 = vpack.c.bf16 %v215, %v215
      %v248 = vpack.c.bf16 %v216, %v216
      %v249 = vpack.c.bf16 %v217, %v217
      %v250 = vpack.c.bf16 %v218, %v218
      %v251 = vpack.c.bf16 %v219, %v219
      %v252 = vpack.c.bf16 %v220, %v220
      %v253 = vpack.c.bf16 %v221, %v221
      %v254 = vpack.c.bf16 %v222, %v222
      %v255 = vpack.c.bf16 %v223, %v223
      %v256 = vpack.c.bf16 %v224, %v224
      %v257 = vpack.c.bf16 %v225, %v225
      %v258 = vpack.c.bf16 %v226, %v226
      %v259 = vpack.c.bf16 %v227, %v227
      %v260 = vpack.c.bf16 %v228, %v228
      %v261 = vpack.c.bf16 %v229, %v229
      %v262 = vpack.c.bf16 %v230, %v230
      %v263 = vpack.c.bf16 %v231, %v231
      %v264 = vpack.c.bf16 %v232, %v232
      %v265 = vpack.c.bf16 %v233, %v233
      %v266 = vpack.c.bf16 %v234, %v234
      %v267 = vpack.c.bf16 %v235, %v235
      %v268 = vpack.c.bf16 %v236, %v236
      %v269 = vpack.c.bf16 %v237, %v237
      %v270 = vpack.c.bf16 %v238, %v238
      %v271 = vpack.c.bf16 %v239, %v239
      %v272 = vpack.c.bf16 %v240, %v240
      %v273 = vld [vmem:[%s138 + $0x2] sm:$0xff]
      %v274 = vld [vmem:[%s138 + $0xa] sm:$0xff]
      %v275 = vld [vmem:[%s138 + $0x1a] sm:$0xff]
      %v276 = vld [vmem:[%s138 + $0x22] sm:$0xff]
      %v277 = vld [vmem:[%s138 + $0x32] sm:$0xff]
      %v278 = vld [vmem:[%s138 + $0x3a] sm:$0xff]
      %v279 = vld [vmem:[%s138 + $0x4a] sm:$0xff]
      %v280 = vld [vmem:[%s138 + $0x52] sm:$0xff]
      %v281 = vld [vmem:[%s138 + $0x62] sm:$0xff]
      %v282 = vld [vmem:[%s138 + $0x6a] sm:$0xff]
      %v283 = vld [vmem:[%s138 + $0x7a] sm:$0xff]
      %v284 = vld [vmem:[%s138 + $0x82] sm:$0xff]
      %v285 = vld [vmem:[%s138 + $0x92] sm:$0xff]
      %v286 = vld [vmem:[%s138 + $0x9a] sm:$0xff]
      %v287 = vld [vmem:[%s138 + $0xaa] sm:$0xff]
      %v288 = vld [vmem:[%s138 + $0xb2] sm:$0xff]
      %v289 = vld [vmem:[%s138 + $0xc2] sm:$0xff]
      %v290 = vld [vmem:[%s138 + $0xca] sm:$0xff]
      %v291 = vld [vmem:[%s138 + $0xda] sm:$0xff]
      %v292 = vld [vmem:[%s138 + $0xe2] sm:$0xff]
      %v293 = vld [vmem:[%s138 + $0xf2] sm:$0xff]
      %v294 = vld [vmem:[%s138 + $0xfa] sm:$0xff]
      %v295 = vld [vmem:[%s138 + $0x10a] sm:$0xff]
      %v296 = vld [vmem:[%s138 + $0x112] sm:$0xff]
      %v297 = vld [vmem:[%s138 + $0x122] sm:$0xff]
      %v298 = vld [vmem:[%s138 + $0x12a] sm:$0xff]
      %v299 = vld [vmem:[%s138 + $0x13a] sm:$0xff]
      %v300 = vld [vmem:[%s138 + $0x142] sm:$0xff]
      %v301 = vld [vmem:[%s138 + $0x152] sm:$0xff]
      %v302 = vld [vmem:[%s138 + $0x15a] sm:$0xff]
      %v303 = vld [vmem:[%s138 + $0x16a] sm:$0xff]
      %v304 = vld [vmem:[%s138 + $0x172] sm:$0xff]
      %v305 = vpack.c.bf16 %v273, %v273
      %v306 = vpack.c.bf16 %v274, %v274
      %v307 = vpack.c.bf16 %v275, %v275
      %v308 = vpack.c.bf16 %v276, %v276
      %v309 = vpack.c.bf16 %v277, %v277
      %v310 = vpack.c.bf16 %v278, %v278
      %v311 = vpack.c.bf16 %v279, %v279
      %v312 = vpack.c.bf16 %v280, %v280
      %v313 = vpack.c.bf16 %v281, %v281
      %v314 = vpack.c.bf16 %v282, %v282
      %v315 = vpack.c.bf16 %v283, %v283
      %v316 = vpack.c.bf16 %v284, %v284
      %v317 = vpack.c.bf16 %v285, %v285
      %v318 = vpack.c.bf16 %v286, %v286
      %v319 = vpack.c.bf16 %v287, %v287
      %v320 = vpack.c.bf16 %v288, %v288
      %v321 = vpack.c.bf16 %v289, %v289
      %v322 = vpack.c.bf16 %v290, %v290
      %v323 = vpack.c.bf16 %v291, %v291
      %v324 = vpack.c.bf16 %v292, %v292
      %v325 = vpack.c.bf16 %v293, %v293
      %v326 = vpack.c.bf16 %v294, %v294
      %v327 = vpack.c.bf16 %v295, %v295
      %v328 = vpack.c.bf16 %v296, %v296
      %v329 = vpack.c.bf16 %v297, %v297
      %v330 = vpack.c.bf16 %v298, %v298
      %v331 = vpack.c.bf16 %v299, %v299
      %v332 = vpack.c.bf16 %v300, %v300
      %v333 = vpack.c.bf16 %v301, %v301
      %v334 = vpack.c.bf16 %v302, %v302
      %v335 = vpack.c.bf16 %v303, %v303
      %v336 = vpack.c.bf16 %v304, %v304
      %s337 = scalar_lea.vmem %s138, 24
      %v338 = vld [vmem:[%s337] sm:$0xff]
      %v339 = vld [vmem:[%s337 + $0x8] sm:$0xff]
      %v340 = vld [vmem:[%s337 + $0x18] sm:$0xff]
      %v341 = vld [vmem:[%s337 + $0x20] sm:$0xff]
      %v342 = vld [vmem:[%s337 + $0x30] sm:$0xff]
      %v343 = vld [vmem:[%s337 + $0x38] sm:$0xff]
      %v344 = vld [vmem:[%s337 + $0x48] sm:$0xff]
      %v345 = vld [vmem:[%s337 + $0x50] sm:$0xff]
      %v346 = vld [vmem:[%s337 + $0x60] sm:$0xff]
      %v347 = vld [vmem:[%s337 + $0x68] sm:$0xff]
      %v348 = vld [vmem:[%s337 + $0x78] sm:$0xff]
      %v349 = vld [vmem:[%s337 + $0x80] sm:$0xff]
      %v350 = vld [vmem:[%s337 + $0x90] sm:$0xff]
      %v351 = vld [vmem:[%s337 + $0x98] sm:$0xff]
      %v352 = vld [vmem:[%s337 + $0xa8] sm:$0xff]
      %v353 = vld [vmem:[%s337 + $0xb0] sm:$0xff]
      %v354 = vld [vmem:[%s337 + $0xc0] sm:$0xff]
      %v355 = vld [vmem:[%s337 + $0xc8] sm:$0xff]
      %v356 = vld [vmem:[%s337 + $0xd8] sm:$0xff]
      %v357 = vld [vmem:[%s337 + $0xe0] sm:$0xff]
      %v358 = vld [vmem:[%s337 + $0xf0] sm:$0xff]
      %v359 = vld [vmem:[%s337 + $0xf8] sm:$0xff]
      %v360 = vld [vmem:[%s337 + $0x108] sm:$0xff]
      %v361 = vld [vmem:[%s337 + $0x110] sm:$0xff]
      %v362 = vld [vmem:[%s337 + $0x120] sm:$0xff]
      %v363 = vld [vmem:[%s337 + $0x128] sm:$0xff]
      %v364 = vld [vmem:[%s337 + $0x138] sm:$0xff]
      %v365 = vld [vmem:[%s337 + $0x140] sm:$0xff]
      %v366 = vld [vmem:[%s337 + $0x150] sm:$0xff]
      %v367 = vld [vmem:[%s337 + $0x158] sm:$0xff]
      %v368 = vld [vmem:[%s337 + $0x168] sm:$0xff]
      %v369 = vld [vmem:[%s337 + $0x170] sm:$0xff]
      %v370 = vpack.c.bf16 %v338, %v338
      %v371 = vpack.c.bf16 %v339, %v339
      %v372 = vpack.c.bf16 %v340, %v340
      %v373 = vpack.c.bf16 %v341, %v341
      %v374 = vpack.c.bf16 %v342, %v342
      %v375 = vpack.c.bf16 %v343, %v343
      %v376 = vpack.c.bf16 %v344, %v344
      %v377 = vpack.c.bf16 %v345, %v345
      %v378 = vpack.c.bf16 %v346, %v346
      %v379 = vpack.c.bf16 %v347, %v347
      %v380 = vpack.c.bf16 %v348, %v348
      %v381 = vpack.c.bf16 %v349, %v349
      %v382 = vpack.c.bf16 %v350, %v350
      %v383 = vpack.c.bf16 %v351, %v351
      %v384 = vpack.c.bf16 %v352, %v352
      %v385 = vpack.c.bf16 %v353, %v353
      %v386 = vpack.c.bf16 %v354, %v354
      %v387 = vpack.c.bf16 %v355, %v355
      %v388 = vpack.c.bf16 %v356, %v356
      %v389 = vpack.c.bf16 %v357, %v357
      %v390 = vpack.c.bf16 %v358, %v358
      %v391 = vpack.c.bf16 %v359, %v359
      %v392 = vpack.c.bf16 %v360, %v360
      %v393 = vpack.c.bf16 %v361, %v361
      %v394 = vpack.c.bf16 %v362, %v362
      %v395 = vpack.c.bf16 %v363, %v363
      %v396 = vpack.c.bf16 %v364, %v364
      %v397 = vpack.c.bf16 %v365, %v365
      %v398 = vpack.c.bf16 %v366, %v366
      %v399 = vpack.c.bf16 %v367, %v367
      %v400 = vpack.c.bf16 %v368, %v368
      %v401 = vpack.c.bf16 %v369, %v369
      %v402 = vld [vmem:[%s337 + $0x1] sm:$0xff]
      %v403 = vld [vmem:[%s337 + $0x9] sm:$0xff]
      %v404 = vld [vmem:[%s337 + $0x19] sm:$0xff]
      %v405 = vld [vmem:[%s337 + $0x21] sm:$0xff]
      %v406 = vld [vmem:[%s337 + $0x31] sm:$0xff]
      %v407 = vld [vmem:[%s337 + $0x39] sm:$0xff]
      %v408 = vld [vmem:[%s337 + $0x49] sm:$0xff]
      %v409 = vld [vmem:[%s337 + $0x51] sm:$0xff]
      %v410 = vld [vmem:[%s337 + $0x61] sm:$0xff]
      %v411 = vld [vmem:[%s337 + $0x69] sm:$0xff]
      %v412 = vld [vmem:[%s337 + $0x79] sm:$0xff]
      %v413 = vld [vmem:[%s337 + $0x81] sm:$0xff]
      %v414 = vld [vmem:[%s337 + $0x91] sm:$0xff]
      %v415 = vld [vmem:[%s337 + $0x99] sm:$0xff]
      %v416 = vld [vmem:[%s337 + $0xa9] sm:$0xff]
      %v417 = vld [vmem:[%s337 + $0xb1] sm:$0xff]
      %v418 = vld [vmem:[%s337 + $0xc1] sm:$0xff]
      %v419 = vld [vmem:[%s337 + $0xc9] sm:$0xff]
      %v420 = vld [vmem:[%s337 + $0xd9] sm:$0xff]
      %v421 = vld [vmem:[%s337 + $0xe1] sm:$0xff]
      %v422 = vld [vmem:[%s337 + $0xf1] sm:$0xff]
      %v423 = vld [vmem:[%s337 + $0xf9] sm:$0xff]
      %v424 = vld [vmem:[%s337 + $0x109] sm:$0xff]
      %v425 = vld [vmem:[%s337 + $0x111] sm:$0xff]
      %v426 = vld [vmem:[%s337 + $0x121] sm:$0xff]
      %v427 = vld [vmem:[%s337 + $0x129] sm:$0xff]
      %v428 = vld [vmem:[%s337 + $0x139] sm:$0xff]
      %v429 = vld [vmem:[%s337 + $0x141] sm:$0xff]
      %v430 = vld [vmem:[%s337 + $0x151] sm:$0xff]
      %v431 = vld [vmem:[%s337 + $0x159] sm:$0xff]
      %v432 = vld [vmem:[%s337 + $0x169] sm:$0xff]
      %v433 = vld [vmem:[%s337 + $0x171] sm:$0xff]
      %v434 = vpack.c.bf16 %v402, %v402
      %v435 = vpack.c.bf16 %v403, %v403
      %v436 = vpack.c.bf16 %v404, %v404
      %v437 = vpack.c.bf16 %v405, %v405
      %v438 = vpack.c.bf16 %v406, %v406
      %v439 = vpack.c.bf16 %v407, %v407
      %v440 = vpack.c.bf16 %v408, %v408
      %v441 = vpack.c.bf16 %v409, %v409
      %v442 = vpack.c.bf16 %v410, %v410
      %v443 = vpack.c.bf16 %v411, %v411
      %v444 = vpack.c.bf16 %v412, %v412
      %v445 = vpack.c.bf16 %v413, %v413
      %v446 = vpack.c.bf16 %v414, %v414
      %v447 = vpack.c.bf16 %v415, %v415
      %v448 = vpack.c.bf16 %v416, %v416
      %v449 = vpack.c.bf16 %v417, %v417
      %v450 = vpack.c.bf16 %v418, %v418
      %v451 = vpack.c.bf16 %v419, %v419
      %v452 = vpack.c.bf16 %v420, %v420
      %v453 = vpack.c.bf16 %v421, %v421
      %v454 = vpack.c.bf16 %v422, %v422
      %v455 = vpack.c.bf16 %v423, %v423
      %v456 = vpack.c.bf16 %v424, %v424
      %v457 = vpack.c.bf16 %v425, %v425
      %v458 = vpack.c.bf16 %v426, %v426
      %v459 = vpack.c.bf16 %v427, %v427
      %v460 = vpack.c.bf16 %v428, %v428
      %v461 = vpack.c.bf16 %v429, %v429
      %v462 = vpack.c.bf16 %v430, %v430
      %v463 = vpack.c.bf16 %v431, %v431
      %v464 = vpack.c.bf16 %v432, %v432
      %v465 = vpack.c.bf16 %v433, %v433
      %v466 = vld [vmem:[%s337 + $0x2] sm:$0xff]
      %v467 = vld [vmem:[%s337 + $0xa] sm:$0xff]
      %v468 = vld [vmem:[%s337 + $0x1a] sm:$0xff]
      %v469 = vld [vmem:[%s337 + $0x22] sm:$0xff]
      %v470 = vld [vmem:[%s337 + $0x32] sm:$0xff]
      %v471 = vld [vmem:[%s337 + $0x3a] sm:$0xff]
      %v472 = vld [vmem:[%s337 + $0x4a] sm:$0xff]
      %v473 = vld [vmem:[%s337 + $0x52] sm:$0xff]
      %v474 = vld [vmem:[%s337 + $0x62] sm:$0xff]
      %v475 = vld [vmem:[%s337 + $0x6a] sm:$0xff]
      %v476 = vld [vmem:[%s337 + $0x7a] sm:$0xff]
      %v477 = vld [vmem:[%s337 + $0x82] sm:$0xff]
      %v478 = vld [vmem:[%s337 + $0x92] sm:$0xff]
      %v479 = vld [vmem:[%s337 + $0x9a] sm:$0xff]
      %v480 = vld [vmem:[%s337 + $0xaa] sm:$0xff]
      %v481 = vld [vmem:[%s337 + $0xb2] sm:$0xff]
      %v482 = vld [vmem:[%s337 + $0xc2] sm:$0xff]
      %v483 = vld [vmem:[%s337 + $0xca] sm:$0xff]
      %v484 = vld [vmem:[%s337 + $0xda] sm:$0xff]
      %v485 = vld [vmem:[%s337 + $0xe2] sm:$0xff]
      %v486 = vld [vmem:[%s337 + $0xf2] sm:$0xff]
      %v487 = vld [vmem:[%s337 + $0xfa] sm:$0xff]
      %v488 = vld [vmem:[%s337 + $0x10a] sm:$0xff]
      %v489 = vld [vmem:[%s337 + $0x112] sm:$0xff]
      %v490 = vld [vmem:[%s337 + $0x122] sm:$0xff]
      %v491 = vld [vmem:[%s337 + $0x12a] sm:$0xff]
      %v492 = vld [vmem:[%s337 + $0x13a] sm:$0xff]
      %v493 = vld [vmem:[%s337 + $0x142] sm:$0xff]
      %v494 = vld [vmem:[%s337 + $0x152] sm:$0xff]
      %v495 = vld [vmem:[%s337 + $0x15a] sm:$0xff]
      %v496 = vld [vmem:[%s337 + $0x16a] sm:$0xff]
      %v497 = vld [vmem:[%s337 + $0x172] sm:$0xff]
      %v498 = vpack.c.bf16 %v466, %v466
      %v499 = vpack.c.bf16 %v467, %v467
      %v500 = vpack.c.bf16 %v468, %v468
      %v501 = vpack.c.bf16 %v469, %v469
      %v502 = vpack.c.bf16 %v470, %v470
      %v503 = vpack.c.bf16 %v471, %v471
      %v504 = vpack.c.bf16 %v472, %v472
      %v505 = vpack.c.bf16 %v473, %v473
      %v506 = vpack.c.bf16 %v474, %v474
      %v507 = vpack.c.bf16 %v475, %v475
      %v508 = vpack.c.bf16 %v476, %v476
      %v509 = vpack.c.bf16 %v477, %v477
      %v510 = vpack.c.bf16 %v478, %v478
      %v511 = vpack.c.bf16 %v479, %v479
      %v512 = vpack.c.bf16 %v480, %v480
      %v513 = vpack.c.bf16 %v481, %v481
      %v514 = vpack.c.bf16 %v482, %v482
      %v515 = vpack.c.bf16 %v483, %v483
      %v516 = vpack.c.bf16 %v484, %v484
      %v517 = vpack.c.bf16 %v485, %v485
      %v518 = vpack.c.bf16 %v486, %v486
      %v519 = vpack.c.bf16 %v487, %v487
      %v520 = vpack.c.bf16 %v488, %v488
      %v521 = vpack.c.bf16 %v489, %v489
      %v522 = vpack.c.bf16 %v490, %v490
      %v523 = vpack.c.bf16 %v491, %v491
      %v524 = vpack.c.bf16 %v492, %v492
      %v525 = vpack.c.bf16 %v493, %v493
      %v526 = vpack.c.bf16 %v494, %v494
      %v527 = vpack.c.bf16 %v495, %v495
      %v528 = vpack.c.bf16 %v496, %v496
      %v529 = vpack.c.bf16 %v497, %v497
      %vm530 = vcmask 27648
      %531 = vst.msk [vmem:[#allocation2] sm:$0xf] %vm530, %v177
      %532 = vst.msk [vmem:[#allocation2 + $0x4] sm:$0xf] %vm530, %v178
      %533 = vst.msk [vmem:[#allocation2 + $0x8] sm:$0xf] %vm530, %v179
      %534 = vst.msk [vmem:[#allocation2 + $0xc] sm:$0xf] %vm530, %v180
      %535 = vst.msk [vmem:[#allocation2 + $0x10] sm:$0xf] %vm530, %v181
      %536 = vst.msk [vmem:[#allocation2 + $0x14] sm:$0xf] %vm530, %v182
      %537 = vst.msk [vmem:[#allocation2 + $0x18] sm:$0xf] %vm530, %v183
      %538 = vst.msk [vmem:[#allocation2 + $0x1c] sm:$0xf] %vm530, %v184
      %539 = vst.msk [vmem:[#allocation2 + $0x20] sm:$0xf] %vm530, %v185
      %540 = vst.msk [vmem:[#allocation2 + $0x24] sm:$0xf] %vm530, %v186
      %541 = vst.msk [vmem:[#allocation2 + $0x28] sm:$0xf] %vm530, %v187
      %542 = vst.msk [vmem:[#allocation2 + $0x2c] sm:$0xf] %vm530, %v188
      %543 = vst.msk [vmem:[#allocation2 + $0x30] sm:$0xf] %vm530, %v189
      %544 = vst.msk [vmem:[#allocation2 + $0x34] sm:$0xf] %vm530, %v190
      %545 = vst.msk [vmem:[#allocation2 + $0x38] sm:$0xf] %vm530, %v191
      %546 = vst.msk [vmem:[#allocation2 + $0x3c] sm:$0xf] %vm530, %v192
      %547 = vst.msk [vmem:[#allocation2 + $0x40] sm:$0xf] %vm530, %v193
      %548 = vst.msk [vmem:[#allocation2 + $0x44] sm:$0xf] %vm530, %v194
      %549 = vst.msk [vmem:[#allocation2 + $0x48] sm:$0xf] %vm530, %v195
      %550 = vst.msk [vmem:[#allocation2 + $0x4c] sm:$0xf] %vm530, %v196
      %551 = vst.msk [vmem:[#allocation2 + $0x50] sm:$0xf] %vm530, %v197
      %552 = vst.msk [vmem:[#allocation2 + $0x54] sm:$0xf] %vm530, %v198
      %553 = vst.msk [vmem:[#allocation2 + $0x58] sm:$0xf] %vm530, %v199
      %554 = vst.msk [vmem:[#allocation2 + $0x5c] sm:$0xf] %vm530, %v200
      %555 = vst.msk [vmem:[#allocation2 + $0x60] sm:$0xf] %vm530, %v201
      %556 = vst.msk [vmem:[#allocation2 + $0x64] sm:$0xf] %vm530, %v202
      %557 = vst.msk [vmem:[#allocation2 + $0x68] sm:$0xf] %vm530, %v203
      %558 = vst.msk [vmem:[#allocation2 + $0x6c] sm:$0xf] %vm530, %v204
      %559 = vst.msk [vmem:[#allocation2 + $0x70] sm:$0xf] %vm530, %v205
      %560 = vst.msk [vmem:[#allocation2 + $0x74] sm:$0xf] %vm530, %v206
      %561 = vst.msk [vmem:[#allocation2 + $0x78] sm:$0xf] %vm530, %v207
      %562 = vst.msk [vmem:[#allocation2 + $0x7c] sm:$0xf] %vm530, %v208
      %595 = vrot.lane.b32.xlu0 %v241, 4
      %v596 = vpop.permute.xlu0 %595
      %597 = vrot.lane.b32.xlu0 %v242, 4
      %v598 = vpop.permute.xlu0 %597
      %599 = vrot.lane.b32.xlu0 %v243, 4
      %v600 = vpop.permute.xlu0 %599
      %601 = vrot.lane.b32.xlu0 %v244, 4
      %v602 = vpop.permute.xlu0 %601
      %603 = vrot.lane.b32.xlu0 %v245, 4
      %v604 = vpop.permute.xlu0 %603
      %605 = vrot.lane.b32.xlu0 %v246, 4
      %v606 = vpop.permute.xlu0 %605
      %607 = vrot.lane.b32.xlu0 %v247, 4
      %v608 = vpop.permute.xlu0 %607
      %609 = vrot.lane.b32.xlu0 %v248, 4
      %v610 = vpop.permute.xlu0 %609
      %611 = vrot.lane.b32.xlu0 %v249, 4
      %v612 = vpop.permute.xlu0 %611
      %613 = vrot.lane.b32.xlu0 %v250, 4
      %v614 = vpop.permute.xlu0 %613
      %615 = vrot.lane.b32.xlu0 %v251, 4
      %v616 = vpop.permute.xlu0 %615
      %617 = vrot.lane.b32.xlu0 %v252, 4
      %v618 = vpop.permute.xlu0 %617
      %619 = vrot.lane.b32.xlu0 %v253, 4
      %v620 = vpop.permute.xlu0 %619
      %621 = vrot.lane.b32.xlu0 %v254, 4
      %v622 = vpop.permute.xlu0 %621
      %623 = vrot.lane.b32.xlu0 %v255, 4
      %v624 = vpop.permute.xlu0 %623
      %625 = vrot.lane.b32.xlu0 %v256, 4
      %v626 = vpop.permute.xlu0 %625
      %627 = vrot.lane.b32.xlu0 %v257, 4
      %v628 = vpop.permute.xlu0 %627
      %629 = vrot.lane.b32.xlu0 %v258, 4
      %v630 = vpop.permute.xlu0 %629
      %631 = vrot.lane.b32.xlu0 %v259, 4
      %v632 = vpop.permute.xlu0 %631
      %633 = vrot.lane.b32.xlu0 %v260, 4
      %v634 = vpop.permute.xlu0 %633
      %635 = vrot.lane.b32.xlu0 %v261, 4
      %v636 = vpop.permute.xlu0 %635
      %637 = vrot.lane.b32.xlu0 %v262, 4
      %v638 = vpop.permute.xlu0 %637
      %639 = vrot.lane.b32.xlu0 %v263, 4
      %v640 = vpop.permute.xlu0 %639
      %641 = vrot.lane.b32.xlu0 %v264, 4
      %v642 = vpop.permute.xlu0 %641
      %643 = vrot.lane.b32.xlu0 %v265, 4
      %v644 = vpop.permute.xlu0 %643
      %645 = vrot.lane.b32.xlu0 %v266, 4
      %v646 = vpop.permute.xlu0 %645
      %647 = vrot.lane.b32.xlu0 %v267, 4
      %v648 = vpop.permute.xlu0 %647
      %649 = vrot.lane.b32.xlu0 %v268, 4
      %v650 = vpop.permute.xlu0 %649
      %651 = vrot.lane.b32.xlu0 %v269, 4
      %v652 = vpop.permute.xlu0 %651
      %653 = vrot.lane.b32.xlu0 %v270, 4
      %v654 = vpop.permute.xlu0 %653
      %655 = vrot.lane.b32.xlu0 %v271, 4
      %v656 = vpop.permute.xlu0 %655
      %657 = vrot.lane.b32.xlu0 %v272, 4
      %v658 = vpop.permute.xlu0 %657
      %vm691 = vcmask 60448
      %692 = vst.msk [vmem:[#allocation2] sm:$0xf] %vm691, %v596
      %693 = vst.msk [vmem:[#allocation2 + $0x4] sm:$0xf] %vm691, %v598
      %694 = vst.msk [vmem:[#allocation2 + $0x8] sm:$0xf] %vm691, %v600
      %695 = vst.msk [vmem:[#allocation2 + $0xc] sm:$0xf] %vm691, %v602
      %696 = vst.msk [vmem:[#allocation2 + $0x10] sm:$0xf] %vm691, %v604
      %697 = vst.msk [vmem:[#allocation2 + $0x14] sm:$0xf] %vm691, %v606
      %698 = vst.msk [vmem:[#allocation2 + $0x18] sm:$0xf] %vm691, %v608
      %699 = vst.msk [vmem:[#allocation2 + $0x1c] sm:$0xf] %vm691, %v610
      %700 = vst.msk [vmem:[#allocation2 + $0x20] sm:$0xf] %vm691, %v612
      %701 = vst.msk [vmem:[#allocation2 + $0x24] sm:$0xf] %vm691, %v614
      %702 = vst.msk [vmem:[#allocation2 + $0x28] sm:$0xf] %vm691, %v616
      %703 = vst.msk [vmem:[#allocation2 + $0x2c] sm:$0xf] %vm691, %v618
      %704 = vst.msk [vmem:[#allocation2 + $0x30] sm:$0xf] %vm691, %v620
      %705 = vst.msk [vmem:[#allocation2 + $0x34] sm:$0xf] %vm691, %v622
      %706 = vst.msk [vmem:[#allocation2 + $0x38] sm:$0xf] %vm691, %v624
      %707 = vst.msk [vmem:[#allocation2 + $0x3c] sm:$0xf] %vm691, %v626
      %708 = vst.msk [vmem:[#allocation2 + $0x40] sm:$0xf] %vm691, %v628
      %709 = vst.msk [vmem:[#allocation2 + $0x44] sm:$0xf] %vm691, %v630
      %710 = vst.msk [vmem:[#allocation2 + $0x48] sm:$0xf] %vm691, %v632
      %711 = vst.msk [vmem:[#allocation2 + $0x4c] sm:$0xf] %vm691, %v634
      %712 = vst.msk [vmem:[#allocation2 + $0x50] sm:$0xf] %vm691, %v636
      %713 = vst.msk [vmem:[#allocation2 + $0x54] sm:$0xf] %vm691, %v638
      %714 = vst.msk [vmem:[#allocation2 + $0x58] sm:$0xf] %vm691, %v640
      %715 = vst.msk [vmem:[#allocation2 + $0x5c] sm:$0xf] %vm691, %v642
      %716 = vst.msk [vmem:[#allocation2 + $0x60] sm:$0xf] %vm691, %v644
      %717 = vst.msk [vmem:[#allocation2 + $0x64] sm:$0xf] %vm691, %v646
      %718 = vst.msk [vmem:[#allocation2 + $0x68] sm:$0xf] %vm691, %v648
      %719 = vst.msk [vmem:[#allocation2 + $0x6c] sm:$0xf] %vm691, %v650
      %720 = vst.msk [vmem:[#allocation2 + $0x70] sm:$0xf] %vm691, %v652
      %721 = vst.msk [vmem:[#allocation2 + $0x74] sm:$0xf] %vm691, %v654
      %722 = vst.msk [vmem:[#allocation2 + $0x78] sm:$0xf] %vm691, %v656
      %723 = vst.msk [vmem:[#allocation2 + $0x7c] sm:$0xf] %vm691, %v658
      %756 = vrot.lane.b32.xlu0 %v370, 8
      %v757 = vpop.permute.xlu0 %756
      %758 = vrot.lane.b32.xlu0 %v371, 8
      %v759 = vpop.permute.xlu0 %758
      %760 = vrot.lane.b32.xlu0 %v372, 8
      %v761 = vpop.permute.xlu0 %760
      %762 = vrot.lane.b32.xlu0 %v373, 8
      %v763 = vpop.permute.xlu0 %762
      %764 = vrot.lane.b32.xlu0 %v374, 8
      %v765 = vpop.permute.xlu0 %764
      %766 = vrot.lane.b32.xlu0 %v375, 8
      %v767 = vpop.permute.xlu0 %766
      %768 = vrot.lane.b32.xlu0 %v376, 8
      %v769 = vpop.permute.xlu0 %768
      %770 = vrot.lane.b32.xlu0 %v377, 8
      %v771 = vpop.permute.xlu0 %770
      %772 = vrot.lane.b32.xlu0 %v378, 8
      %v773 = vpop.permute.xlu0 %772
      %774 = vrot.lane.b32.xlu0 %v379, 8
      %v775 = vpop.permute.xlu0 %774
      %776 = vrot.lane.b32.xlu0 %v380, 8
      %v777 = vpop.permute.xlu0 %776
      %778 = vrot.lane.b32.xlu0 %v381, 8
      %v779 = vpop.permute.xlu0 %778
      %780 = vrot.lane.b32.xlu0 %v382, 8
      %v781 = vpop.permute.xlu0 %780
      %782 = vrot.lane.b32.xlu0 %v383, 8
      %v783 = vpop.permute.xlu0 %782
      %784 = vrot.lane.b32.xlu0 %v384, 8
      %v785 = vpop.permute.xlu0 %784
      %786 = vrot.lane.b32.xlu0 %v385, 8
      %v787 = vpop.permute.xlu0 %786
      %788 = vrot.lane.b32.xlu0 %v386, 8
      %v789 = vpop.permute.xlu0 %788
      %790 = vrot.lane.b32.xlu0 %v387, 8
      %v791 = vpop.permute.xlu0 %790
      %792 = vrot.lane.b32.xlu0 %v388, 8
      %v793 = vpop.permute.xlu0 %792
      %794 = vrot.lane.b32.xlu0 %v389, 8
      %v795 = vpop.permute.xlu0 %794
      %796 = vrot.lane.b32.xlu0 %v390, 8
      %v797 = vpop.permute.xlu0 %796
      %798 = vrot.lane.b32.xlu0 %v391, 8
      %v799 = vpop.permute.xlu0 %798
      %800 = vrot.lane.b32.xlu0 %v392, 8
      %v801 = vpop.permute.xlu0 %800
      %802 = vrot.lane.b32.xlu0 %v393, 8
      %v803 = vpop.permute.xlu0 %802
      %804 = vrot.lane.b32.xlu0 %v394, 8
      %v805 = vpop.permute.xlu0 %804
      %806 = vrot.lane.b32.xlu0 %v395, 8
      %v807 = vpop.permute.xlu0 %806
      %808 = vrot.lane.b32.xlu0 %v396, 8
      %v809 = vpop.permute.xlu0 %808
      %810 = vrot.lane.b32.xlu0 %v397, 8
      %v811 = vpop.permute.xlu0 %810
      %812 = vrot.lane.b32.xlu0 %v398, 8
      %v813 = vpop.permute.xlu0 %812
      %814 = vrot.lane.b32.xlu0 %v399, 8
      %v815 = vpop.permute.xlu0 %814
      %816 = vrot.lane.b32.xlu0 %v400, 8
      %v817 = vpop.permute.xlu0 %816
      %818 = vrot.lane.b32.xlu0 %v401, 8
      %v819 = vpop.permute.xlu0 %818
      %vm852 = vcmask 93248
      %853 = vst.msk [vmem:[#allocation2] sm:$0xf] %vm852, %v757
      %854 = vst.msk [vmem:[#allocation2 + $0x4] sm:$0xf] %vm852, %v759
      %855 = vst.msk [vmem:[#allocation2 + $0x8] sm:$0xf] %vm852, %v761
      %856 = vst.msk [vmem:[#allocation2 + $0xc] sm:$0xf] %vm852, %v763
      %857 = vst.msk [vmem:[#allocation2 + $0x10] sm:$0xf] %vm852, %v765
      %858 = vst.msk [vmem:[#allocation2 + $0x14] sm:$0xf] %vm852, %v767
      %859 = vst.msk [vmem:[#allocation2 + $0x18] sm:$0xf] %vm852, %v769
      %860 = vst.msk [vmem:[#allocation2 + $0x1c] sm:$0xf] %vm852, %v771
      %861 = vst.msk [vmem:[#allocation2 + $0x20] sm:$0xf] %vm852, %v773
      %862 = vst.msk [vmem:[#allocation2 + $0x24] sm:$0xf] %vm852, %v775
      %863 = vst.msk [vmem:[#allocation2 + $0x28] sm:$0xf] %vm852, %v777
      %864 = vst.msk [vmem:[#allocation2 + $0x2c] sm:$0xf] %vm852, %v779
      %865 = vst.msk [vmem:[#allocation2 + $0x30] sm:$0xf] %vm852, %v781
      %866 = vst.msk [vmem:[#allocation2 + $0x34] sm:$0xf] %vm852, %v783
      %867 = vst.msk [vmem:[#allocation2 + $0x38] sm:$0xf] %vm852, %v785
      %868 = vst.msk [vmem:[#allocation2 + $0x3c] sm:$0xf] %vm852, %v787
      %869 = vst.msk [vmem:[#allocation2 + $0x40] sm:$0xf] %vm852, %v789
      %870 = vst.msk [vmem:[#allocation2 + $0x44] sm:$0xf] %vm852, %v791
      %871 = vst.msk [vmem:[#allocation2 + $0x48] sm:$0xf] %vm852, %v793
      %872 = vst.msk [vmem:[#allocation2 + $0x4c] sm:$0xf] %vm852, %v795
      %873 = vst.msk [vmem:[#allocation2 + $0x50] sm:$0xf] %vm852, %v797
      %874 = vst.msk [vmem:[#allocation2 + $0x54] sm:$0xf] %vm852, %v799
      %875 = vst.msk [vmem:[#allocation2 + $0x58] sm:$0xf] %vm852, %v801
      %876 = vst.msk [vmem:[#allocation2 + $0x5c] sm:$0xf] %vm852, %v803
      %877 = vst.msk [vmem:[#allocation2 + $0x60] sm:$0xf] %vm852, %v805
      %878 = vst.msk [vmem:[#allocation2 + $0x64] sm:$0xf] %vm852, %v807
      %879 = vst.msk [vmem:[#allocation2 + $0x68] sm:$0xf] %vm852, %v809
      %880 = vst.msk [vmem:[#allocation2 + $0x6c] sm:$0xf] %vm852, %v811
      %881 = vst.msk [vmem:[#allocation2 + $0x70] sm:$0xf] %vm852, %v813
      %882 = vst.msk [vmem:[#allocation2 + $0x74] sm:$0xf] %vm852, %v815
      %883 = vst.msk [vmem:[#allocation2 + $0x78] sm:$0xf] %vm852, %v817
      %884 = vst.msk [vmem:[#allocation2 + $0x7c] sm:$0xf] %vm852, %v819
      %917 = vrot.lane.b32.xlu0 %v434, 12
      %v918 = vpop.permute.xlu0 %917
      %919 = vrot.lane.b32.xlu0 %v435, 12
      %v920 = vpop.permute.xlu0 %919
      %921 = vrot.lane.b32.xlu0 %v436, 12
      %v922 = vpop.permute.xlu0 %921
      %923 = vrot.lane.b32.xlu0 %v437, 12
      %v924 = vpop.permute.xlu0 %923
      %925 = vrot.lane.b32.xlu0 %v438, 12
      %v926 = vpop.permute.xlu0 %925
      %927 = vrot.lane.b32.xlu0 %v439, 12
      %v928 = vpop.permute.xlu0 %927
      %929 = vrot.lane.b32.xlu0 %v440, 12
      %v930 = vpop.permute.xlu0 %929
      %931 = vrot.lane.b32.xlu0 %v441, 12
      %v932 = vpop.permute.xlu0 %931
      %933 = vrot.lane.b32.xlu0 %v442, 12
      %v934 = vpop.permute.xlu0 %933
      %935 = vrot.lane.b32.xlu0 %v443, 12
      %v936 = vpop.permute.xlu0 %935
      %937 = vrot.lane.b32.xlu0 %v444, 12
      %v938 = vpop.permute.xlu0 %937
      %939 = vrot.lane.b32.xlu0 %v445, 12
      %v940 = vpop.permute.xlu0 %939
      %941 = vrot.lane.b32.xlu0 %v446, 12
      %v942 = vpop.permute.xlu0 %941
      %943 = vrot.lane.b32.xlu0 %v447, 12
      %v944 = vpop.permute.xlu0 %943
      %945 = vrot.lane.b32.xlu0 %v448, 12
      %v946 = vpop.permute.xlu0 %945
      %947 = vrot.lane.b32.xlu0 %v449, 12
      %v948 = vpop.permute.xlu0 %947
      %949 = vrot.lane.b32.xlu0 %v450, 12
      %v950 = vpop.permute.xlu0 %949
      %951 = vrot.lane.b32.xlu0 %v451, 12
      %v952 = vpop.permute.xlu0 %951
      %953 = vrot.lane.b32.xlu0 %v452, 12
      %v954 = vpop.permute.xlu0 %953
      %955 = vrot.lane.b32.xlu0 %v453, 12
      %v956 = vpop.permute.xlu0 %955
      %957 = vrot.lane.b32.xlu0 %v454, 12
      %v958 = vpop.permute.xlu0 %957
      %959 = vrot.lane.b32.xlu0 %v455, 12
      %v960 = vpop.permute.xlu0 %959
      %961 = vrot.lane.b32.xlu0 %v456, 12
      %v962 = vpop.permute.xlu0 %961
      %963 = vrot.lane.b32.xlu0 %v457, 12
      %v964 = vpop.permute.xlu0 %963
      %965 = vrot.lane.b32.xlu0 %v458, 12
      %v966 = vpop.permute.xlu0 %965
      %967 = vrot.lane.b32.xlu0 %v459, 12
      %v968 = vpop.permute.xlu0 %967
      %969 = vrot.lane.b32.xlu0 %v460, 12
      %v970 = vpop.permute.xlu0 %969
      %971 = vrot.lane.b32.xlu0 %v461, 12
      %v972 = vpop.permute.xlu0 %971
      %973 = vrot.lane.b32.xlu0 %v462, 12
      %v974 = vpop.permute.xlu0 %973
      %975 = vrot.lane.b32.xlu0 %v463, 12
      %v976 = vpop.permute.xlu0 %975
      %977 = vrot.lane.b32.xlu0 %v464, 12
      %v978 = vpop.permute.xlu0 %977
      %979 = vrot.lane.b32.xlu0 %v465, 12
      %v980 = vpop.permute.xlu0 %979
      %vm1013 = vcmask 126048
      %1014 = vst.msk [vmem:[#allocation2] sm:$0xf] %vm1013, %v918
      %1015 = vst.msk [vmem:[#allocation2 + $0x4] sm:$0xf] %vm1013, %v920
      %1016 = vst.msk [vmem:[#allocation2 + $0x8] sm:$0xf] %vm1013, %v922
      %1017 = vst.msk [vmem:[#allocation2 + $0xc] sm:$0xf] %vm1013, %v924
      %1018 = vst.msk [vmem:[#allocation2 + $0x10] sm:$0xf] %vm1013, %v926
      %1019 = vst.msk [vmem:[#allocation2 + $0x14] sm:$0xf] %vm1013, %v928
      %1020 = vst.msk [vmem:[#allocation2 + $0x18] sm:$0xf] %vm1013, %v930
      %1021 = vst.msk [vmem:[#allocation2 + $0x1c] sm:$0xf] %vm1013, %v932
      %1022 = vst.msk [vmem:[#allocation2 + $0x20] sm:$0xf] %vm1013, %v934
      %1023 = vst.msk [vmem:[#allocation2 + $0x24] sm:$0xf] %vm1013, %v936
      %1024 = vst.msk [vmem:[#allocation2 + $0x28] sm:$0xf] %vm1013, %v938
      %1025 = vst.msk [vmem:[#allocation2 + $0x2c] sm:$0xf] %vm1013, %v940
      %1026 = vst.msk [vmem:[#allocation2 + $0x30] sm:$0xf] %vm1013, %v942
      %1027 = vst.msk [vmem:[#allocation2 + $0x34] sm:$0xf] %vm1013, %v944
      %1028 = vst.msk [vmem:[#allocation2 + $0x38] sm:$0xf] %vm1013, %v946
      %1029 = vst.msk [vmem:[#allocation2 + $0x3c] sm:$0xf] %vm1013, %v948
      %1030 = vst.msk [vmem:[#allocation2 + $0x40] sm:$0xf] %vm1013, %v950
      %1031 = vst.msk [vmem:[#allocation2 + $0x44] sm:$0xf] %vm1013, %v952
      %1032 = vst.msk [vmem:[#allocation2 + $0x48] sm:$0xf] %vm1013, %v954
      %1033 = vst.msk [vmem:[#allocation2 + $0x4c] sm:$0xf] %vm1013, %v956
      %1034 = vst.msk [vmem:[#allocation2 + $0x50] sm:$0xf] %vm1013, %v958
      %1035 = vst.msk [vmem:[#allocation2 + $0x54] sm:$0xf] %vm1013, %v960
      %1036 = vst.msk [vmem:[#allocation2 + $0x58] sm:$0xf] %vm1013, %v962
      %1037 = vst.msk [vmem:[#allocation2 + $0x5c] sm:$0xf] %vm1013, %v964
      %1038 = vst.msk [vmem:[#allocation2 + $0x60] sm:$0xf] %vm1013, %v966
      %1039 = vst.msk [vmem:[#allocation2 + $0x64] sm:$0xf] %vm1013, %v968
      %1040 = vst.msk [vmem:[#allocation2 + $0x68] sm:$0xf] %vm1013, %v970
      %1041 = vst.msk [vmem:[#allocation2 + $0x6c] sm:$0xf] %vm1013, %v972
      %1042 = vst.msk [vmem:[#allocation2 + $0x70] sm:$0xf] %vm1013, %v974
      %1043 = vst.msk [vmem:[#allocation2 + $0x74] sm:$0xf] %vm1013, %v976
      %1044 = vst.msk [vmem:[#allocation2 + $0x78] sm:$0xf] %vm1013, %v978
      %1045 = vst.msk [vmem:[#allocation2 + $0x7c] sm:$0xf] %vm1013, %v980
      %v1046 = vld [vmem:[#allocation2] sm:$0xf]
      %v1047 = vld [vmem:[#allocation2 + $0x4] sm:$0xf]
      %v1048 = vld [vmem:[#allocation2 + $0x8] sm:$0xf]
      %v1049 = vld [vmem:[#allocation2 + $0xc] sm:$0xf]
      %v1050 = vld [vmem:[#allocation2 + $0x10] sm:$0xf]
      %v1051 = vld [vmem:[#allocation2 + $0x14] sm:$0xf]
      %v1052 = vld [vmem:[#allocation2 + $0x18] sm:$0xf]
      %v1053 = vld [vmem:[#allocation2 + $0x1c] sm:$0xf]
      %v1054 = vld [vmem:[#allocation2 + $0x20] sm:$0xf]
      %v1055 = vld [vmem:[#allocation2 + $0x24] sm:$0xf]
      %v1056 = vld [vmem:[#allocation2 + $0x28] sm:$0xf]
      %v1057 = vld [vmem:[#allocation2 + $0x2c] sm:$0xf]
      %v1058 = vld [vmem:[#allocation2 + $0x30] sm:$0xf]
      %v1059 = vld [vmem:[#allocation2 + $0x34] sm:$0xf]
      %v1060 = vld [vmem:[#allocation2 + $0x38] sm:$0xf]
      %v1061 = vld [vmem:[#allocation2 + $0x3c] sm:$0xf]
      %v1062 = vld [vmem:[#allocation2 + $0x40] sm:$0xf]
      %v1063 = vld [vmem:[#allocation2 + $0x44] sm:$0xf]
      %v1064 = vld [vmem:[#allocation2 + $0x48] sm:$0xf]
      %v1065 = vld [vmem:[#allocation2 + $0x4c] sm:$0xf]
      %v1066 = vld [vmem:[#allocation2 + $0x50] sm:$0xf]
      %v1067 = vld [vmem:[#allocation2 + $0x54] sm:$0xf]
      %v1068 = vld [vmem:[#allocation2 + $0x58] sm:$0xf]
      %v1069 = vld [vmem:[#allocation2 + $0x5c] sm:$0xf]
      %v1070 = vld [vmem:[#allocation2 + $0x60] sm:$0xf]
      %v1071 = vld [vmem:[#allocation2 + $0x64] sm:$0xf]
      %v1072 = vld [vmem:[#allocation2 + $0x68] sm:$0xf]
      %v1073 = vld [vmem:[#allocation2 + $0x6c] sm:$0xf]
      %v1074 = vld [vmem:[#allocation2 + $0x70] sm:$0xf]
      %v1075 = vld [vmem:[#allocation2 + $0x74] sm:$0xf]
      %v1076 = vld [vmem:[#allocation2 + $0x78] sm:$0xf]
      %v1077 = vld [vmem:[#allocation2 + $0x7c] sm:$0xf]
      %v1078 = vld [vmem:[%s1] sm:$0xf]
      %v1079 = vld [vmem:[%s1 + $0x4] sm:$0xf]
      %v1112 = vunpack.c.l.b16 %v1046
      %v1113 = vunpack.c.l.b16 %v1047
      %v1114 = vunpack.c.l.b16 %v1048
      %v1115 = vunpack.c.l.b16 %v1049
      %v1116 = vunpack.c.l.b16 %v1050
      %v1117 = vunpack.c.l.b16 %v1051
      %v1118 = vunpack.c.l.b16 %v1052
      %v1119 = vunpack.c.l.b16 %v1053
      %v1120 = vunpack.c.l.b16 %v1054
      %v1121 = vunpack.c.l.b16 %v1055
      %v1122 = vunpack.c.l.b16 %v1056
      %v1123 = vunpack.c.l.b16 %v1057
      %v1124 = vunpack.c.l.b16 %v1058
      %v1125 = vunpack.c.l.b16 %v1059
      %v1126 = vunpack.c.l.b16 %v1060
      %v1127 = vunpack.c.l.b16 %v1061
      %v1128 = vunpack.c.l.b16 %v1062
      %v1129 = vunpack.c.l.b16 %v1063
      %v1130 = vunpack.c.l.b16 %v1064
      %v1131 = vunpack.c.l.b16 %v1065
      %v1132 = vunpack.c.l.b16 %v1066
      %v1133 = vunpack.c.l.b16 %v1067
      %v1134 = vunpack.c.l.b16 %v1068
      %v1135 = vunpack.c.l.b16 %v1069
      %v1136 = vunpack.c.l.b16 %v1070
      %v1137 = vunpack.c.l.b16 %v1071
      %v1138 = vunpack.c.l.b16 %v1072
      %v1139 = vunpack.c.l.b16 %v1073
      %v1140 = vunpack.c.l.b16 %v1074
      %v1141 = vunpack.c.l.b16 %v1075
      %v1142 = vunpack.c.l.b16 %v1076
      %v1143 = vunpack.c.l.b16 %v1077
      %v1144 = vpack.c.b16 %v1113, %v1112
      %v1145 = vpack.c.b16 %v1115, %v1114
      %v1146 = vpack.c.b16 %v1117, %v1116
      %v1147 = vpack.c.b16 %v1119, %v1118
      %v1148 = vpack.c.b16 %v1121, %v1120
      %v1149 = vpack.c.b16 %v1123, %v1122
      %v1150 = vpack.c.b16 %v1125, %v1124
      %v1151 = vpack.c.b16 %v1127, %v1126
      %v1152 = vpack.c.b16 %v1129, %v1128
      %v1153 = vpack.c.b16 %v1131, %v1130
      %v1154 = vpack.c.b16 %v1133, %v1132
      %v1155 = vpack.c.b16 %v1135, %v1134
      %v1156 = vpack.c.b16 %v1137, %v1136
      %v1157 = vpack.c.b16 %v1139, %v1138
      %v1158 = vpack.c.b16 %v1141, %v1140
      %v1159 = vpack.c.b16 %v1143, %v1142
      %v1162 = vunpack.c.l.b16 %v1078
      %v1163 = vunpack.c.l.b16 %v1079
      %v1164 = vpack.c.b16 %v1163, %v1162
      %vm1166 = vcmask 130048
      %v1168 = vsel %vm1166, %v1144, 0
      %v1171 = vsel %vm1166, %v1145, 0
      %v1174 = vsel %vm1166, %v1146, 0
      %v1177 = vsel %vm1166, %v1147, 0
      %v1180 = vsel %vm1166, %v1148, 0
      %v1183 = vsel %vm1166, %v1149, 0
      %v1186 = vsel %vm1166, %v1150, 0
      %v1189 = vsel %vm1166, %v1151, 0
      %v1192 = vsel %vm1166, %v1152, 0
      %v1195 = vsel %vm1166, %v1153, 0
      %v1198 = vsel %vm1166, %v1154, 0
      %v1201 = vsel %vm1166, %v1155, 0
      %v1204 = vsel %vm1166, %v1156, 0
      %v1207 = vsel %vm1166, %v1157, 0
      %v1210 = vsel %vm1166, %v1158, 0
      %v1213 = vsel %vm1166, %v1159, 0
      %1215 = vmatpush.bf16.msra.mxu0 0
      %1216 = vmatpush.bf16.msra.mxu0 0
      %1217 = vmatpush.bf16.msra.mxu0 0
      %1218 = vmatpush.bf16.msra.mxu0 0
      %1219 = vmatpush.bf16.msra.mxu0 0
      %1220 = vmatpush.bf16.msra.mxu0 0
      %1221 = vmatpush.bf16.msra.mxu0 0
      %1222 = vmatpush.bf16.msra.mxu0 %v1164
      %1223 = vmatmul.bf16.gmra.mxu0 %v1168
      %v1224 = vpop.f32.mrf.mxu0
      %v1225 = vadd.f32 0.0, %v1224
      %v1226 = vpop.f32.mrf.mxu0
      %v1227 = vadd.f32 0.0, %v1226
      %1228 = vmatmul.bf16.gmra.mxu0 %v1171
      %v1229 = vpop.f32.mrf.mxu0
      %v1230 = vadd.f32 0.0, %v1229
      %v1231 = vpop.f32.mrf.mxu0
      %v1232 = vadd.f32 0.0, %v1231
      %1233 = vmatmul.bf16.gmra.mxu0 %v1174
      %v1234 = vpop.f32.mrf.mxu0
      %v1235 = vadd.f32 0.0, %v1234
      %v1236 = vpop.f32.mrf.mxu0
      %v1237 = vadd.f32 0.0, %v1236
      %1238 = vmatmul.bf16.gmra.mxu0 %v1177
      %v1239 = vpop.f32.mrf.mxu0
      %v1240 = vadd.f32 0.0, %v1239
      %v1241 = vpop.f32.mrf.mxu0
      %v1242 = vadd.f32 0.0, %v1241
      %1243 = vmatmul.bf16.gmra.mxu0 %v1180
      %v1244 = vpop.f32.mrf.mxu0
      %v1245 = vadd.f32 0.0, %v1244
      %v1246 = vpop.f32.mrf.mxu0
      %v1247 = vadd.f32 0.0, %v1246
      %1248 = vmatmul.bf16.gmra.mxu0 %v1183
      %v1249 = vpop.f32.mrf.mxu0
      %v1250 = vadd.f32 0.0, %v1249
      %v1251 = vpop.f32.mrf.mxu0
      %v1252 = vadd.f32 0.0, %v1251
      %1253 = vmatmul.bf16.gmra.mxu0 %v1186
      %v1254 = vpop.f32.mrf.mxu0
      %v1255 = vadd.f32 0.0, %v1254
      %v1256 = vpop.f32.mrf.mxu0
      %v1257 = vadd.f32 0.0, %v1256
      %1258 = vmatmul.bf16.gmra.mxu0 %v1189
      %v1259 = vpop.f32.mrf.mxu0
      %v1260 = vadd.f32 0.0, %v1259
      %v1261 = vpop.f32.mrf.mxu0
      %v1262 = vadd.f32 0.0, %v1261
      %1263 = vmatmul.bf16.gmra.mxu0 %v1192
      %v1264 = vpop.f32.mrf.mxu0
      %v1265 = vadd.f32 0.0, %v1264
      %v1266 = vpop.f32.mrf.mxu0
      %v1267 = vadd.f32 0.0, %v1266
      %1268 = vmatmul.bf16.gmra.mxu0 %v1195
      %v1269 = vpop.f32.mrf.mxu0
      %v1270 = vadd.f32 0.0, %v1269
      %v1271 = vpop.f32.mrf.mxu0
      %v1272 = vadd.f32 0.0, %v1271
      %1273 = vmatmul.bf16.gmra.mxu0 %v1198
      %v1274 = vpop.f32.mrf.mxu0
      %v1275 = vadd.f32 0.0, %v1274
      %v1276 = vpop.f32.mrf.mxu0
      %v1277 = vadd.f32 0.0, %v1276
      %1278 = vmatmul.bf16.gmra.mxu0 %v1201
      %v1279 = vpop.f32.mrf.mxu0
      %v1280 = vadd.f32 0.0, %v1279
      %v1281 = vpop.f32.mrf.mxu0
      %v1282 = vadd.f32 0.0, %v1281
      %1283 = vmatmul.bf16.gmra.mxu0 %v1204
      %v1284 = vpop.f32.mrf.mxu0
      %v1285 = vadd.f32 0.0, %v1284
      %v1286 = vpop.f32.mrf.mxu0
      %v1287 = vadd.f32 0.0, %v1286
      %1288 = vmatmul.bf16.gmra.mxu0 %v1207
      %v1289 = vpop.f32.mrf.mxu0
      %v1290 = vadd.f32 0.0, %v1289
      %v1291 = vpop.f32.mrf.mxu0
      %v1292 = vadd.f32 0.0, %v1291
      %1293 = vmatmul.bf16.gmra.mxu0 %v1210
      %v1294 = vpop.f32.mrf.mxu0
      %v1295 = vadd.f32 0.0, %v1294
      %v1296 = vpop.f32.mrf.mxu0
      %v1297 = vadd.f32 0.0, %v1296
      %1298 = vmatmul.bf16.gmra.mxu0 %v1213
      %v1299 = vpop.f32.mrf.mxu0
      %v1300 = vadd.f32 0.0, %v1299
      %v1301 = vpop.f32.mrf.mxu0
      %v1302 = vadd.f32 0.0, %v1301
      %1303 = vdwg.mxu0
      %vm1304 = vcmask 31744
      %1305 = vst.msk [vmem:[%s143] sm:$0xff] %vm1304, %v1225
      %1306 = vst.msk [vmem:[%s143 + $0x8] sm:$0xff] %vm1304, %v1227
      %1307 = vst.msk [vmem:[%s143 + $0x10] sm:$0xff] %vm1304, %v1230
      %1308 = vst.msk [vmem:[%s143 + $0x18] sm:$0xff] %vm1304, %v1232
      %1309 = vst.msk [vmem:[%s143 + $0x20] sm:$0xff] %vm1304, %v1235
      %1310 = vst.msk [vmem:[%s143 + $0x28] sm:$0xff] %vm1304, %v1237
      %1311 = vst.msk [vmem:[%s143 + $0x30] sm:$0xff] %vm1304, %v1240
      %1312 = vst.msk [vmem:[%s143 + $0x38] sm:$0xff] %vm1304, %v1242
      %1313 = vst.msk [vmem:[%s143 + $0x40] sm:$0xff] %vm1304, %v1245
      %1314 = vst.msk [vmem:[%s143 + $0x48] sm:$0xff] %vm1304, %v1247
      %1315 = vst.msk [vmem:[%s143 + $0x50] sm:$0xff] %vm1304, %v1250
      %1316 = vst.msk [vmem:[%s143 + $0x58] sm:$0xff] %vm1304, %v1252
      %1317 = vst.msk [vmem:[%s143 + $0x60] sm:$0xff] %vm1304, %v1255
      %1318 = vst.msk [vmem:[%s143 + $0x68] sm:$0xff] %vm1304, %v1257
      %1319 = vst.msk [vmem:[%s143 + $0x70] sm:$0xff] %vm1304, %v1260
      %1320 = vst.msk [vmem:[%s143 + $0x78] sm:$0xff] %vm1304, %v1262
      %1321 = vst.msk [vmem:[%s143 + $0x80] sm:$0xff] %vm1304, %v1265
      %1322 = vst.msk [vmem:[%s143 + $0x88] sm:$0xff] %vm1304, %v1267
      %1323 = vst.msk [vmem:[%s143 + $0x90] sm:$0xff] %vm1304, %v1270
      %1324 = vst.msk [vmem:[%s143 + $0x98] sm:$0xff] %vm1304, %v1272
      %1325 = vst.msk [vmem:[%s143 + $0xa0] sm:$0xff] %vm1304, %v1275
      %1326 = vst.msk [vmem:[%s143 + $0xa8] sm:$0xff] %vm1304, %v1277
      %1327 = vst.msk [vmem:[%s143 + $0xb0] sm:$0xff] %vm1304, %v1280
      %1328 = vst.msk [vmem:[%s143 + $0xb8] sm:$0xff] %vm1304, %v1282
      %1329 = vst.msk [vmem:[%s143 + $0xc0] sm:$0xff] %vm1304, %v1285
      %1330 = vst.msk [vmem:[%s143 + $0xc8] sm:$0xff] %vm1304, %v1287
      %1331 = vst.msk [vmem:[%s143 + $0xd0] sm:$0xff] %vm1304, %v1290
      %1332 = vst.msk [vmem:[%s143 + $0xd8] sm:$0xff] %vm1304, %v1292
      %1333 = vst.msk [vmem:[%s143 + $0xe0] sm:$0xff] %vm1304, %v1295
      %1334 = vst.msk [vmem:[%s143 + $0xe8] sm:$0xff] %vm1304, %v1297
      %1335 = vst.msk [vmem:[%s143 + $0xf0] sm:$0xff] %vm1304, %v1300
      %1336 = vst.msk [vmem:[%s143 + $0xf8] sm:$0xff] %vm1304, %v1302
      %v1337 = vsel %vm1304, %v1225, 0.0
      %v1338 = vsel %vm1304, %v1227, 0.0
      %v1339 = vadd.f32 %v1337, %v1338
      %v1340 = vsel %vm1304, %v1230, 0.0
      %v1341 = vadd.f32 %v1339, %v1340
      %v1342 = vsel %vm1304, %v1232, 0.0
      %v1343 = vadd.f32 %v1341, %v1342
      %v1344 = vsel %vm1304, %v1235, 0.0
      %v1345 = vadd.f32 %v1343, %v1344
      %v1346 = vsel %vm1304, %v1237, 0.0
      %v1347 = vadd.f32 %v1345, %v1346
      %v1348 = vsel %vm1304, %v1240, 0.0
      %v1349 = vadd.f32 %v1347, %v1348
      %v1350 = vsel %vm1304, %v1242, 0.0
      %v1351 = vadd.f32 %v1349, %v1350
      %v1352 = vsel %vm1304, %v1245, 0.0
      %v1353 = vadd.f32 %v1351, %v1352
      %v1354 = vsel %vm1304, %v1247, 0.0
      %v1355 = vadd.f32 %v1353, %v1354
      %v1356 = vsel %vm1304, %v1250, 0.0
      %v1357 = vadd.f32 %v1355, %v1356
      %v1358 = vsel %vm1304, %v1252, 0.0
      %v1359 = vadd.f32 %v1357, %v1358
      %v1360 = vsel %vm1304, %v1255, 0.0
      %v1361 = vadd.f32 %v1359, %v1360
      %v1362 = vsel %vm1304, %v1257, 0.0
      %v1363 = vadd.f32 %v1361, %v1362
      %v1364 = vsel %vm1304, %v1260, 0.0
      %v1365 = vadd.f32 %v1363, %v1364
      %v1366 = vsel %vm1304, %v1262, 0.0
      %v1367 = vadd.f32 %v1365, %v1366
      %v1368 = vsel %vm1304, %v1265, 0.0
      %v1369 = vadd.f32 %v1367, %v1368
      %v1370 = vsel %vm1304, %v1267, 0.0
      %v1371 = vadd.f32 %v1369, %v1370
      %v1372 = vsel %vm1304, %v1270, 0.0
      %v1373 = vadd.f32 %v1371, %v1372
      %v1374 = vsel %vm1304, %v1272, 0.0
      %v1375 = vadd.f32 %v1373, %v1374
      %v1376 = vsel %vm1304, %v1275, 0.0
      %v1377 = vadd.f32 %v1375, %v1376
      %v1378 = vsel %vm1304, %v1277, 0.0
      %v1379 = vadd.f32 %v1377, %v1378
      %v1380 = vsel %vm1304, %v1280, 0.0
      %v1381 = vadd.f32 %v1379, %v1380
      %v1382 = vsel %vm1304, %v1282, 0.0
      %v1383 = vadd.f32 %v1381, %v1382
      %v1384 = vsel %vm1304, %v1285, 0.0
      %v1385 = vadd.f32 %v1383, %v1384
      %v1386 = vsel %vm1304, %v1287, 0.0
      %v1387 = vadd.f32 %v1385, %v1386
      %v1388 = vsel %vm1304, %v1290, 0.0
      %v1389 = vadd.f32 %v1387, %v1388
      %v1390 = vsel %vm1304, %v1292, 0.0
      %v1391 = vadd.f32 %v1389, %v1390
      %v1392 = vsel %vm1304, %v1295, 0.0
      %v1393 = vadd.f32 %v1391, %v1392
      %v1394 = vsel %vm1304, %v1297, 0.0
      %v1395 = vadd.f32 %v1393, %v1394
      %v1396 = vsel %vm1304, %v1300, 0.0
      %v1397 = vadd.f32 %v1395, %v1396
      %v1398 = vsel %vm1304, %v1302, 0.0
      %v1399 = vadd.f32 %v1397, %v1398
      %v1400 = vrot.slane %v1399, 4
      %v1401 = vadd.f32 %v1399, %v1400
      %v1402 = vrot.slane %v1401, 2
      %v1403 = vadd.f32 %v1401, %v1402
      %v1404 = vrot.slane %v1403, 1
      %v1405 = vadd.f32 %v1403, %v1404
      %v1406 = vadd.f32 %v1405, 0.0
      %1407 = vst.msk [vmem:[#allocation2] sm:$0xf] %vm530, %v241
      %1408 = vst.msk [vmem:[#allocation2 + $0x4] sm:$0xf] %vm530, %v242
      %1409 = vst.msk [vmem:[#allocation2 + $0x8] sm:$0xf] %vm530, %v243
      %1410 = vst.msk [vmem:[#allocation2 + $0xc] sm:$0xf] %vm530, %v244
      %1411 = vst.msk [vmem:[#allocation2 + $0x10] sm:$0xf] %vm530, %v245
      %1412 = vst.msk [vmem:[#allocation2 + $0x14] sm:$0xf] %vm530, %v246
      %1413 = vst.msk [vmem:[#allocation2 + $0x18] sm:$0xf] %vm530, %v247
      %1414 = vst.msk [vmem:[#allocation2 + $0x1c] sm:$0xf] %vm530, %v248
      %1415 = vst.msk [vmem:[#allocation2 + $0x20] sm:$0xf] %vm530, %v249
      %1416 = vst.msk [vmem:[#allocation2 + $0x24] sm:$0xf] %vm530, %v250
      %1417 = vst.msk [vmem:[#allocation2 + $0x28] sm:$0xf] %vm530, %v251
      %1418 = vst.msk [vmem:[#allocation2 + $0x2c] sm:$0xf] %vm530, %v252
      %1419 = vst.msk [vmem:[#allocation2 + $0x30] sm:$0xf] %vm530, %v253
      %1420 = vst.msk [vmem:[#allocation2 + $0x34] sm:$0xf] %vm530, %v254
      %1421 = vst.msk [vmem:[#allocation2 + $0x38] sm:$0xf] %vm530, %v255
      %1422 = vst.msk [vmem:[#allocation2 + $0x3c] sm:$0xf] %vm530, %v256
      %1423 = vst.msk [vmem:[#allocation2 + $0x40] sm:$0xf] %vm530, %v257
      %1424 = vst.msk [vmem:[#allocation2 + $0x44] sm:$0xf] %vm530, %v258
      %1425 = vst.msk [vmem:[#allocation2 + $0x48] sm:$0xf] %vm530, %v259
      %1426 = vst.msk [vmem:[#allocation2 + $0x4c] sm:$0xf] %vm530, %v260
      %1427 = vst.msk [vmem:[#allocation2 + $0x50] sm:$0xf] %vm530, %v261
      %1428 = vst.msk [vmem:[#allocation2 + $0x54] sm:$0xf] %vm530, %v262
      %1429 = vst.msk [vmem:[#allocation2 + $0x58] sm:$0xf] %vm530, %v263
      %1430 = vst.msk [vmem:[#allocation2 + $0x5c] sm:$0xf] %vm530, %v264
      %1431 = vst.msk [vmem:[#allocation2 + $0x60] sm:$0xf] %vm530, %v265
      %1432 = vst.msk [vmem:[#allocation2 + $0x64] sm:$0xf] %vm530, %v266
      %1433 = vst.msk [vmem:[#allocation2 + $0x68] sm:$0xf] %vm530, %v267
      %1434 = vst.msk [vmem:[#allocation2 + $0x6c] sm:$0xf] %vm530, %v268
      %1435 = vst.msk [vmem:[#allocation2 + $0x70] sm:$0xf] %vm530, %v269
      %1436 = vst.msk [vmem:[#allocation2 + $0x74] sm:$0xf] %vm530, %v270
      %1437 = vst.msk [vmem:[#allocation2 + $0x78] sm:$0xf] %vm530, %v271
      %1438 = vst.msk [vmem:[#allocation2 + $0x7c] sm:$0xf] %vm530, %v272
      %1471 = vrot.lane.b32.xlu0 %v305, 4
      %v1472 = vpop.permute.xlu0 %1471
      %1473 = vrot.lane.b32.xlu0 %v306, 4
      %v1474 = vpop.permute.xlu0 %1473
      %1475 = vrot.lane.b32.xlu0 %v307, 4
      %v1476 = vpop.permute.xlu0 %1475
      %1477 = vrot.lane.b32.xlu0 %v308, 4
      %v1478 = vpop.permute.xlu0 %1477
      %1479 = vrot.lane.b32.xlu0 %v309, 4
      %v1480 = vpop.permute.xlu0 %1479
      %1481 = vrot.lane.b32.xlu0 %v310, 4
      %v1482 = vpop.permute.xlu0 %1481
      %1483 = vrot.lane.b32.xlu0 %v311, 4
      %v1484 = vpop.permute.xlu0 %1483
      %1485 = vrot.lane.b32.xlu0 %v312, 4
      %v1486 = vpop.permute.xlu0 %1485
      %1487 = vrot.lane.b32.xlu0 %v313, 4
      %v1488 = vpop.permute.xlu0 %1487
      %1489 = vrot.lane.b32.xlu0 %v314, 4
      %v1490 = vpop.permute.xlu0 %1489
      %1491 = vrot.lane.b32.xlu0 %v315, 4
      %v1492 = vpop.permute.xlu0 %1491
      %1493 = vrot.lane.b32.xlu0 %v316, 4
      %v1494 = vpop.permute.xlu0 %1493
      %1495 = vrot.lane.b32.xlu0 %v317, 4
      %v1496 = vpop.permute.xlu0 %1495
      %1497 = vrot.lane.b32.xlu0 %v318, 4
      %v1498 = vpop.permute.xlu0 %1497
      %1499 = vrot.lane.b32.xlu0 %v319, 4
      %v1500 = vpop.permute.xlu0 %1499
      %1501 = vrot.lane.b32.xlu0 %v320, 4
      %v1502 = vpop.permute.xlu0 %1501
      %1503 = vrot.lane.b32.xlu0 %v321, 4
      %v1504 = vpop.permute.xlu0 %1503
      %1505 = vrot.lane.b32.xlu0 %v322, 4
      %v1506 = vpop.permute.xlu0 %1505
      %1507 = vrot.lane.b32.xlu0 %v323, 4
      %v1508 = vpop.permute.xlu0 %1507
      %1509 = vrot.lane.b32.xlu0 %v324, 4
      %v1510 = vpop.permute.xlu0 %1509
      %1511 = vrot.lane.b32.xlu0 %v325, 4
      %v1512 = vpop.permute.xlu0 %1511
      %1513 = vrot.lane.b32.xlu0 %v326, 4
      %v1514 = vpop.permute.xlu0 %1513
      %1515 = vrot.lane.b32.xlu0 %v327, 4
      %v1516 = vpop.permute.xlu0 %1515
      %1517 = vrot.lane.b32.xlu0 %v328, 4
      %v1518 = vpop.permute.xlu0 %1517
      %1519 = vrot.lane.b32.xlu0 %v329, 4
      %v1520 = vpop.permute.xlu0 %1519
      %1521 = vrot.lane.b32.xlu0 %v330, 4
      %v1522 = vpop.permute.xlu0 %1521
      %1523 = vrot.lane.b32.xlu0 %v331, 4
      %v1524 = vpop.permute.xlu0 %1523
      %1525 = vrot.lane.b32.xlu0 %v332, 4
      %v1526 = vpop.permute.xlu0 %1525
      %1527 = vrot.lane.b32.xlu0 %v333, 4
      %v1528 = vpop.permute.xlu0 %1527
      %1529 = vrot.lane.b32.xlu0 %v334, 4
      %v1530 = vpop.permute.xlu0 %1529
      %1531 = vrot.lane.b32.xlu0 %v335, 4
      %v1532 = vpop.permute.xlu0 %1531
      %1533 = vrot.lane.b32.xlu0 %v336, 4
      %v1534 = vpop.permute.xlu0 %1533
      %1567 = vst.msk [vmem:[#allocation2] sm:$0xf] %vm691, %v1472
      %1568 = vst.msk [vmem:[#allocation2 + $0x4] sm:$0xf] %vm691, %v1474
      %1569 = vst.msk [vmem:[#allocation2 + $0x8] sm:$0xf] %vm691, %v1476
      %1570 = vst.msk [vmem:[#allocation2 + $0xc] sm:$0xf] %vm691, %v1478
      %1571 = vst.msk [vmem:[#allocation2 + $0x10] sm:$0xf] %vm691, %v1480
      %1572 = vst.msk [vmem:[#allocation2 + $0x14] sm:$0xf] %vm691, %v1482
      %1573 = vst.msk [vmem:[#allocation2 + $0x18] sm:$0xf] %vm691, %v1484
      %1574 = vst.msk [vmem:[#allocation2 + $0x1c] sm:$0xf] %vm691, %v1486
      %1575 = vst.msk [vmem:[#allocation2 + $0x20] sm:$0xf] %vm691, %v1488
      %1576 = vst.msk [vmem:[#allocation2 + $0x24] sm:$0xf] %vm691, %v1490
      %1577 = vst.msk [vmem:[#allocation2 + $0x28] sm:$0xf] %vm691, %v1492
      %1578 = vst.msk [vmem:[#allocation2 + $0x2c] sm:$0xf] %vm691, %v1494
      %1579 = vst.msk [vmem:[#allocation2 + $0x30] sm:$0xf] %vm691, %v1496
      %1580 = vst.msk [vmem:[#allocation2 + $0x34] sm:$0xf] %vm691, %v1498
      %1581 = vst.msk [vmem:[#allocation2 + $0x38] sm:$0xf] %vm691, %v1500
      %1582 = vst.msk [vmem:[#allocation2 + $0x3c] sm:$0xf] %vm691, %v1502
      %1583 = vst.msk [vmem:[#allocation2 + $0x40] sm:$0xf] %vm691, %v1504
      %1584 = vst.msk [vmem:[#allocation2 + $0x44] sm:$0xf] %vm691, %v1506
      %1585 = vst.msk [vmem:[#allocation2 + $0x48] sm:$0xf] %vm691, %v1508
      %1586 = vst.msk [vmem:[#allocation2 + $0x4c] sm:$0xf] %vm691, %v1510
      %1587 = vst.msk [vmem:[#allocation2 + $0x50] sm:$0xf] %vm691, %v1512
      %1588 = vst.msk [vmem:[#allocation2 + $0x54] sm:$0xf] %vm691, %v1514
      %1589 = vst.msk [vmem:[#allocation2 + $0x58] sm:$0xf] %vm691, %v1516
      %1590 = vst.msk [vmem:[#allocation2 + $0x5c] sm:$0xf] %vm691, %v1518
      %1591 = vst.msk [vmem:[#allocation2 + $0x60] sm:$0xf] %vm691, %v1520
      %1592 = vst.msk [vmem:[#allocation2 + $0x64] sm:$0xf] %vm691, %v1522
      %1593 = vst.msk [vmem:[#allocation2 + $0x68] sm:$0xf] %vm691, %v1524
      %1594 = vst.msk [vmem:[#allocation2 + $0x6c] sm:$0xf] %vm691, %v1526
      %1595 = vst.msk [vmem:[#allocation2 + $0x70] sm:$0xf] %vm691, %v1528
      %1596 = vst.msk [vmem:[#allocation2 + $0x74] sm:$0xf] %vm691, %v1530
      %1597 = vst.msk [vmem:[#allocation2 + $0x78] sm:$0xf] %vm691, %v1532
      %1598 = vst.msk [vmem:[#allocation2 + $0x7c] sm:$0xf] %vm691, %v1534
      %1599 = vrot.lane.b32.xlu0 %v434, 8
      %v1600 = vpop.permute.xlu0 %1599
      %1601 = vrot.lane.b32.xlu0 %v435, 8
      %v1602 = vpop.permute.xlu0 %1601
      %1603 = vrot.lane.b32.xlu0 %v436, 8
      %v1604 = vpop.permute.xlu0 %1603
      %1605 = vrot.lane.b32.xlu0 %v437, 8
      %v1606 = vpop.permute.xlu0 %1605
      %1607 = vrot.lane.b32.xlu0 %v438, 8
      %v1608 = vpop.permute.xlu0 %1607
      %1609 = vrot.lane.b32.xlu0 %v439, 8
      %v1610 = vpop.permute.xlu0 %1609
      %1611 = vrot.lane.b32.xlu0 %v440, 8
      %v1612 = vpop.permute.xlu0 %1611
      %1613 = vrot.lane.b32.xlu0 %v441, 8
      %v1614 = vpop.permute.xlu0 %1613
      %1615 = vrot.lane.b32.xlu0 %v442, 8
      %v1616 = vpop.permute.xlu0 %1615
      %1617 = vrot.lane.b32.xlu0 %v443, 8
      %v1618 = vpop.permute.xlu0 %1617
      %1619 = vrot.lane.b32.xlu0 %v444, 8
      %v1620 = vpop.permute.xlu0 %1619
      %1621 = vrot.lane.b32.xlu0 %v445, 8
      %v1622 = vpop.permute.xlu0 %1621
      %1623 = vrot.lane.b32.xlu0 %v446, 8
      %v1624 = vpop.permute.xlu0 %1623
      %1625 = vrot.lane.b32.xlu0 %v447, 8
      %v1626 = vpop.permute.xlu0 %1625
      %1627 = vrot.lane.b32.xlu0 %v448, 8
      %v1628 = vpop.permute.xlu0 %1627
      %1629 = vrot.lane.b32.xlu0 %v449, 8
      %v1630 = vpop.permute.xlu0 %1629
      %1631 = vrot.lane.b32.xlu0 %v450, 8
      %v1632 = vpop.permute.xlu0 %1631
      %1633 = vrot.lane.b32.xlu0 %v451, 8
      %v1634 = vpop.permute.xlu0 %1633
      %1635 = vrot.lane.b32.xlu0 %v452, 8
      %v1636 = vpop.permute.xlu0 %1635
      %1637 = vrot.lane.b32.xlu0 %v453, 8
      %v1638 = vpop.permute.xlu0 %1637
      %1639 = vrot.lane.b32.xlu0 %v454, 8
      %v1640 = vpop.permute.xlu0 %1639
      %1641 = vrot.lane.b32.xlu0 %v455, 8
      %v1642 = vpop.permute.xlu0 %1641
      %1643 = vrot.lane.b32.xlu0 %v456, 8
      %v1644 = vpop.permute.xlu0 %1643
      %1645 = vrot.lane.b32.xlu0 %v457, 8
      %v1646 = vpop.permute.xlu0 %1645
      %1647 = vrot.lane.b32.xlu0 %v458, 8
      %v1648 = vpop.permute.xlu0 %1647
      %1649 = vrot.lane.b32.xlu0 %v459, 8
      %v1650 = vpop.permute.xlu0 %1649
      %1651 = vrot.lane.b32.xlu0 %v460, 8
      %v1652 = vpop.permute.xlu0 %1651
      %1653 = vrot.lane.b32.xlu0 %v461, 8
      %v1654 = vpop.permute.xlu0 %1653
      %1655 = vrot.lane.b32.xlu0 %v462, 8
      %v1656 = vpop.permute.xlu0 %1655
      %1657 = vrot.lane.b32.xlu0 %v463, 8
      %v1658 = vpop.permute.xlu0 %1657
      %1659 = vrot.lane.b32.xlu0 %v464, 8
      %v1660 = vpop.permute.xlu0 %1659
      %1661 = vrot.lane.b32.xlu0 %v465, 8
      %v1662 = vpop.permute.xlu0 %1661
      %1695 = vst.msk [vmem:[#allocation2] sm:$0xf] %vm852, %v1600
      %1696 = vst.msk [vmem:[#allocation2 + $0x4] sm:$0xf] %vm852, %v1602
      %1697 = vst.msk [vmem:[#allocation2 + $0x8] sm:$0xf] %vm852, %v1604
      %1698 = vst.msk [vmem:[#allocation2 + $0xc] sm:$0xf] %vm852, %v1606
      %1699 = vst.msk [vmem:[#allocation2 + $0x10] sm:$0xf] %vm852, %v1608
      %1700 = vst.msk [vmem:[#allocation2 + $0x14] sm:$0xf] %vm852, %v1610
      %1701 = vst.msk [vmem:[#allocation2 + $0x18] sm:$0xf] %vm852, %v1612
      %1702 = vst.msk [vmem:[#allocation2 + $0x1c] sm:$0xf] %vm852, %v1614
      %1703 = vst.msk [vmem:[#allocation2 + $0x20] sm:$0xf] %vm852, %v1616
      %1704 = vst.msk [vmem:[#allocation2 + $0x24] sm:$0xf] %vm852, %v1618
      %1705 = vst.msk [vmem:[#allocation2 + $0x28] sm:$0xf] %vm852, %v1620
      %1706 = vst.msk [vmem:[#allocation2 + $0x2c] sm:$0xf] %vm852, %v1622
      %1707 = vst.msk [vmem:[#allocation2 + $0x30] sm:$0xf] %vm852, %v1624
      %1708 = vst.msk [vmem:[#allocation2 + $0x34] sm:$0xf] %vm852, %v1626
      %1709 = vst.msk [vmem:[#allocation2 + $0x38] sm:$0xf] %vm852, %v1628
      %1710 = vst.msk [vmem:[#allocation2 + $0x3c] sm:$0xf] %vm852, %v1630
      %1711 = vst.msk [vmem:[#allocation2 + $0x40] sm:$0xf] %vm852, %v1632
      %1712 = vst.msk [vmem:[#allocation2 + $0x44] sm:$0xf] %vm852, %v1634
      %1713 = vst.msk [vmem:[#allocation2 + $0x48] sm:$0xf] %vm852, %v1636
      %1714 = vst.msk [vmem:[#allocation2 + $0x4c] sm:$0xf] %vm852, %v1638
      %1715 = vst.msk [vmem:[#allocation2 + $0x50] sm:$0xf] %vm852, %v1640
      %1716 = vst.msk [vmem:[#allocation2 + $0x54] sm:$0xf] %vm852, %v1642
      %1717 = vst.msk [vmem:[#allocation2 + $0x58] sm:$0xf] %vm852, %v1644
      %1718 = vst.msk [vmem:[#allocation2 + $0x5c] sm:$0xf] %vm852, %v1646
      %1719 = vst.msk [vmem:[#allocation2 + $0x60] sm:$0xf] %vm852, %v1648
      %1720 = vst.msk [vmem:[#allocation2 + $0x64] sm:$0xf] %vm852, %v1650
      %1721 = vst.msk [vmem:[#allocation2 + $0x68] sm:$0xf] %vm852, %v1652
      %1722 = vst.msk [vmem:[#allocation2 + $0x6c] sm:$0xf] %vm852, %v1654
      %1723 = vst.msk [vmem:[#allocation2 + $0x70] sm:$0xf] %vm852, %v1656
      %1724 = vst.msk [vmem:[#allocation2 + $0x74] sm:$0xf] %vm852, %v1658
      %1725 = vst.msk [vmem:[#allocation2 + $0x78] sm:$0xf] %vm852, %v1660
      %1726 = vst.msk [vmem:[#allocation2 + $0x7c] sm:$0xf] %vm852, %v1662
      %1759 = vrot.lane.b32.xlu0 %v498, 12
      %v1760 = vpop.permute.xlu0 %1759
      %1761 = vrot.lane.b32.xlu0 %v499, 12
      %v1762 = vpop.permute.xlu0 %1761
      %1763 = vrot.lane.b32.xlu0 %v500, 12
      %v1764 = vpop.permute.xlu0 %1763
      %1765 = vrot.lane.b32.xlu0 %v501, 12
      %v1766 = vpop.permute.xlu0 %1765
      %1767 = vrot.lane.b32.xlu0 %v502, 12
      %v1768 = vpop.permute.xlu0 %1767
      %1769 = vrot.lane.b32.xlu0 %v503, 12
      %v1770 = vpop.permute.xlu0 %1769
      %1771 = vrot.lane.b32.xlu0 %v504, 12
      %v1772 = vpop.permute.xlu0 %1771
      %1773 = vrot.lane.b32.xlu0 %v505, 12
      %v1774 = vpop.permute.xlu0 %1773
      %1775 = vrot.lane.b32.xlu0 %v506, 12
      %v1776 = vpop.permute.xlu0 %1775
      %1777 = vrot.lane.b32.xlu0 %v507, 12
      %v1778 = vpop.permute.xlu0 %1777
      %1779 = vrot.lane.b32.xlu0 %v508, 12
      %v1780 = vpop.permute.xlu0 %1779
      %1781 = vrot.lane.b32.xlu0 %v509, 12
      %v1782 = vpop.permute.xlu0 %1781
      %1783 = vrot.lane.b32.xlu0 %v510, 12
      %v1784 = vpop.permute.xlu0 %1783
      %1785 = vrot.lane.b32.xlu0 %v511, 12
      %v1786 = vpop.permute.xlu0 %1785
      %1787 = vrot.lane.b32.xlu0 %v512, 12
      %v1788 = vpop.permute.xlu0 %1787
      %1789 = vrot.lane.b32.xlu0 %v513, 12
      %v1790 = vpop.permute.xlu0 %1789
      %1791 = vrot.lane.b32.xlu0 %v514, 12
      %v1792 = vpop.permute.xlu0 %1791
      %1793 = vrot.lane.b32.xlu0 %v515, 12
      %v1794 = vpop.permute.xlu0 %1793
      %1795 = vrot.lane.b32.xlu0 %v516, 12
      %v1796 = vpop.permute.xlu0 %1795
      %1797 = vrot.lane.b32.xlu0 %v517, 12
      %v1798 = vpop.permute.xlu0 %1797
      %1799 = vrot.lane.b32.xlu0 %v518, 12
      %v1800 = vpop.permute.xlu0 %1799
      %1801 = vrot.lane.b32.xlu0 %v519, 12
      %v1802 = vpop.permute.xlu0 %1801
      %1803 = vrot.lane.b32.xlu0 %v520, 12
      %v1804 = vpop.permute.xlu0 %1803
      %1805 = vrot.lane.b32.xlu0 %v521, 12
      %v1806 = vpop.permute.xlu0 %1805
      %1807 = vrot.lane.b32.xlu0 %v522, 12
      %v1808 = vpop.permute.xlu0 %1807
      %1809 = vrot.lane.b32.xlu0 %v523, 12
      %v1810 = vpop.permute.xlu0 %1809
      %1811 = vrot.lane.b32.xlu0 %v524, 12
      %v1812 = vpop.permute.xlu0 %1811
      %1813 = vrot.lane.b32.xlu0 %v525, 12
      %v1814 = vpop.permute.xlu0 %1813
      %1815 = vrot.lane.b32.xlu0 %v526, 12
      %v1816 = vpop.permute.xlu0 %1815
      %1817 = vrot.lane.b32.xlu0 %v527, 12
      %v1818 = vpop.permute.xlu0 %1817
      %1819 = vrot.lane.b32.xlu0 %v528, 12
      %v1820 = vpop.permute.xlu0 %1819
      %1821 = vrot.lane.b32.xlu0 %v529, 12
      %v1822 = vpop.permute.xlu0 %1821
      %1855 = vst.msk [vmem:[#allocation2] sm:$0xf] %vm1013, %v1760
      %1856 = vst.msk [vmem:[#allocation2 + $0x4] sm:$0xf] %vm1013, %v1762
      %1857 = vst.msk [vmem:[#allocation2 + $0x8] sm:$0xf] %vm1013, %v1764
      %1858 = vst.msk [vmem:[#allocation2 + $0xc] sm:$0xf] %vm1013, %v1766
      %1859 = vst.msk [vmem:[#allocation2 + $0x10] sm:$0xf] %vm1013, %v1768
      %1860 = vst.msk [vmem:[#allocation2 + $0x14] sm:$0xf] %vm1013, %v1770
      %1861 = vst.msk [vmem:[#allocation2 + $0x18] sm:$0xf] %vm1013, %v1772
      %1862 = vst.msk [vmem:[#allocation2 + $0x1c] sm:$0xf] %vm1013, %v1774
      %1863 = vst.msk [vmem:[#allocation2 + $0x20] sm:$0xf] %vm1013, %v1776
      %1864 = vst.msk [vmem:[#allocation2 + $0x24] sm:$0xf] %vm1013, %v1778
      %1865 = vst.msk [vmem:[#allocation2 + $0x28] sm:$0xf] %vm1013, %v1780
      %1866 = vst.msk [vmem:[#allocation2 + $0x2c] sm:$0xf] %vm1013, %v1782
      %1867 = vst.msk [vmem:[#allocation2 + $0x30] sm:$0xf] %vm1013, %v1784
      %1868 = vst.msk [vmem:[#allocation2 + $0x34] sm:$0xf] %vm1013, %v1786
      %1869 = vst.msk [vmem:[#allocation2 + $0x38] sm:$0xf] %vm1013, %v1788
      %1870 = vst.msk [vmem:[#allocation2 + $0x3c] sm:$0xf] %vm1013, %v1790
      %1871 = vst.msk [vmem:[#allocation2 + $0x40] sm:$0xf] %vm1013, %v1792
      %1872 = vst.msk [vmem:[#allocation2 + $0x44] sm:$0xf] %vm1013, %v1794
      %1873 = vst.msk [vmem:[#allocation2 + $0x48] sm:$0xf] %vm1013, %v1796
      %1874 = vst.msk [vmem:[#allocation2 + $0x4c] sm:$0xf] %vm1013, %v1798
      %1875 = vst.msk [vmem:[#allocation2 + $0x50] sm:$0xf] %vm1013, %v1800
      %1876 = vst.msk [vmem:[#allocation2 + $0x54] sm:$0xf] %vm1013, %v1802
      %1877 = vst.msk [vmem:[#allocation2 + $0x58] sm:$0xf] %vm1013, %v1804
      %1878 = vst.msk [vmem:[#allocation2 + $0x5c] sm:$0xf] %vm1013, %v1806
      %1879 = vst.msk [vmem:[#allocation2 + $0x60] sm:$0xf] %vm1013, %v1808
      %1880 = vst.msk [vmem:[#allocation2 + $0x64] sm:$0xf] %vm1013, %v1810
      %1881 = vst.msk [vmem:[#allocation2 + $0x68] sm:$0xf] %vm1013, %v1812
      %1882 = vst.msk [vmem:[#allocation2 + $0x6c] sm:$0xf] %vm1013, %v1814
      %1883 = vst.msk [vmem:[#allocation2 + $0x70] sm:$0xf] %vm1013, %v1816
      %1884 = vst.msk [vmem:[#allocation2 + $0x74] sm:$0xf] %vm1013, %v1818
      %1885 = vst.msk [vmem:[#allocation2 + $0x78] sm:$0xf] %vm1013, %v1820
      %1886 = vst.msk [vmem:[#allocation2 + $0x7c] sm:$0xf] %vm1013, %v1822
      %v1887 = vld [vmem:[#allocation2] sm:$0xf]
      %v1888 = vld [vmem:[#allocation2 + $0x4] sm:$0xf]
      %v1889 = vld [vmem:[#allocation2 + $0x8] sm:$0xf]
      %v1890 = vld [vmem:[#allocation2 + $0xc] sm:$0xf]
      %v1891 = vld [vmem:[#allocation2 + $0x10] sm:$0xf]
      %v1892 = vld [vmem:[#allocation2 + $0x14] sm:$0xf]
      %v1893 = vld [vmem:[#allocation2 + $0x18] sm:$0xf]
      %v1894 = vld [vmem:[#allocation2 + $0x1c] sm:$0xf]
      %v1895 = vld [vmem:[#allocation2 + $0x20] sm:$0xf]
      %v1896 = vld [vmem:[#allocation2 + $0x24] sm:$0xf]
      %v1897 = vld [vmem:[#allocation2 + $0x28] sm:$0xf]
      %v1898 = vld [vmem:[#allocation2 + $0x2c] sm:$0xf]
      %v1899 = vld [vmem:[#allocation2 + $0x30] sm:$0xf]
      %v1900 = vld [vmem:[#allocation2 + $0x34] sm:$0xf]
      %v1901 = vld [vmem:[#allocation2 + $0x38] sm:$0xf]
      %v1902 = vld [vmem:[#allocation2 + $0x3c] sm:$0xf]
      %v1903 = vld [vmem:[#allocation2 + $0x40] sm:$0xf]
      %v1904 = vld [vmem:[#allocation2 + $0x44] sm:$0xf]
      %v1905 = vld [vmem:[#allocation2 + $0x48] sm:$0xf]
      %v1906 = vld [vmem:[#allocation2 + $0x4c] sm:$0xf]
      %v1907 = vld [vmem:[#allocation2 + $0x50] sm:$0xf]
      %v1908 = vld [vmem:[#allocation2 + $0x54] sm:$0xf]
      %v1909 = vld [vmem:[#allocation2 + $0x58] sm:$0xf]
      %v1910 = vld [vmem:[#allocation2 + $0x5c] sm:$0xf]
      %v1911 = vld [vmem:[#allocation2 + $0x60] sm:$0xf]
      %v1912 = vld [vmem:[#allocation2 + $0x64] sm:$0xf]
      %v1913 = vld [vmem:[#allocation2 + $0x68] sm:$0xf]
      %v1914 = vld [vmem:[#allocation2 + $0x6c] sm:$0xf]
      %v1915 = vld [vmem:[#allocation2 + $0x70] sm:$0xf]
      %v1916 = vld [vmem:[#allocation2 + $0x74] sm:$0xf]
      %v1917 = vld [vmem:[#allocation2 + $0x78] sm:$0xf]
      %v1918 = vld [vmem:[#allocation2 + $0x7c] sm:$0xf]
      %s1919 = scalar_lea.vmem %s1, 8
      %v1920 = vld [vmem:[%s1919] sm:$0xf]
      %v1921 = vld [vmem:[%s1919 + $0x4] sm:$0xf]
      %v1954 = vunpack.c.l.b16 %v1887
      %v1955 = vunpack.c.l.b16 %v1888
      %v1956 = vunpack.c.l.b16 %v1889
      %v1957 = vunpack.c.l.b16 %v1890
      %v1958 = vunpack.c.l.b16 %v1891
      %v1959 = vunpack.c.l.b16 %v1892
      %v1960 = vunpack.c.l.b16 %v1893
      %v1961 = vunpack.c.l.b16 %v1894
      %v1962 = vunpack.c.l.b16 %v1895
      %v1963 = vunpack.c.l.b16 %v1896
      %v1964 = vunpack.c.l.b16 %v1897
      %v1965 = vunpack.c.l.b16 %v1898
      %v1966 = vunpack.c.l.b16 %v1899
      %v1967 = vunpack.c.l.b16 %v1900
      %v1968 = vunpack.c.l.b16 %v1901
      %v1969 = vunpack.c.l.b16 %v1902
      %v1970 = vunpack.c.l.b16 %v1903
      %v1971 = vunpack.c.l.b16 %v1904
      %v1972 = vunpack.c.l.b16 %v1905
      %v1973 = vunpack.c.l.b16 %v1906
      %v1974 = vunpack.c.l.b16 %v1907
      %v1975 = vunpack.c.l.b16 %v1908
      %v1976 = vunpack.c.l.b16 %v1909
      %v1977 = vunpack.c.l.b16 %v1910
      %v1978 = vunpack.c.l.b16 %v1911
      %v1979 = vunpack.c.l.b16 %v1912
      %v1980 = vunpack.c.l.b16 %v1913
      %v1981 = vunpack.c.l.b16 %v1914
      %v1982 = vunpack.c.l.b16 %v1915
      %v1983 = vunpack.c.l.b16 %v1916
      %v1984 = vunpack.c.l.b16 %v1917
      %v1985 = vunpack.c.l.b16 %v1918
      %v1986 = vpack.c.b16 %v1955, %v1954
      %v1987 = vpack.c.b16 %v1957, %v1956
      %v1988 = vpack.c.b16 %v1959, %v1958
      %v1989 = vpack.c.b16 %v1961, %v1960
      %v1990 = vpack.c.b16 %v1963, %v1962
      %v1991 = vpack.c.b16 %v1965, %v1964
      %v1992 = vpack.c.b16 %v1967, %v1966
      %v1993 = vpack.c.b16 %v1969, %v1968
      %v1994 = vpack.c.b16 %v1971, %v1970
      %v1995 = vpack.c.b16 %v1973, %v1972
      %v1996 = vpack.c.b16 %v1975, %v1974
      %v1997 = vpack.c.b16 %v1977, %v1976
      %v1998 = vpack.c.b16 %v1979, %v1978
      %v1999 = vpack.c.b16 %v1981, %v1980
      %v2000 = vpack.c.b16 %v1983, %v1982
      %v2001 = vpack.c.b16 %v1985, %v1984
      %v2004 = vunpack.c.l.b16 %v1920
      %v2005 = vunpack.c.l.b16 %v1921
      %v2006 = vpack.c.b16 %v2005, %v2004
      %v2009 = vsel %vm1166, %v1986, 0
      %v2012 = vsel %vm1166, %v1987, 0
      %v2015 = vsel %vm1166, %v1988, 0
      %v2018 = vsel %vm1166, %v1989, 0
      %v2021 = vsel %vm1166, %v1990, 0
      %v2024 = vsel %vm1166, %v1991, 0
      %v2027 = vsel %vm1166, %v1992, 0
      %v2030 = vsel %vm1166, %v1993, 0
      %v2033 = vsel %vm1166, %v1994, 0
      %v2036 = vsel %vm1166, %v1995, 0
      %v2039 = vsel %vm1166, %v1996, 0
      %v2042 = vsel %vm1166, %v1997, 0
      %v2045 = vsel %vm1166, %v1998, 0
      %v2048 = vsel %vm1166, %v1999, 0
      %v2051 = vsel %vm1166, %v2000, 0
      %v2054 = vsel %vm1166, %v2001, 0
      %2056 = vmatpush.bf16.msra.mxu0 0
      %2057 = vmatpush.bf16.msra.mxu0 0
      %2058 = vmatpush.bf16.msra.mxu0 0
      %2059 = vmatpush.bf16.msra.mxu0 0
      %2060 = vmatpush.bf16.msra.mxu0 0
      %2061 = vmatpush.bf16.msra.mxu0 0
      %2062 = vmatpush.bf16.msra.mxu0 0
      %2063 = vmatpush.bf16.msra.mxu0 %v2006
      %2064 = vmatmul.bf16.gmra.mxu0 %v2009
      %v2065 = vpop.f32.mrf.mxu0
      %v2066 = vadd.f32 0.0, %v2065
      %v2067 = vpop.f32.mrf.mxu0
      %v2068 = vadd.f32 0.0, %v2067
      %2069 = vmatmul.bf16.gmra.mxu0 %v2012
      %v2070 = vpop.f32.mrf.mxu0
      %v2071 = vadd.f32 0.0, %v2070
      %v2072 = vpop.f32.mrf.mxu0
      %v2073 = vadd.f32 0.0, %v2072
      %2074 = vmatmul.bf16.gmra.mxu0 %v2015
      %v2075 = vpop.f32.mrf.mxu0
      %v2076 = vadd.f32 0.0, %v2075
      %v2077 = vpop.f32.mrf.mxu0
      %v2078 = vadd.f32 0.0, %v2077
      %2079 = vmatmul.bf16.gmra.mxu0 %v2018
      %v2080 = vpop.f32.mrf.mxu0
      %v2081 = vadd.f32 0.0, %v2080
      %v2082 = vpop.f32.mrf.mxu0
      %v2083 = vadd.f32 0.0, %v2082
      %2084 = vmatmul.bf16.gmra.mxu0 %v2021
      %v2085 = vpop.f32.mrf.mxu0
      %v2086 = vadd.f32 0.0, %v2085
      %v2087 = vpop.f32.mrf.mxu0
      %v2088 = vadd.f32 0.0, %v2087
      %2089 = vmatmul.bf16.gmra.mxu0 %v2024
      %v2090 = vpop.f32.mrf.mxu0
      %v2091 = vadd.f32 0.0, %v2090
      %v2092 = vpop.f32.mrf.mxu0
      %v2093 = vadd.f32 0.0, %v2092
      %2094 = vmatmul.bf16.gmra.mxu0 %v2027
      %v2095 = vpop.f32.mrf.mxu0
      %v2096 = vadd.f32 0.0, %v2095
      %v2097 = vpop.f32.mrf.mxu0
      %v2098 = vadd.f32 0.0, %v2097
      %2099 = vmatmul.bf16.gmra.mxu0 %v2030
      %v2100 = vpop.f32.mrf.mxu0
      %v2101 = vadd.f32 0.0, %v2100
      %v2102 = vpop.f32.mrf.mxu0
      %v2103 = vadd.f32 0.0, %v2102
      %2104 = vmatmul.bf16.gmra.mxu0 %v2033
      %v2105 = vpop.f32.mrf.mxu0
      %v2106 = vadd.f32 0.0, %v2105
      %v2107 = vpop.f32.mrf.mxu0
      %v2108 = vadd.f32 0.0, %v2107
      %2109 = vmatmul.bf16.gmra.mxu0 %v2036
      %v2110 = vpop.f32.mrf.mxu0
      %v2111 = vadd.f32 0.0, %v2110
      %v2112 = vpop.f32.mrf.mxu0
      %v2113 = vadd.f32 0.0, %v2112
      %2114 = vmatmul.bf16.gmra.mxu0 %v2039
      %v2115 = vpop.f32.mrf.mxu0
      %v2116 = vadd.f32 0.0, %v2115
      %v2117 = vpop.f32.mrf.mxu0
      %v2118 = vadd.f32 0.0, %v2117
      %2119 = vmatmul.bf16.gmra.mxu0 %v2042
      %v2120 = vpop.f32.mrf.mxu0
      %v2121 = vadd.f32 0.0, %v2120
      %v2122 = vpop.f32.mrf.mxu0
      %v2123 = vadd.f32 0.0, %v2122
      %2124 = vmatmul.bf16.gmra.mxu0 %v2045
      %v2125 = vpop.f32.mrf.mxu0
      %v2126 = vadd.f32 0.0, %v2125
      %v2127 = vpop.f32.mrf.mxu0
      %v2128 = vadd.f32 0.0, %v2127
      %2129 = vmatmul.bf16.gmra.mxu0 %v2048
      %v2130 = vpop.f32.mrf.mxu0
      %v2131 = vadd.f32 0.0, %v2130
      %v2132 = vpop.f32.mrf.mxu0
      %v2133 = vadd.f32 0.0, %v2132
      %2134 = vmatmul.bf16.gmra.mxu0 %v2051
      %v2135 = vpop.f32.mrf.mxu0
      %v2136 = vadd.f32 0.0, %v2135
      %v2137 = vpop.f32.mrf.mxu0
      %v2138 = vadd.f32 0.0, %v2137
      %2139 = vmatmul.bf16.gmra.mxu0 %v2054
      %v2140 = vpop.f32.mrf.mxu0
      %v2141 = vadd.f32 0.0, %v2140
      %v2142 = vpop.f32.mrf.mxu0
      %v2143 = vadd.f32 0.0, %v2142
      %2144 = vdwg.mxu0
      %s2145 = scalar_lea.vmem %s143, 256
      %2146 = vst.msk [vmem:[%s2145] sm:$0xff] %vm1304, %v2066
      %2147 = vst.msk [vmem:[%s2145 + $0x8] sm:$0xff] %vm1304, %v2068
      %2148 = vst.msk [vmem:[%s2145 + $0x10] sm:$0xff] %vm1304, %v2071
      %2149 = vst.msk [vmem:[%s2145 + $0x18] sm:$0xff] %vm1304, %v2073
      %2150 = vst.msk [vmem:[%s2145 + $0x20] sm:$0xff] %vm1304, %v2076
      %2151 = vst.msk [vmem:[%s2145 + $0x28] sm:$0xff] %vm1304, %v2078
      %2152 = vst.msk [vmem:[%s2145 + $0x30] sm:$0xff] %vm1304, %v2081
      %2153 = vst.msk [vmem:[%s2145 + $0x38] sm:$0xff] %vm1304, %v2083
      %2154 = vst.msk [vmem:[%s2145 + $0x40] sm:$0xff] %vm1304, %v2086
      %2155 = vst.msk [vmem:[%s2145 + $0x48] sm:$0xff] %vm1304, %v2088
      %2156 = vst.msk [vmem:[%s2145 + $0x50] sm:$0xff] %vm1304, %v2091
      %2157 = vst.msk [vmem:[%s2145 + $0x58] sm:$0xff] %vm1304, %v2093
      %2158 = vst.msk [vmem:[%s2145 + $0x60] sm:$0xff] %vm1304, %v2096
      %2159 = vst.msk [vmem:[%s2145 + $0x68] sm:$0xff] %vm1304, %v2098
      %2160 = vst.msk [vmem:[%s2145 + $0x70] sm:$0xff] %vm1304, %v2101
      %2161 = vst.msk [vmem:[%s2145 + $0x78] sm:$0xff] %vm1304, %v2103
      %2162 = vst.msk [vmem:[%s2145 + $0x80] sm:$0xff] %vm1304, %v2106
      %2163 = vst.msk [vmem:[%s2145 + $0x88] sm:$0xff] %vm1304, %v2108
      %2164 = vst.msk [vmem:[%s2145 + $0x90] sm:$0xff] %vm1304, %v2111
      %2165 = vst.msk [vmem:[%s2145 + $0x98] sm:$0xff] %vm1304, %v2113
      %2166 = vst.msk [vmem:[%s2145 + $0xa0] sm:$0xff] %vm1304, %v2116
      %2167 = vst.msk [vmem:[%s2145 + $0xa8] sm:$0xff] %vm1304, %v2118
      %2168 = vst.msk [vmem:[%s2145 + $0xb0] sm:$0xff] %vm1304, %v2121
      %2169 = vst.msk [vmem:[%s2145 + $0xb8] sm:$0xff] %vm1304, %v2123
      %2170 = vst.msk [vmem:[%s2145 + $0xc0] sm:$0xff] %vm1304, %v2126
      %2171 = vst.msk [vmem:[%s2145 + $0xc8] sm:$0xff] %vm1304, %v2128
      %2172 = vst.msk [vmem:[%s2145 + $0xd0] sm:$0xff] %vm1304, %v2131
      %2173 = vst.msk [vmem:[%s2145 + $0xd8] sm:$0xff] %vm1304, %v2133
      %2174 = vst.msk [vmem:[%s2145 + $0xe0] sm:$0xff] %vm1304, %v2136
      %2175 = vst.msk [vmem:[%s2145 + $0xe8] sm:$0xff] %vm1304, %v2138
      %2176 = vst.msk [vmem:[%s2145 + $0xf0] sm:$0xff] %vm1304, %v2141
      %2177 = vst.msk [vmem:[%s2145 + $0xf8] sm:$0xff] %vm1304, %v2143
      %v2178 = vsel %vm1304, %v2066, 0.0
      %v2179 = vsel %vm1304, %v2068, 0.0
      %v2180 = vadd.f32 %v2178, %v2179
      %v2181 = vsel %vm1304, %v2071, 0.0
      %v2182 = vadd.f32 %v2180, %v2181
      %v2183 = vsel %vm1304, %v2073, 0.0
      %v2184 = vadd.f32 %v2182, %v2183
      %v2185 = vsel %vm1304, %v2076, 0.0
      %v2186 = vadd.f32 %v2184, %v2185
      %v2187 = vsel %vm1304, %v2078, 0.0
      %v2188 = vadd.f32 %v2186, %v2187
      %v2189 = vsel %vm1304, %v2081, 0.0
      %v2190 = vadd.f32 %v2188, %v2189
      %v2191 = vsel %vm1304, %v2083, 0.0
      %v2192 = vadd.f32 %v2190, %v2191
      %v2193 = vsel %vm1304, %v2086, 0.0
      %v2194 = vadd.f32 %v2192, %v2193
      %v2195 = vsel %vm1304, %v2088, 0.0
      %v2196 = vadd.f32 %v2194, %v2195
      %v2197 = vsel %vm1304, %v2091, 0.0
      %v2198 = vadd.f32 %v2196, %v2197
      %v2199 = vsel %vm1304, %v2093, 0.0
      %v2200 = vadd.f32 %v2198, %v2199
      %v2201 = vsel %vm1304, %v2096, 0.0
      %v2202 = vadd.f32 %v2200, %v2201
      %v2203 = vsel %vm1304, %v2098, 0.0
      %v2204 = vadd.f32 %v2202, %v2203
      %v2205 = vsel %vm1304, %v2101, 0.0
      %v2206 = vadd.f32 %v2204, %v2205
      %v2207 = vsel %vm1304, %v2103, 0.0
      %v2208 = vadd.f32 %v2206, %v2207
      %v2209 = vsel %vm1304, %v2106, 0.0
      %v2210 = vadd.f32 %v2208, %v2209
      %v2211 = vsel %vm1304, %v2108, 0.0
      %v2212 = vadd.f32 %v2210, %v2211
      %v2213 = vsel %vm1304, %v2111, 0.0
      %v2214 = vadd.f32 %v2212, %v2213
      %v2215 = vsel %vm1304, %v2113, 0.0
      %v2216 = vadd.f32 %v2214, %v2215
      %v2217 = vsel %vm1304, %v2116, 0.0
      %v2218 = vadd.f32 %v2216, %v2217
      %v2219 = vsel %vm1304, %v2118, 0.0
      %v2220 = vadd.f32 %v2218, %v2219
      %v2221 = vsel %vm1304, %v2121, 0.0
      %v2222 = vadd.f32 %v2220, %v2221
      %v2223 = vsel %vm1304, %v2123, 0.0
      %v2224 = vadd.f32 %v2222, %v2223
      %v2225 = vsel %vm1304, %v2126, 0.0
      %v2226 = vadd.f32 %v2224, %v2225
      %v2227 = vsel %vm1304, %v2128, 0.0
      %v2228 = vadd.f32 %v2226, %v2227
      %v2229 = vsel %vm1304, %v2131, 0.0
      %v2230 = vadd.f32 %v2228, %v2229
      %v2231 = vsel %vm1304, %v2133, 0.0
      %v2232 = vadd.f32 %v2230, %v2231
      %v2233 = vsel %vm1304, %v2136, 0.0
      %v2234 = vadd.f32 %v2232, %v2233
      %v2235 = vsel %vm1304, %v2138, 0.0
      %v2236 = vadd.f32 %v2234, %v2235
      %v2237 = vsel %vm1304, %v2141, 0.0
      %v2238 = vadd.f32 %v2236, %v2237
      %v2239 = vsel %vm1304, %v2143, 0.0
      %v2240 = vadd.f32 %v2238, %v2239
      %v2241 = vrot.slane %v2240, 4
      %v2242 = vadd.f32 %v2240, %v2241
      %v2243 = vrot.slane %v2242, 2
      %v2244 = vadd.f32 %v2242, %v2243
      %v2245 = vrot.slane %v2244, 1
      %v2246 = vadd.f32 %v2244, %v2245
      %v2247 = vadd.f32 %v1406, %v2246
      %v2248 = vld [vmem:[%s337] sm:$0xff]
      %v2249 = vld [vmem:[%s337 + $0x8] sm:$0xff]
      %v2250 = vld [vmem:[%s337 + $0x18] sm:$0xff]
      %v2251 = vld [vmem:[%s337 + $0x20] sm:$0xff]
      %v2252 = vld [vmem:[%s337 + $0x30] sm:$0xff]
      %v2253 = vld [vmem:[%s337 + $0x38] sm:$0xff]
      %v2254 = vld [vmem:[%s337 + $0x48] sm:$0xff]
      %v2255 = vld [vmem:[%s337 + $0x50] sm:$0xff]
      %v2256 = vld [vmem:[%s337 + $0x60] sm:$0xff]
      %v2257 = vld [vmem:[%s337 + $0x68] sm:$0xff]
      %v2258 = vld [vmem:[%s337 + $0x78] sm:$0xff]
      %v2259 = vld [vmem:[%s337 + $0x80] sm:$0xff]
      %v2260 = vld [vmem:[%s337 + $0x90] sm:$0xff]
      %v2261 = vld [vmem:[%s337 + $0x98] sm:$0xff]
      %v2262 = vld [vmem:[%s337 + $0xa8] sm:$0xff]
      %v2263 = vld [vmem:[%s337 + $0xb0] sm:$0xff]
      %v2264 = vld [vmem:[%s337 + $0xc0] sm:$0xff]
      %v2265 = vld [vmem:[%s337 + $0xc8] sm:$0xff]
      %v2266 = vld [vmem:[%s337 + $0xd8] sm:$0xff]
      %v2267 = vld [vmem:[%s337 + $0xe0] sm:$0xff]
      %v2268 = vld [vmem:[%s337 + $0xf0] sm:$0xff]
      %v2269 = vld [vmem:[%s337 + $0xf8] sm:$0xff]
      %v2270 = vld [vmem:[%s337 + $0x108] sm:$0xff]
      %v2271 = vld [vmem:[%s337 + $0x110] sm:$0xff]
      %v2272 = vld [vmem:[%s337 + $0x120] sm:$0xff]
      %v2273 = vld [vmem:[%s337 + $0x128] sm:$0xff]
      %v2274 = vld [vmem:[%s337 + $0x138] sm:$0xff]
      %v2275 = vld [vmem:[%s337 + $0x140] sm:$0xff]
      %v2276 = vld [vmem:[%s337 + $0x150] sm:$0xff]
      %v2277 = vld [vmem:[%s337 + $0x158] sm:$0xff]
      %v2278 = vld [vmem:[%s337 + $0x168] sm:$0xff]
      %v2279 = vld [vmem:[%s337 + $0x170] sm:$0xff]
      %v2280 = vpack.c.bf16 %v2248, %v2248
      %v2281 = vpack.c.bf16 %v2249, %v2249
      %v2282 = vpack.c.bf16 %v2250, %v2250
      %v2283 = vpack.c.bf16 %v2251, %v2251
      %v2284 = vpack.c.bf16 %v2252, %v2252
      %v2285 = vpack.c.bf16 %v2253, %v2253
      %v2286 = vpack.c.bf16 %v2254, %v2254
      %v2287 = vpack.c.bf16 %v2255, %v2255
      %v2288 = vpack.c.bf16 %v2256, %v2256
      %v2289 = vpack.c.bf16 %v2257, %v2257
      %v2290 = vpack.c.bf16 %v2258, %v2258
      %v2291 = vpack.c.bf16 %v2259, %v2259
      %v2292 = vpack.c.bf16 %v2260, %v2260
      %v2293 = vpack.c.bf16 %v2261, %v2261
      %v2294 = vpack.c.bf16 %v2262, %v2262
      %v2295 = vpack.c.bf16 %v2263, %v2263
      %v2296 = vpack.c.bf16 %v2264, %v2264
      %v2297 = vpack.c.bf16 %v2265, %v2265
      %v2298 = vpack.c.bf16 %v2266, %v2266
      %v2299 = vpack.c.bf16 %v2267, %v2267
      %v2300 = vpack.c.bf16 %v2268, %v2268
      %v2301 = vpack.c.bf16 %v2269, %v2269
      %v2302 = vpack.c.bf16 %v2270, %v2270
      %v2303 = vpack.c.bf16 %v2271, %v2271
      %v2304 = vpack.c.bf16 %v2272, %v2272
      %v2305 = vpack.c.bf16 %v2273, %v2273
      %v2306 = vpack.c.bf16 %v2274, %v2274
      %v2307 = vpack.c.bf16 %v2275, %v2275
      %v2308 = vpack.c.bf16 %v2276, %v2276
      %v2309 = vpack.c.bf16 %v2277, %v2277
      %v2310 = vpack.c.bf16 %v2278, %v2278
      %v2311 = vpack.c.bf16 %v2279, %v2279
      %v2312 = vld [vmem:[%s337 + $0x1] sm:$0xff]
      %v2313 = vld [vmem:[%s337 + $0x9] sm:$0xff]
      %v2314 = vld [vmem:[%s337 + $0x19] sm:$0xff]
      %v2315 = vld [vmem:[%s337 + $0x21] sm:$0xff]
      %v2316 = vld [vmem:[%s337 + $0x31] sm:$0xff]
      %v2317 = vld [vmem:[%s337 + $0x39] sm:$0xff]
      %v2318 = vld [vmem:[%s337 + $0x49] sm:$0xff]
      %v2319 = vld [vmem:[%s337 + $0x51] sm:$0xff]
      %v2320 = vld [vmem:[%s337 + $0x61] sm:$0xff]
      %v2321 = vld [vmem:[%s337 + $0x69] sm:$0xff]
      %v2322 = vld [vmem:[%s337 + $0x79] sm:$0xff]
      %v2323 = vld [vmem:[%s337 + $0x81] sm:$0xff]
      %v2324 = vld [vmem:[%s337 + $0x91] sm:$0xff]
      %v2325 = vld [vmem:[%s337 + $0x99] sm:$0xff]
      %v2326 = vld [vmem:[%s337 + $0xa9] sm:$0xff]
      %v2327 = vld [vmem:[%s337 + $0xb1] sm:$0xff]
      %v2328 = vld [vmem:[%s337 + $0xc1] sm:$0xff]
      %v2329 = vld [vmem:[%s337 + $0xc9] sm:$0xff]
      %v2330 = vld [vmem:[%s337 + $0xd9] sm:$0xff]
      %v2331 = vld [vmem:[%s337 + $0xe1] sm:$0xff]
      %v2332 = vld [vmem:[%s337 + $0xf1] sm:$0xff]
      %v2333 = vld [vmem:[%s337 + $0xf9] sm:$0xff]
      %v2334 = vld [vmem:[%s337 + $0x109] sm:$0xff]
      %v2335 = vld [vmem:[%s337 + $0x111] sm:$0xff]
      %v2336 = vld [vmem:[%s337 + $0x121] sm:$0xff]
      %v2337 = vld [vmem:[%s337 + $0x129] sm:$0xff]
      %v2338 = vld [vmem:[%s337 + $0x139] sm:$0xff]
      %v2339 = vld [vmem:[%s337 + $0x141] sm:$0xff]
      %v2340 = vld [vmem:[%s337 + $0x151] sm:$0xff]
      %v2341 = vld [vmem:[%s337 + $0x159] sm:$0xff]
      %v2342 = vld [vmem:[%s337 + $0x169] sm:$0xff]
      %v2343 = vld [vmem:[%s337 + $0x171] sm:$0xff]
      %v2344 = vpack.c.bf16 %v2312, %v2312
      %v2345 = vpack.c.bf16 %v2313, %v2313
      %v2346 = vpack.c.bf16 %v2314, %v2314
      %v2347 = vpack.c.bf16 %v2315, %v2315
      %v2348 = vpack.c.bf16 %v2316, %v2316
      %v2349 = vpack.c.bf16 %v2317, %v2317
      %v2350 = vpack.c.bf16 %v2318, %v2318
      %v2351 = vpack.c.bf16 %v2319, %v2319
      %v2352 = vpack.c.bf16 %v2320, %v2320
      %v2353 = vpack.c.bf16 %v2321, %v2321
      %v2354 = vpack.c.bf16 %v2322, %v2322
      %v2355 = vpack.c.bf16 %v2323, %v2323
      %v2356 = vpack.c.bf16 %v2324, %v2324
      %v2357 = vpack.c.bf16 %v2325, %v2325
      %v2358 = vpack.c.bf16 %v2326, %v2326
      %v2359 = vpack.c.bf16 %v2327, %v2327
      %v2360 = vpack.c.bf16 %v2328, %v2328
      %v2361 = vpack.c.bf16 %v2329, %v2329
      %v2362 = vpack.c.bf16 %v2330, %v2330
      %v2363 = vpack.c.bf16 %v2331, %v2331
      %v2364 = vpack.c.bf16 %v2332, %v2332
      %v2365 = vpack.c.bf16 %v2333, %v2333
      %v2366 = vpack.c.bf16 %v2334, %v2334
      %v2367 = vpack.c.bf16 %v2335, %v2335
      %v2368 = vpack.c.bf16 %v2336, %v2336
      %v2369 = vpack.c.bf16 %v2337, %v2337
      %v2370 = vpack.c.bf16 %v2338, %v2338
      %v2371 = vpack.c.bf16 %v2339, %v2339
      %v2372 = vpack.c.bf16 %v2340, %v2340
      %v2373 = vpack.c.bf16 %v2341, %v2341
      %v2374 = vpack.c.bf16 %v2342, %v2342
      %v2375 = vpack.c.bf16 %v2343, %v2343
      %v2376 = vld [vmem:[%s337 + $0x2] sm:$0xff]
      %v2377 = vld [vmem:[%s337 + $0xa] sm:$0xff]
      %v2378 = vld [vmem:[%s337 + $0x1a] sm:$0xff]
      %v2379 = vld [vmem:[%s337 + $0x22] sm:$0xff]
      %v2380 = vld [vmem:[%s337 + $0x32] sm:$0xff]
      %v2381 = vld [vmem:[%s337 + $0x3a] sm:$0xff]
      %v2382 = vld [vmem:[%s337 + $0x4a] sm:$0xff]
      %v2383 = vld [vmem:[%s337 + $0x52] sm:$0xff]
      %v2384 = vld [vmem:[%s337 + $0x62] sm:$0xff]
      %v2385 = vld [vmem:[%s337 + $0x6a] sm:$0xff]
      %v2386 = vld [vmem:[%s337 + $0x7a] sm:$0xff]
      %v2387 = vld [vmem:[%s337 + $0x82] sm:$0xff]
      %v2388 = vld [vmem:[%s337 + $0x92] sm:$0xff]
      %v2389 = vld [vmem:[%s337 + $0x9a] sm:$0xff]
      %v2390 = vld [vmem:[%s337 + $0xaa] sm:$0xff]
      %v2391 = vld [vmem:[%s337 + $0xb2] sm:$0xff]
      %v2392 = vld [vmem:[%s337 + $0xc2] sm:$0xff]
      %v2393 = vld [vmem:[%s337 + $0xca] sm:$0xff]
      %v2394 = vld [vmem:[%s337 + $0xda] sm:$0xff]
      %v2395 = vld [vmem:[%s337 + $0xe2] sm:$0xff]
      %v2396 = vld [vmem:[%s337 + $0xf2] sm:$0xff]
      %v2397 = vld [vmem:[%s337 + $0xfa] sm:$0xff]
      %v2398 = vld [vmem:[%s337 + $0x10a] sm:$0xff]
      %v2399 = vld [vmem:[%s337 + $0x112] sm:$0xff]
      %v2400 = vld [vmem:[%s337 + $0x122] sm:$0xff]
      %v2401 = vld [vmem:[%s337 + $0x12a] sm:$0xff]
      %v2402 = vld [vmem:[%s337 + $0x13a] sm:$0xff]
      %v2403 = vld [vmem:[%s337 + $0x142] sm:$0xff]
      %v2404 = vld [vmem:[%s337 + $0x152] sm:$0xff]
      %v2405 = vld [vmem:[%s337 + $0x15a] sm:$0xff]
      %v2406 = vld [vmem:[%s337 + $0x16a] sm:$0xff]
      %v2407 = vld [vmem:[%s337 + $0x172] sm:$0xff]
      %v2408 = vpack.c.bf16 %v2376, %v2376
      %v2409 = vpack.c.bf16 %v2377, %v2377
      %v2410 = vpack.c.bf16 %v2378, %v2378
      %v2411 = vpack.c.bf16 %v2379, %v2379
      %v2412 = vpack.c.bf16 %v2380, %v2380
      %v2413 = vpack.c.bf16 %v2381, %v2381
      %v2414 = vpack.c.bf16 %v2382, %v2382
      %v2415 = vpack.c.bf16 %v2383, %v2383
      %v2416 = vpack.c.bf16 %v2384, %v2384
      %v2417 = vpack.c.bf16 %v2385, %v2385
      %v2418 = vpack.c.bf16 %v2386, %v2386
      %v2419 = vpack.c.bf16 %v2387, %v2387
      %v2420 = vpack.c.bf16 %v2388, %v2388
      %v2421 = vpack.c.bf16 %v2389, %v2389
      %v2422 = vpack.c.bf16 %v2390, %v2390
      %v2423 = vpack.c.bf16 %v2391, %v2391
      %v2424 = vpack.c.bf16 %v2392, %v2392
      %v2425 = vpack.c.bf16 %v2393, %v2393
      %v2426 = vpack.c.bf16 %v2394, %v2394
      %v2427 = vpack.c.bf16 %v2395, %v2395
      %v2428 = vpack.c.bf16 %v2396, %v2396
      %v2429 = vpack.c.bf16 %v2397, %v2397
      %v2430 = vpack.c.bf16 %v2398, %v2398
      %v2431 = vpack.c.bf16 %v2399, %v2399
      %v2432 = vpack.c.bf16 %v2400, %v2400
      %v2433 = vpack.c.bf16 %v2401, %v2401
      %v2434 = vpack.c.bf16 %v2402, %v2402
      %v2435 = vpack.c.bf16 %v2403, %v2403
      %v2436 = vpack.c.bf16 %v2404, %v2404
      %v2437 = vpack.c.bf16 %v2405, %v2405
      %v2438 = vpack.c.bf16 %v2406, %v2406
      %v2439 = vpack.c.bf16 %v2407, %v2407
      %s2440 = scalar_lea.vmem %s138, 48
      %v2441 = vld [vmem:[%s2440] sm:$0xff]
      %v2442 = vld [vmem:[%s2440 + $0x8] sm:$0xff]
      %v2443 = vld [vmem:[%s2440 + $0x18] sm:$0xff]
      %v2444 = vld [vmem:[%s2440 + $0x20] sm:$0xff]
      %v2445 = vld [vmem:[%s2440 + $0x30] sm:$0xff]
      %v2446 = vld [vmem:[%s2440 + $0x38] sm:$0xff]
      %v2447 = vld [vmem:[%s2440 + $0x48] sm:$0xff]
      %v2448 = vld [vmem:[%s2440 + $0x50] sm:$0xff]
      %v2449 = vld [vmem:[%s2440 + $0x60] sm:$0xff]
      %v2450 = vld [vmem:[%s2440 + $0x68] sm:$0xff]
      %v2451 = vld [vmem:[%s2440 + $0x78] sm:$0xff]
      %v2452 = vld [vmem:[%s2440 + $0x80] sm:$0xff]
      %v2453 = vld [vmem:[%s2440 + $0x90] sm:$0xff]
      %v2454 = vld [vmem:[%s2440 + $0x98] sm:$0xff]
      %v2455 = vld [vmem:[%s2440 + $0xa8] sm:$0xff]
      %v2456 = vld [vmem:[%s2440 + $0xb0] sm:$0xff]
      %v2457 = vld [vmem:[%s2440 + $0xc0] sm:$0xff]
      %v2458 = vld [vmem:[%s2440 + $0xc8] sm:$0xff]
      %v2459 = vld [vmem:[%s2440 + $0xd8] sm:$0xff]
      %v2460 = vld [vmem:[%s2440 + $0xe0] sm:$0xff]
      %v2461 = vld [vmem:[%s2440 + $0xf0] sm:$0xff]
      %v2462 = vld [vmem:[%s2440 + $0xf8] sm:$0xff]
      %v2463 = vld [vmem:[%s2440 + $0x108] sm:$0xff]
      %v2464 = vld [vmem:[%s2440 + $0x110] sm:$0xff]
      %v2465 = vld [vmem:[%s2440 + $0x120] sm:$0xff]
      %v2466 = vld [vmem:[%s2440 + $0x128] sm:$0xff]
      %v2467 = vld [vmem:[%s2440 + $0x138] sm:$0xff]
      %v2468 = vld [vmem:[%s2440 + $0x140] sm:$0xff]
      %v2469 = vld [vmem:[%s2440 + $0x150] sm:$0xff]
      %v2470 = vld [vmem:[%s2440 + $0x158] sm:$0xff]
      %v2471 = vld [vmem:[%s2440 + $0x168] sm:$0xff]
      %v2472 = vld [vmem:[%s2440 + $0x170] sm:$0xff]
      %v2473 = vpack.c.bf16 %v2441, %v2441
      %v2474 = vpack.c.bf16 %v2442, %v2442
      %v2475 = vpack.c.bf16 %v2443, %v2443
      %v2476 = vpack.c.bf16 %v2444, %v2444
      %v2477 = vpack.c.bf16 %v2445, %v2445
      %v2478 = vpack.c.bf16 %v2446, %v2446
      %v2479 = vpack.c.bf16 %v2447, %v2447
      %v2480 = vpack.c.bf16 %v2448, %v2448
      %v2481 = vpack.c.bf16 %v2449, %v2449
      %v2482 = vpack.c.bf16 %v2450, %v2450
      %v2483 = vpack.c.bf16 %v2451, %v2451
      %v2484 = vpack.c.bf16 %v2452, %v2452
      %v2485 = vpack.c.bf16 %v2453, %v2453
      %v2486 = vpack.c.bf16 %v2454, %v2454
      %v2487 = vpack.c.bf16 %v2455, %v2455
      %v2488 = vpack.c.bf16 %v2456, %v2456
      %v2489 = vpack.c.bf16 %v2457, %v2457
      %v2490 = vpack.c.bf16 %v2458, %v2458
      %v2491 = vpack.c.bf16 %v2459, %v2459
      %v2492 = vpack.c.bf16 %v2460, %v2460
      %v2493 = vpack.c.bf16 %v2461, %v2461
      %v2494 = vpack.c.bf16 %v2462, %v2462
      %v2495 = vpack.c.bf16 %v2463, %v2463
      %v2496 = vpack.c.bf16 %v2464, %v2464
      %v2497 = vpack.c.bf16 %v2465, %v2465
      %v2498 = vpack.c.bf16 %v2466, %v2466
      %v2499 = vpack.c.bf16 %v2467, %v2467
      %v2500 = vpack.c.bf16 %v2468, %v2468
      %v2501 = vpack.c.bf16 %v2469, %v2469
      %v2502 = vpack.c.bf16 %v2470, %v2470
      %v2503 = vpack.c.bf16 %v2471, %v2471
      %v2504 = vpack.c.bf16 %v2472, %v2472
      %v2505 = vld [vmem:[%s2440 + $0x1] sm:$0xff]
      %v2506 = vld [vmem:[%s2440 + $0x9] sm:$0xff]
      %v2507 = vld [vmem:[%s2440 + $0x19] sm:$0xff]
      %v2508 = vld [vmem:[%s2440 + $0x21] sm:$0xff]
      %v2509 = vld [vmem:[%s2440 + $0x31] sm:$0xff]
      %v2510 = vld [vmem:[%s2440 + $0x39] sm:$0xff]
      %v2511 = vld [vmem:[%s2440 + $0x49] sm:$0xff]
      %v2512 = vld [vmem:[%s2440 + $0x51] sm:$0xff]
      %v2513 = vld [vmem:[%s2440 + $0x61] sm:$0xff]
      %v2514 = vld [vmem:[%s2440 + $0x69] sm:$0xff]
      %v2515 = vld [vmem:[%s2440 + $0x79] sm:$0xff]
      %v2516 = vld [vmem:[%s2440 + $0x81] sm:$0xff]
      %v2517 = vld [vmem:[%s2440 + $0x91] sm:$0xff]
      %v2518 = vld [vmem:[%s2440 + $0x99] sm:$0xff]
      %v2519 = vld [vmem:[%s2440 + $0xa9] sm:$0xff]
      %v2520 = vld [vmem:[%s2440 + $0xb1] sm:$0xff]
      %v2521 = vld [vmem:[%s2440 + $0xc1] sm:$0xff]
      %v2522 = vld [vmem:[%s2440 + $0xc9] sm:$0xff]
      %v2523 = vld [vmem:[%s2440 + $0xd9] sm:$0xff]
      %v2524 = vld [vmem:[%s2440 + $0xe1] sm:$0xff]
      %v2525 = vld [vmem:[%s2440 + $0xf1] sm:$0xff]
      %v2526 = vld [vmem:[%s2440 + $0xf9] sm:$0xff]
      %v2527 = vld [vmem:[%s2440 + $0x109] sm:$0xff]
      %v2528 = vld [vmem:[%s2440 + $0x111] sm:$0xff]
      %v2529 = vld [vmem:[%s2440 + $0x121] sm:$0xff]
      %v2530 = vld [vmem:[%s2440 + $0x129] sm:$0xff]
      %v2531 = vld [vmem:[%s2440 + $0x139] sm:$0xff]
      %v2532 = vld [vmem:[%s2440 + $0x141] sm:$0xff]
      %v2533 = vld [vmem:[%s2440 + $0x151] sm:$0xff]
      %v2534 = vld [vmem:[%s2440 + $0x159] sm:$0xff]
      %v2535 = vld [vmem:[%s2440 + $0x169] sm:$0xff]
      %v2536 = vld [vmem:[%s2440 + $0x171] sm:$0xff]
      %v2537 = vpack.c.bf16 %v2505, %v2505
      %v2538 = vpack.c.bf16 %v2506, %v2506
      %v2539 = vpack.c.bf16 %v2507, %v2507
      %v2540 = vpack.c.bf16 %v2508, %v2508
      %v2541 = vpack.c.bf16 %v2509, %v2509
      %v2542 = vpack.c.bf16 %v2510, %v2510
      %v2543 = vpack.c.bf16 %v2511, %v2511
      %v2544 = vpack.c.bf16 %v2512, %v2512
      %v2545 = vpack.c.bf16 %v2513, %v2513
      %v2546 = vpack.c.bf16 %v2514, %v2514
      %v2547 = vpack.c.bf16 %v2515, %v2515
      %v2548 = vpack.c.bf16 %v2516, %v2516
      %v2549 = vpack.c.bf16 %v2517, %v2517
      %v2550 = vpack.c.bf16 %v2518, %v2518
      %v2551 = vpack.c.bf16 %v2519, %v2519
      %v2552 = vpack.c.bf16 %v2520, %v2520
      %v2553 = vpack.c.bf16 %v2521, %v2521
      %v2554 = vpack.c.bf16 %v2522, %v2522
      %v2555 = vpack.c.bf16 %v2523, %v2523
      %v2556 = vpack.c.bf16 %v2524, %v2524
      %v2557 = vpack.c.bf16 %v2525, %v2525
      %v2558 = vpack.c.bf16 %v2526, %v2526
      %v2559 = vpack.c.bf16 %v2527, %v2527
      %v2560 = vpack.c.bf16 %v2528, %v2528
      %v2561 = vpack.c.bf16 %v2529, %v2529
      %v2562 = vpack.c.bf16 %v2530, %v2530
      %v2563 = vpack.c.bf16 %v2531, %v2531
      %v2564 = vpack.c.bf16 %v2532, %v2532
      %v2565 = vpack.c.bf16 %v2533, %v2533
      %v2566 = vpack.c.bf16 %v2534, %v2534
      %v2567 = vpack.c.bf16 %v2535, %v2535
      %v2568 = vpack.c.bf16 %v2536, %v2536
      %v2569 = vld [vmem:[%s2440 + $0x2] sm:$0xff]
      %v2570 = vld [vmem:[%s2440 + $0xa] sm:$0xff]
      %v2571 = vld [vmem:[%s2440 + $0x1a] sm:$0xff]
      %v2572 = vld [vmem:[%s2440 + $0x22] sm:$0xff]
      %v2573 = vld [vmem:[%s2440 + $0x32] sm:$0xff]
      %v2574 = vld [vmem:[%s2440 + $0x3a] sm:$0xff]
      %v2575 = vld [vmem:[%s2440 + $0x4a] sm:$0xff]
      %v2576 = vld [vmem:[%s2440 + $0x52] sm:$0xff]
      %v2577 = vld [vmem:[%s2440 + $0x62] sm:$0xff]
      %v2578 = vld [vmem:[%s2440 + $0x6a] sm:$0xff]
      %v2579 = vld [vmem:[%s2440 + $0x7a] sm:$0xff]
      %v2580 = vld [vmem:[%s2440 + $0x82] sm:$0xff]
      %v2581 = vld [vmem:[%s2440 + $0x92] sm:$0xff]
      %v2582 = vld [vmem:[%s2440 + $0x9a] sm:$0xff]
      %v2583 = vld [vmem:[%s2440 + $0xaa] sm:$0xff]
      %v2584 = vld [vmem:[%s2440 + $0xb2] sm:$0xff]
      %v2585 = vld [vmem:[%s2440 + $0xc2] sm:$0xff]
      %v2586 = vld [vmem:[%s2440 + $0xca] sm:$0xff]
      %v2587 = vld [vmem:[%s2440 + $0xda] sm:$0xff]
      %v2588 = vld [vmem:[%s2440 + $0xe2] sm:$0xff]
      %v2589 = vld [vmem:[%s2440 + $0xf2] sm:$0xff]
      %v2590 = vld [vmem:[%s2440 + $0xfa] sm:$0xff]
      %v2591 = vld [vmem:[%s2440 + $0x10a] sm:$0xff]
      %v2592 = vld [vmem:[%s2440 + $0x112] sm:$0xff]
      %v2593 = vld [vmem:[%s2440 + $0x122] sm:$0xff]
      %v2594 = vld [vmem:[%s2440 + $0x12a] sm:$0xff]
      %v2595 = vld [vmem:[%s2440 + $0x13a] sm:$0xff]
      %v2596 = vld [vmem:[%s2440 + $0x142] sm:$0xff]
      %v2597 = vld [vmem:[%s2440 + $0x152] sm:$0xff]
      %v2598 = vld [vmem:[%s2440 + $0x15a] sm:$0xff]
      %v2599 = vld [vmem:[%s2440 + $0x16a] sm:$0xff]
      %v2600 = vld [vmem:[%s2440 + $0x172] sm:$0xff]
      %v2601 = vpack.c.bf16 %v2569, %v2569
      %v2602 = vpack.c.bf16 %v2570, %v2570
      %v2603 = vpack.c.bf16 %v2571, %v2571
      %v2604 = vpack.c.bf16 %v2572, %v2572
      %v2605 = vpack.c.bf16 %v2573, %v2573
      %v2606 = vpack.c.bf16 %v2574, %v2574
      %v2607 = vpack.c.bf16 %v2575, %v2575
      %v2608 = vpack.c.bf16 %v2576, %v2576
      %v2609 = vpack.c.bf16 %v2577, %v2577
      %v2610 = vpack.c.bf16 %v2578, %v2578
      %v2611 = vpack.c.bf16 %v2579, %v2579
      %v2612 = vpack.c.bf16 %v2580, %v2580
      %v2613 = vpack.c.bf16 %v2581, %v2581
      %v2614 = vpack.c.bf16 %v2582, %v2582
      %v2615 = vpack.c.bf16 %v2583, %v2583
      %v2616 = vpack.c.bf16 %v2584, %v2584
      %v2617 = vpack.c.bf16 %v2585, %v2585
      %v2618 = vpack.c.bf16 %v2586, %v2586
      %v2619 = vpack.c.bf16 %v2587, %v2587
      %v2620 = vpack.c.bf16 %v2588, %v2588
      %v2621 = vpack.c.bf16 %v2589, %v2589
      %v2622 = vpack.c.bf16 %v2590, %v2590
      %v2623 = vpack.c.bf16 %v2591, %v2591
      %v2624 = vpack.c.bf16 %v2592, %v2592
      %v2625 = vpack.c.bf16 %v2593, %v2593
      %v2626 = vpack.c.bf16 %v2594, %v2594
      %v2627 = vpack.c.bf16 %v2595, %v2595
      %v2628 = vpack.c.bf16 %v2596, %v2596
      %v2629 = vpack.c.bf16 %v2597, %v2597
      %v2630 = vpack.c.bf16 %v2598, %v2598
      %v2631 = vpack.c.bf16 %v2599, %v2599
      %v2632 = vpack.c.bf16 %v2600, %v2600
      %2633 = vst.msk [vmem:[#allocation2] sm:$0xf] %vm530, %v2280
      %2634 = vst.msk [vmem:[#allocation2 + $0x4] sm:$0xf] %vm530, %v2281
      %2635 = vst.msk [vmem:[#allocation2 + $0x8] sm:$0xf] %vm530, %v2282
      %2636 = vst.msk [vmem:[#allocation2 + $0xc] sm:$0xf] %vm530, %v2283
      %2637 = vst.msk [vmem:[#allocation2 + $0x10] sm:$0xf] %vm530, %v2284
      %2638 = vst.msk [vmem:[#allocation2 + $0x14] sm:$0xf] %vm530, %v2285
      %2639 = vst.msk [vmem:[#allocation2 + $0x18] sm:$0xf] %vm530, %v2286
      %2640 = vst.msk [vmem:[#allocation2 + $0x1c] sm:$0xf] %vm530, %v2287
      %2641 = vst.msk [vmem:[#allocation2 + $0x20] sm:$0xf] %vm530, %v2288
      %2642 = vst.msk [vmem:[#allocation2 + $0x24] sm:$0xf] %vm530, %v2289
      %2643 = vst.msk [vmem:[#allocation2 + $0x28] sm:$0xf] %vm530, %v2290
      %2644 = vst.msk [vmem:[#allocation2 + $0x2c] sm:$0xf] %vm530, %v2291
      %2645 = vst.msk [vmem:[#allocation2 + $0x30] sm:$0xf] %vm530, %v2292
      %2646 = vst.msk [vmem:[#allocation2 + $0x34] sm:$0xf] %vm530, %v2293
      %2647 = vst.msk [vmem:[#allocation2 + $0x38] sm:$0xf] %vm530, %v2294
      %2648 = vst.msk [vmem:[#allocation2 + $0x3c] sm:$0xf] %vm530, %v2295
      %2649 = vst.msk [vmem:[#allocation2 + $0x40] sm:$0xf] %vm530, %v2296
      %2650 = vst.msk [vmem:[#allocation2 + $0x44] sm:$0xf] %vm530, %v2297
      %2651 = vst.msk [vmem:[#allocation2 + $0x48] sm:$0xf] %vm530, %v2298
      %2652 = vst.msk [vmem:[#allocation2 + $0x4c] sm:$0xf] %vm530, %v2299
      %2653 = vst.msk [vmem:[#allocation2 + $0x50] sm:$0xf] %vm530, %v2300
      %2654 = vst.msk [vmem:[#allocation2 + $0x54] sm:$0xf] %vm530, %v2301
      %2655 = vst.msk [vmem:[#allocation2 + $0x58] sm:$0xf] %vm530, %v2302
      %2656 = vst.msk [vmem:[#allocation2 + $0x5c] sm:$0xf] %vm530, %v2303
      %2657 = vst.msk [vmem:[#allocation2 + $0x60] sm:$0xf] %vm530, %v2304
      %2658 = vst.msk [vmem:[#allocation2 + $0x64] sm:$0xf] %vm530, %v2305
      %2659 = vst.msk [vmem:[#allocation2 + $0x68] sm:$0xf] %vm530, %v2306
      %2660 = vst.msk [vmem:[#allocation2 + $0x6c] sm:$0xf] %vm530, %v2307
      %2661 = vst.msk [vmem:[#allocation2 + $0x70] sm:$0xf] %vm530, %v2308
      %2662 = vst.msk [vmem:[#allocation2 + $0x74] sm:$0xf] %vm530, %v2309
      %2663 = vst.msk [vmem:[#allocation2 + $0x78] sm:$0xf] %vm530, %v2310
      %2664 = vst.msk [vmem:[#allocation2 + $0x7c] sm:$0xf] %vm530, %v2311
      %2697 = vrot.lane.b32.xlu0 %v2344, 4
      %v2698 = vpop.permute.xlu0 %2697
      %2699 = vrot.lane.b32.xlu0 %v2345, 4
      %v2700 = vpop.permute.xlu0 %2699
      %2701 = vrot.lane.b32.xlu0 %v2346, 4
      %v2702 = vpop.permute.xlu0 %2701
      %2703 = vrot.lane.b32.xlu0 %v2347, 4
      %v2704 = vpop.permute.xlu0 %2703
      %2705 = vrot.lane.b32.xlu0 %v2348, 4
      %v2706 = vpop.permute.xlu0 %2705
      %2707 = vrot.lane.b32.xlu0 %v2349, 4
      %v2708 = vpop.permute.xlu0 %2707
      %2709 = vrot.lane.b32.xlu0 %v2350, 4
      %v2710 = vpop.permute.xlu0 %2709
      %2711 = vrot.lane.b32.xlu0 %v2351, 4
      %v2712 = vpop.permute.xlu0 %2711
      %2713 = vrot.lane.b32.xlu0 %v2352, 4
      %v2714 = vpop.permute.xlu0 %2713
      %2715 = vrot.lane.b32.xlu0 %v2353, 4
      %v2716 = vpop.permute.xlu0 %2715
      %2717 = vrot.lane.b32.xlu0 %v2354, 4
      %v2718 = vpop.permute.xlu0 %2717
      %2719 = vrot.lane.b32.xlu0 %v2355, 4
      %v2720 = vpop.permute.xlu0 %2719
      %2721 = vrot.lane.b32.xlu0 %v2356, 4
      %v2722 = vpop.permute.xlu0 %2721
      %2723 = vrot.lane.b32.xlu0 %v2357, 4
      %v2724 = vpop.permute.xlu0 %2723
      %2725 = vrot.lane.b32.xlu0 %v2358, 4
      %v2726 = vpop.permute.xlu0 %2725
      %2727 = vrot.lane.b32.xlu0 %v2359, 4
      %v2728 = vpop.permute.xlu0 %2727
      %2729 = vrot.lane.b32.xlu0 %v2360, 4
      %v2730 = vpop.permute.xlu0 %2729
      %2731 = vrot.lane.b32.xlu0 %v2361, 4
      %v2732 = vpop.permute.xlu0 %2731
      %2733 = vrot.lane.b32.xlu0 %v2362, 4
      %v2734 = vpop.permute.xlu0 %2733
      %2735 = vrot.lane.b32.xlu0 %v2363, 4
      %v2736 = vpop.permute.xlu0 %2735
      %2737 = vrot.lane.b32.xlu0 %v2364, 4
      %v2738 = vpop.permute.xlu0 %2737
      %2739 = vrot.lane.b32.xlu0 %v2365, 4
      %v2740 = vpop.permute.xlu0 %2739
      %2741 = vrot.lane.b32.xlu0 %v2366, 4
      %v2742 = vpop.permute.xlu0 %2741
      %2743 = vrot.lane.b32.xlu0 %v2367, 4
      %v2744 = vpop.permute.xlu0 %2743
      %2745 = vrot.lane.b32.xlu0 %v2368, 4
      %v2746 = vpop.permute.xlu0 %2745
      %2747 = vrot.lane.b32.xlu0 %v2369, 4
      %v2748 = vpop.permute.xlu0 %2747
      %2749 = vrot.lane.b32.xlu0 %v2370, 4
      %v2750 = vpop.permute.xlu0 %2749
      %2751 = vrot.lane.b32.xlu0 %v2371, 4
      %v2752 = vpop.permute.xlu0 %2751
      %2753 = vrot.lane.b32.xlu0 %v2372, 4
      %v2754 = vpop.permute.xlu0 %2753
      %2755 = vrot.lane.b32.xlu0 %v2373, 4
      %v2756 = vpop.permute.xlu0 %2755
      %2757 = vrot.lane.b32.xlu0 %v2374, 4
      %v2758 = vpop.permute.xlu0 %2757
      %2759 = vrot.lane.b32.xlu0 %v2375, 4
      %v2760 = vpop.permute.xlu0 %2759
      %2793 = vst.msk [vmem:[#allocation2] sm:$0xf] %vm691, %v2698
      %2794 = vst.msk [vmem:[#allocation2 + $0x4] sm:$0xf] %vm691, %v2700
      %2795 = vst.msk [vmem:[#allocation2 + $0x8] sm:$0xf] %vm691, %v2702
      %2796 = vst.msk [vmem:[#allocation2 + $0xc] sm:$0xf] %vm691, %v2704
      %2797 = vst.msk [vmem:[#allocation2 + $0x10] sm:$0xf] %vm691, %v2706
      %2798 = vst.msk [vmem:[#allocation2 + $0x14] sm:$0xf] %vm691, %v2708
      %2799 = vst.msk [vmem:[#allocation2 + $0x18] sm:$0xf] %vm691, %v2710
      %2800 = vst.msk [vmem:[#allocation2 + $0x1c] sm:$0xf] %vm691, %v2712
      %2801 = vst.msk [vmem:[#allocation2 + $0x20] sm:$0xf] %vm691, %v2714
      %2802 = vst.msk [vmem:[#allocation2 + $0x24] sm:$0xf] %vm691, %v2716
      %2803 = vst.msk [vmem:[#allocation2 + $0x28] sm:$0xf] %vm691, %v2718
      %2804 = vst.msk [vmem:[#allocation2 + $0x2c] sm:$0xf] %vm691, %v2720
      %2805 = vst.msk [vmem:[#allocation2 + $0x30] sm:$0xf] %vm691, %v2722
      %2806 = vst.msk [vmem:[#allocation2 + $0x34] sm:$0xf] %vm691, %v2724
      %2807 = vst.msk [vmem:[#allocation2 + $0x38] sm:$0xf] %vm691, %v2726
      %2808 = vst.msk [vmem:[#allocation2 + $0x3c] sm:$0xf] %vm691, %v2728
      %2809 = vst.msk [vmem:[#allocation2 + $0x40] sm:$0xf] %vm691, %v2730
      %2810 = vst.msk [vmem:[#allocation2 + $0x44] sm:$0xf] %vm691, %v2732
      %2811 = vst.msk [vmem:[#allocation2 + $0x48] sm:$0xf] %vm691, %v2734
      %2812 = vst.msk [vmem:[#allocation2 + $0x4c] sm:$0xf] %vm691, %v2736
      %2813 = vst.msk [vmem:[#allocation2 + $0x50] sm:$0xf] %vm691, %v2738
      %2814 = vst.msk [vmem:[#allocation2 + $0x54] sm:$0xf] %vm691, %v2740
      %2815 = vst.msk [vmem:[#allocation2 + $0x58] sm:$0xf] %vm691, %v2742
      %2816 = vst.msk [vmem:[#allocation2 + $0x5c] sm:$0xf] %vm691, %v2744
      %2817 = vst.msk [vmem:[#allocation2 + $0x60] sm:$0xf] %vm691, %v2746
      %2818 = vst.msk [vmem:[#allocation2 + $0x64] sm:$0xf] %vm691, %v2748
      %2819 = vst.msk [vmem:[#allocation2 + $0x68] sm:$0xf] %vm691, %v2750
      %2820 = vst.msk [vmem:[#allocation2 + $0x6c] sm:$0xf] %vm691, %v2752
      %2821 = vst.msk [vmem:[#allocation2 + $0x70] sm:$0xf] %vm691, %v2754
      %2822 = vst.msk [vmem:[#allocation2 + $0x74] sm:$0xf] %vm691, %v2756
      %2823 = vst.msk [vmem:[#allocation2 + $0x78] sm:$0xf] %vm691, %v2758
      %2824 = vst.msk [vmem:[#allocation2 + $0x7c] sm:$0xf] %vm691, %v2760
      %2857 = vrot.lane.b32.xlu0 %v2473, 8
      %v2858 = vpop.permute.xlu0 %2857
      %2859 = vrot.lane.b32.xlu0 %v2474, 8
      %v2860 = vpop.permute.xlu0 %2859
      %2861 = vrot.lane.b32.xlu0 %v2475, 8
      %v2862 = vpop.permute.xlu0 %2861
      %2863 = vrot.lane.b32.xlu0 %v2476, 8
      %v2864 = vpop.permute.xlu0 %2863
      %2865 = vrot.lane.b32.xlu0 %v2477, 8
      %v2866 = vpop.permute.xlu0 %2865
      %2867 = vrot.lane.b32.xlu0 %v2478, 8
      %v2868 = vpop.permute.xlu0 %2867
      %2869 = vrot.lane.b32.xlu0 %v2479, 8
      %v2870 = vpop.permute.xlu0 %2869
      %2871 = vrot.lane.b32.xlu0 %v2480, 8
      %v2872 = vpop.permute.xlu0 %2871
      %2873 = vrot.lane.b32.xlu0 %v2481, 8
      %v2874 = vpop.permute.xlu0 %2873
      %2875 = vrot.lane.b32.xlu0 %v2482, 8
      %v2876 = vpop.permute.xlu0 %2875
      %2877 = vrot.lane.b32.xlu0 %v2483, 8
      %v2878 = vpop.permute.xlu0 %2877
      %2879 = vrot.lane.b32.xlu0 %v2484, 8
      %v2880 = vpop.permute.xlu0 %2879
      %2881 = vrot.lane.b32.xlu0 %v2485, 8
      %v2882 = vpop.permute.xlu0 %2881
      %2883 = vrot.lane.b32.xlu0 %v2486, 8
      %v2884 = vpop.permute.xlu0 %2883
      %2885 = vrot.lane.b32.xlu0 %v2487, 8
      %v2886 = vpop.permute.xlu0 %2885
      %2887 = vrot.lane.b32.xlu0 %v2488, 8
      %v2888 = vpop.permute.xlu0 %2887
      %2889 = vrot.lane.b32.xlu0 %v2489, 8
      %v2890 = vpop.permute.xlu0 %2889
      %2891 = vrot.lane.b32.xlu0 %v2490, 8
      %v2892 = vpop.permute.xlu0 %2891
      %2893 = vrot.lane.b32.xlu0 %v2491, 8
      %v2894 = vpop.permute.xlu0 %2893
      %2895 = vrot.lane.b32.xlu0 %v2492, 8
      %v2896 = vpop.permute.xlu0 %2895
      %2897 = vrot.lane.b32.xlu0 %v2493, 8
      %v2898 = vpop.permute.xlu0 %2897
      %2899 = vrot.lane.b32.xlu0 %v2494, 8
      %v2900 = vpop.permute.xlu0 %2899
      %2901 = vrot.lane.b32.xlu0 %v2495, 8
      %v2902 = vpop.permute.xlu0 %2901
      %2903 = vrot.lane.b32.xlu0 %v2496, 8
      %v2904 = vpop.permute.xlu0 %2903
      %2905 = vrot.lane.b32.xlu0 %v2497, 8
      %v2906 = vpop.permute.xlu0 %2905
      %2907 = vrot.lane.b32.xlu0 %v2498, 8
      %v2908 = vpop.permute.xlu0 %2907
      %2909 = vrot.lane.b32.xlu0 %v2499, 8
      %v2910 = vpop.permute.xlu0 %2909
      %2911 = vrot.lane.b32.xlu0 %v2500, 8
      %v2912 = vpop.permute.xlu0 %2911
      %2913 = vrot.lane.b32.xlu0 %v2501, 8
      %v2914 = vpop.permute.xlu0 %2913
      %2915 = vrot.lane.b32.xlu0 %v2502, 8
      %v2916 = vpop.permute.xlu0 %2915
      %2917 = vrot.lane.b32.xlu0 %v2503, 8
      %v2918 = vpop.permute.xlu0 %2917
      %2919 = vrot.lane.b32.xlu0 %v2504, 8
      %v2920 = vpop.permute.xlu0 %2919
      %2953 = vst.msk [vmem:[#allocation2] sm:$0xf] %vm852, %v2858
      %2954 = vst.msk [vmem:[#allocation2 + $0x4] sm:$0xf] %vm852, %v2860
      %2955 = vst.msk [vmem:[#allocation2 + $0x8] sm:$0xf] %vm852, %v2862
      %2956 = vst.msk [vmem:[#allocation2 + $0xc] sm:$0xf] %vm852, %v2864
      %2957 = vst.msk [vmem:[#allocation2 + $0x10] sm:$0xf] %vm852, %v2866
      %2958 = vst.msk [vmem:[#allocation2 + $0x14] sm:$0xf] %vm852, %v2868
      %2959 = vst.msk [vmem:[#allocation2 + $0x18] sm:$0xf] %vm852, %v2870
      %2960 = vst.msk [vmem:[#allocation2 + $0x1c] sm:$0xf] %vm852, %v2872
      %2961 = vst.msk [vmem:[#allocation2 + $0x20] sm:$0xf] %vm852, %v2874
      %2962 = vst.msk [vmem:[#allocation2 + $0x24] sm:$0xf] %vm852, %v2876
      %2963 = vst.msk [vmem:[#allocation2 + $0x28] sm:$0xf] %vm852, %v2878
      %2964 = vst.msk [vmem:[#allocation2 + $0x2c] sm:$0xf] %vm852, %v2880
      %2965 = vst.msk [vmem:[#allocation2 + $0x30] sm:$0xf] %vm852, %v2882
      %2966 = vst.msk [vmem:[#allocation2 + $0x34] sm:$0xf] %vm852, %v2884
      %2967 = vst.msk [vmem:[#allocation2 + $0x38] sm:$0xf] %vm852, %v2886
      %2968 = vst.msk [vmem:[#allocation2 + $0x3c] sm:$0xf] %vm852, %v2888
      %2969 = vst.msk [vmem:[#allocation2 + $0x40] sm:$0xf] %vm852, %v2890
      %2970 = vst.msk [vmem:[#allocation2 + $0x44] sm:$0xf] %vm852, %v2892
      %2971 = vst.msk [vmem:[#allocation2 + $0x48] sm:$0xf] %vm852, %v2894
      %2972 = vst.msk [vmem:[#allocation2 + $0x4c] sm:$0xf] %vm852, %v2896
      %2973 = vst.msk [vmem:[#allocation2 + $0x50] sm:$0xf] %vm852, %v2898
      %2974 = vst.msk [vmem:[#allocation2 + $0x54] sm:$0xf] %vm852, %v2900
      %2975 = vst.msk [vmem:[#allocation2 + $0x58] sm:$0xf] %vm852, %v2902
      %2976 = vst.msk [vmem:[#allocation2 + $0x5c] sm:$0xf] %vm852, %v2904
      %2977 = vst.msk [vmem:[#allocation2 + $0x60] sm:$0xf] %vm852, %v2906
      %2978 = vst.msk [vmem:[#allocation2 + $0x64] sm:$0xf] %vm852, %v2908
      %2979 = vst.msk [vmem:[#allocation2 + $0x68] sm:$0xf] %vm852, %v2910
      %2980 = vst.msk [vmem:[#allocation2 + $0x6c] sm:$0xf] %vm852, %v2912
      %2981 = vst.msk [vmem:[#allocation2 + $0x70] sm:$0xf] %vm852, %v2914
      %2982 = vst.msk [vmem:[#allocation2 + $0x74] sm:$0xf] %vm852, %v2916
      %2983 = vst.msk [vmem:[#allocation2 + $0x78] sm:$0xf] %vm852, %v2918
      %2984 = vst.msk [vmem:[#allocation2 + $0x7c] sm:$0xf] %vm852, %v2920
      %3017 = vrot.lane.b32.xlu0 %v2537, 12
      %v3018 = vpop.permute.xlu0 %3017
      %3019 = vrot.lane.b32.xlu0 %v2538, 12
      %v3020 = vpop.permute.xlu0 %3019
      %3021 = vrot.lane.b32.xlu0 %v2539, 12
      %v3022 = vpop.permute.xlu0 %3021
      %3023 = vrot.lane.b32.xlu0 %v2540, 12
      %v3024 = vpop.permute.xlu0 %3023
      %3025 = vrot.lane.b32.xlu0 %v2541, 12
      %v3026 = vpop.permute.xlu0 %3025
      %3027 = vrot.lane.b32.xlu0 %v2542, 12
      %v3028 = vpop.permute.xlu0 %3027
      %3029 = vrot.lane.b32.xlu0 %v2543, 12
      %v3030 = vpop.permute.xlu0 %3029
      %3031 = vrot.lane.b32.xlu0 %v2544, 12
      %v3032 = vpop.permute.xlu0 %3031
      %3033 = vrot.lane.b32.xlu0 %v2545, 12
      %v3034 = vpop.permute.xlu0 %3033
      %3035 = vrot.lane.b32.xlu0 %v2546, 12
      %v3036 = vpop.permute.xlu0 %3035
      %3037 = vrot.lane.b32.xlu0 %v2547, 12
      %v3038 = vpop.permute.xlu0 %3037
      %3039 = vrot.lane.b32.xlu0 %v2548, 12
      %v3040 = vpop.permute.xlu0 %3039
      %3041 = vrot.lane.b32.xlu0 %v2549, 12
      %v3042 = vpop.permute.xlu0 %3041
      %3043 = vrot.lane.b32.xlu0 %v2550, 12
      %v3044 = vpop.permute.xlu0 %3043
      %3045 = vrot.lane.b32.xlu0 %v2551, 12
      %v3046 = vpop.permute.xlu0 %3045
      %3047 = vrot.lane.b32.xlu0 %v2552, 12
      %v3048 = vpop.permute.xlu0 %3047
      %3049 = vrot.lane.b32.xlu0 %v2553, 12
      %v3050 = vpop.permute.xlu0 %3049
      %3051 = vrot.lane.b32.xlu0 %v2554, 12
      %v3052 = vpop.permute.xlu0 %3051
      %3053 = vrot.lane.b32.xlu0 %v2555, 12
      %v3054 = vpop.permute.xlu0 %3053
      %3055 = vrot.lane.b32.xlu0 %v2556, 12
      %v3056 = vpop.permute.xlu0 %3055
      %3057 = vrot.lane.b32.xlu0 %v2557, 12
      %v3058 = vpop.permute.xlu0 %3057
      %3059 = vrot.lane.b32.xlu0 %v2558, 12
      %v3060 = vpop.permute.xlu0 %3059
      %3061 = vrot.lane.b32.xlu0 %v2559, 12
      %v3062 = vpop.permute.xlu0 %3061
      %3063 = vrot.lane.b32.xlu0 %v2560, 12
      %v3064 = vpop.permute.xlu0 %3063
      %3065 = vrot.lane.b32.xlu0 %v2561, 12
      %v3066 = vpop.permute.xlu0 %3065
      %3067 = vrot.lane.b32.xlu0 %v2562, 12
      %v3068 = vpop.permute.xlu0 %3067
      %3069 = vrot.lane.b32.xlu0 %v2563, 12
      %v3070 = vpop.permute.xlu0 %3069
      %3071 = vrot.lane.b32.xlu0 %v2564, 12
      %v3072 = vpop.permute.xlu0 %3071
      %3073 = vrot.lane.b32.xlu0 %v2565, 12
      %v3074 = vpop.permute.xlu0 %3073
      %3075 = vrot.lane.b32.xlu0 %v2566, 12
      %v3076 = vpop.permute.xlu0 %3075
      %3077 = vrot.lane.b32.xlu0 %v2567, 12
      %v3078 = vpop.permute.xlu0 %3077
      %3079 = vrot.lane.b32.xlu0 %v2568, 12
      %v3080 = vpop.permute.xlu0 %3079
      %3113 = vst.msk [vmem:[#allocation2] sm:$0xf] %vm1013, %v3018
      %3114 = vst.msk [vmem:[#allocation2 + $0x4] sm:$0xf] %vm1013, %v3020
      %3115 = vst.msk [vmem:[#allocation2 + $0x8] sm:$0xf] %vm1013, %v3022
      %3116 = vst.msk [vmem:[#allocation2 + $0xc] sm:$0xf] %vm1013, %v3024
      %3117 = vst.msk [vmem:[#allocation2 + $0x10] sm:$0xf] %vm1013, %v3026
      %3118 = vst.msk [vmem:[#allocation2 + $0x14] sm:$0xf] %vm1013, %v3028
      %3119 = vst.msk [vmem:[#allocation2 + $0x18] sm:$0xf] %vm1013, %v3030
      %3120 = vst.msk [vmem:[#allocation2 + $0x1c] sm:$0xf] %vm1013, %v3032
      %3121 = vst.msk [vmem:[#allocation2 + $0x20] sm:$0xf] %vm1013, %v3034
      %3122 = vst.msk [vmem:[#allocation2 + $0x24] sm:$0xf] %vm1013, %v3036
      %3123 = vst.msk [vmem:[#allocation2 + $0x28] sm:$0xf] %vm1013, %v3038
      %3124 = vst.msk [vmem:[#allocation2 + $0x2c] sm:$0xf] %vm1013, %v3040
      %3125 = vst.msk [vmem:[#allocation2 + $0x30] sm:$0xf] %vm1013, %v3042
      %3126 = vst.msk [vmem:[#allocation2 + $0x34] sm:$0xf] %vm1013, %v3044
      %3127 = vst.msk [vmem:[#allocation2 + $0x38] sm:$0xf] %vm1013, %v3046
      %3128 = vst.msk [vmem:[#allocation2 + $0x3c] sm:$0xf] %vm1013, %v3048
      %3129 = vst.msk [vmem:[#allocation2 + $0x40] sm:$0xf] %vm1013, %v3050
      %3130 = vst.msk [vmem:[#allocation2 + $0x44] sm:$0xf] %vm1013, %v3052
      %3131 = vst.msk [vmem:[#allocation2 + $0x48] sm:$0xf] %vm1013, %v3054
      %3132 = vst.msk [vmem:[#allocation2 + $0x4c] sm:$0xf] %vm1013, %v3056
      %3133 = vst.msk [vmem:[#allocation2 + $0x50] sm:$0xf] %vm1013, %v3058
      %3134 = vst.msk [vmem:[#allocation2 + $0x54] sm:$0xf] %vm1013, %v3060
      %3135 = vst.msk [vmem:[#allocation2 + $0x58] sm:$0xf] %vm1013, %v3062
      %3136 = vst.msk [vmem:[#allocation2 + $0x5c] sm:$0xf] %vm1013, %v3064
      %3137 = vst.msk [vmem:[#allocation2 + $0x60] sm:$0xf] %vm1013, %v3066
      %3138 = vst.msk [vmem:[#allocation2 + $0x64] sm:$0xf] %vm1013, %v3068
      %3139 = vst.msk [vmem:[#allocation2 + $0x68] sm:$0xf] %vm1013, %v3070
      %3140 = vst.msk [vmem:[#allocation2 + $0x6c] sm:$0xf] %vm1013, %v3072
      %3141 = vst.msk [vmem:[#allocation2 + $0x70] sm:$0xf] %vm1013, %v3074
      %3142 = vst.msk [vmem:[#allocation2 + $0x74] sm:$0xf] %vm1013, %v3076
      %3143 = vst.msk [vmem:[#allocation2 + $0x78] sm:$0xf] %vm1013, %v3078
      %3144 = vst.msk [vmem:[#allocation2 + $0x7c] sm:$0xf] %vm1013, %v3080
      %v3145 = vld [vmem:[#allocation2] sm:$0xf]
      %v3146 = vld [vmem:[#allocation2 + $0x4] sm:$0xf]
      %v3147 = vld [vmem:[#allocation2 + $0x8] sm:$0xf]
      %v3148 = vld [vmem:[#allocation2 + $0xc] sm:$0xf]
      %v3149 = vld [vmem:[#allocation2 + $0x10] sm:$0xf]
      %v3150 = vld [vmem:[#allocation2 + $0x14] sm:$0xf]
      %v3151 = vld [vmem:[#allocation2 + $0x18] sm:$0xf]
      %v3152 = vld [vmem:[#allocation2 + $0x1c] sm:$0xf]
      %v3153 = vld [vmem:[#allocation2 + $0x20] sm:$0xf]
      %v3154 = vld [vmem:[#allocation2 + $0x24] sm:$0xf]
      %v3155 = vld [vmem:[#allocation2 + $0x28] sm:$0xf]
      %v3156 = vld [vmem:[#allocation2 + $0x2c] sm:$0xf]
      %v3157 = vld [vmem:[#allocation2 + $0x30] sm:$0xf]
      %v3158 = vld [vmem:[#allocation2 + $0x34] sm:$0xf]
      %v3159 = vld [vmem:[#allocation2 + $0x38] sm:$0xf]
      %v3160 = vld [vmem:[#allocation2 + $0x3c] sm:$0xf]
      %v3161 = vld [vmem:[#allocation2 + $0x40] sm:$0xf]
      %v3162 = vld [vmem:[#allocation2 + $0x44] sm:$0xf]
      %v3163 = vld [vmem:[#allocation2 + $0x48] sm:$0xf]
      %v3164 = vld [vmem:[#allocation2 + $0x4c] sm:$0xf]
      %v3165 = vld [vmem:[#allocation2 + $0x50] sm:$0xf]
      %v3166 = vld [vmem:[#allocation2 + $0x54] sm:$0xf]
      %v3167 = vld [vmem:[#allocation2 + $0x58] sm:$0xf]
      %v3168 = vld [vmem:[#allocation2 + $0x5c] sm:$0xf]
      %v3169 = vld [vmem:[#allocation2 + $0x60] sm:$0xf]
      %v3170 = vld [vmem:[#allocation2 + $0x64] sm:$0xf]
      %v3171 = vld [vmem:[#allocation2 + $0x68] sm:$0xf]
      %v3172 = vld [vmem:[#allocation2 + $0x6c] sm:$0xf]
      %v3173 = vld [vmem:[#allocation2 + $0x70] sm:$0xf]
      %v3174 = vld [vmem:[#allocation2 + $0x74] sm:$0xf]
      %v3175 = vld [vmem:[#allocation2 + $0x78] sm:$0xf]
      %v3176 = vld [vmem:[#allocation2 + $0x7c] sm:$0xf]
      %s3177 = scalar_lea.vmem %s1, 16
      %v3178 = vld [vmem:[%s3177] sm:$0xf]
      %v3179 = vld [vmem:[%s3177 + $0x4] sm:$0xf]
      %v3212 = vunpack.c.l.b16 %v3145
      %v3213 = vunpack.c.l.b16 %v3146
      %v3214 = vunpack.c.l.b16 %v3147
      %v3215 = vunpack.c.l.b16 %v3148
      %v3216 = vunpack.c.l.b16 %v3149
      %v3217 = vunpack.c.l.b16 %v3150
      %v3218 = vunpack.c.l.b16 %v3151
      %v3219 = vunpack.c.l.b16 %v3152
      %v3220 = vunpack.c.l.b16 %v3153
      %v3221 = vunpack.c.l.b16 %v3154
      %v3222 = vunpack.c.l.b16 %v3155
      %v3223 = vunpack.c.l.b16 %v3156
      %v3224 = vunpack.c.l.b16 %v3157
      %v3225 = vunpack.c.l.b16 %v3158
      %v3226 = vunpack.c.l.b16 %v3159
      %v3227 = vunpack.c.l.b16 %v3160
      %v3228 = vunpack.c.l.b16 %v3161
      %v3229 = vunpack.c.l.b16 %v3162
      %v3230 = vunpack.c.l.b16 %v3163
      %v3231 = vunpack.c.l.b16 %v3164
      %v3232 = vunpack.c.l.b16 %v3165
      %v3233 = vunpack.c.l.b16 %v3166
      %v3234 = vunpack.c.l.b16 %v3167
      %v3235 = vunpack.c.l.b16 %v3168
      %v3236 = vunpack.c.l.b16 %v3169
      %v3237 = vunpack.c.l.b16 %v3170
      %v3238 = vunpack.c.l.b16 %v3171
      %v3239 = vunpack.c.l.b16 %v3172
      %v3240 = vunpack.c.l.b16 %v3173
      %v3241 = vunpack.c.l.b16 %v3174
      %v3242 = vunpack.c.l.b16 %v3175
      %v3243 = vunpack.c.l.b16 %v3176
      %v3244 = vpack.c.b16 %v3213, %v3212
      %v3245 = vpack.c.b16 %v3215, %v3214
      %v3246 = vpack.c.b16 %v3217, %v3216
      %v3247 = vpack.c.b16 %v3219, %v3218
      %v3248 = vpack.c.b16 %v3221, %v3220
      %v3249 = vpack.c.b16 %v3223, %v3222
      %v3250 = vpack.c.b16 %v3225, %v3224
      %v3251 = vpack.c.b16 %v3227, %v3226
      %v3252 = vpack.c.b16 %v3229, %v3228
      %v3253 = vpack.c.b16 %v3231, %v3230
      %v3254 = vpack.c.b16 %v3233, %v3232
      %v3255 = vpack.c.b16 %v3235, %v3234
      %v3256 = vpack.c.b16 %v3237, %v3236
      %v3257 = vpack.c.b16 %v3239, %v3238
      %v3258 = vpack.c.b16 %v3241, %v3240
      %v3259 = vpack.c.b16 %v3243, %v3242
      %v3262 = vunpack.c.l.b16 %v3178
      %v3263 = vunpack.c.l.b16 %v3179
      %v3264 = vpack.c.b16 %v3263, %v3262
      %v3267 = vsel %vm1166, %v3244, 0
      %v3270 = vsel %vm1166, %v3245, 0
      %v3273 = vsel %vm1166, %v3246, 0
      %v3276 = vsel %vm1166, %v3247, 0
      %v3279 = vsel %vm1166, %v3248, 0
      %v3282 = vsel %vm1166, %v3249, 0
      %v3285 = vsel %vm1166, %v3250, 0
      %v3288 = vsel %vm1166, %v3251, 0
      %v3291 = vsel %vm1166, %v3252, 0
      %v3294 = vsel %vm1166, %v3253, 0
      %v3297 = vsel %vm1166, %v3254, 0
      %v3300 = vsel %vm1166, %v3255, 0
      %v3303 = vsel %vm1166, %v3256, 0
      %v3306 = vsel %vm1166, %v3257, 0
      %v3309 = vsel %vm1166, %v3258, 0
      %v3312 = vsel %vm1166, %v3259, 0
      %3314 = vmatpush.bf16.msra.mxu0 0
      %3315 = vmatpush.bf16.msra.mxu0 0
      %3316 = vmatpush.bf16.msra.mxu0 0
      %3317 = vmatpush.bf16.msra.mxu0 0
      %3318 = vmatpush.bf16.msra.mxu0 0
      %3319 = vmatpush.bf16.msra.mxu0 0
      %3320 = vmatpush.bf16.msra.mxu0 0
      %3321 = vmatpush.bf16.msra.mxu0 %v3264
      %3322 = vmatmul.bf16.gmra.mxu0 %v3267
      %v3323 = vpop.f32.mrf.mxu0
      %v3324 = vadd.f32 0.0, %v3323
      %v3325 = vpop.f32.mrf.mxu0
      %v3326 = vadd.f32 0.0, %v3325
      %3327 = vmatmul.bf16.gmra.mxu0 %v3270
      %v3328 = vpop.f32.mrf.mxu0
      %v3329 = vadd.f32 0.0, %v3328
      %v3330 = vpop.f32.mrf.mxu0
      %v3331 = vadd.f32 0.0, %v3330
      %3332 = vmatmul.bf16.gmra.mxu0 %v3273
      %v3333 = vpop.f32.mrf.mxu0
      %v3334 = vadd.f32 0.0, %v3333
      %v3335 = vpop.f32.mrf.mxu0
      %v3336 = vadd.f32 0.0, %v3335
      %3337 = vmatmul.bf16.gmra.mxu0 %v3276
      %v3338 = vpop.f32.mrf.mxu0
      %v3339 = vadd.f32 0.0, %v3338
      %v3340 = vpop.f32.mrf.mxu0
      %v3341 = vadd.f32 0.0, %v3340
      %3342 = vmatmul.bf16.gmra.mxu0 %v3279
      %v3343 = vpop.f32.mrf.mxu0
      %v3344 = vadd.f32 0.0, %v3343
      %v3345 = vpop.f32.mrf.mxu0
      %v3346 = vadd.f32 0.0, %v3345
      %3347 = vmatmul.bf16.gmra.mxu0 %v3282
      %v3348 = vpop.f32.mrf.mxu0
      %v3349 = vadd.f32 0.0, %v3348
      %v3350 = vpop.f32.mrf.mxu0
      %v3351 = vadd.f32 0.0, %v3350
      %3352 = vmatmul.bf16.gmra.mxu0 %v3285
      %v3353 = vpop.f32.mrf.mxu0
      %v3354 = vadd.f32 0.0, %v3353
      %v3355 = vpop.f32.mrf.mxu0
      %v3356 = vadd.f32 0.0, %v3355
      %3357 = vmatmul.bf16.gmra.mxu0 %v3288
      %v3358 = vpop.f32.mrf.mxu0
      %v3359 = vadd.f32 0.0, %v3358
      %v3360 = vpop.f32.mrf.mxu0
      %v3361 = vadd.f32 0.0, %v3360
      %3362 = vmatmul.bf16.gmra.mxu0 %v3291
      %v3363 = vpop.f32.mrf.mxu0
      %v3364 = vadd.f32 0.0, %v3363
      %v3365 = vpop.f32.mrf.mxu0
      %v3366 = vadd.f32 0.0, %v3365
      %3367 = vmatmul.bf16.gmra.mxu0 %v3294
      %v3368 = vpop.f32.mrf.mxu0
      %v3369 = vadd.f32 0.0, %v3368
      %v3370 = vpop.f32.mrf.mxu0
      %v3371 = vadd.f32 0.0, %v3370
      %3372 = vmatmul.bf16.gmra.mxu0 %v3297
      %v3373 = vpop.f32.mrf.mxu0
      %v3374 = vadd.f32 0.0, %v3373
      %v3375 = vpop.f32.mrf.mxu0
      %v3376 = vadd.f32 0.0, %v3375
      %3377 = vmatmul.bf16.gmra.mxu0 %v3300
      %v3378 = vpop.f32.mrf.mxu0
      %v3379 = vadd.f32 0.0, %v3378
      %v3380 = vpop.f32.mrf.mxu0
      %v3381 = vadd.f32 0.0, %v3380
      %3382 = vmatmul.bf16.gmra.mxu0 %v3303
      %v3383 = vpop.f32.mrf.mxu0
      %v3384 = vadd.f32 0.0, %v3383
      %v3385 = vpop.f32.mrf.mxu0
      %v3386 = vadd.f32 0.0, %v3385
      %3387 = vmatmul.bf16.gmra.mxu0 %v3306
      %v3388 = vpop.f32.mrf.mxu0
      %v3389 = vadd.f32 0.0, %v3388
      %v3390 = vpop.f32.mrf.mxu0
      %v3391 = vadd.f32 0.0, %v3390
      %3392 = vmatmul.bf16.gmra.mxu0 %v3309
      %v3393 = vpop.f32.mrf.mxu0
      %v3394 = vadd.f32 0.0, %v3393
      %v3395 = vpop.f32.mrf.mxu0
      %v3396 = vadd.f32 0.0, %v3395
      %3397 = vmatmul.bf16.gmra.mxu0 %v3312
      %v3398 = vpop.f32.mrf.mxu0
      %v3399 = vadd.f32 0.0, %v3398
      %v3400 = vpop.f32.mrf.mxu0
      %v3401 = vadd.f32 0.0, %v3400
      %3402 = vdwg.mxu0
      %s3403 = scalar_lea.vmem %s143, 512
      %3404 = vst.msk [vmem:[%s3403] sm:$0xff] %vm1304, %v3324
      %3405 = vst.msk [vmem:[%s3403 + $0x8] sm:$0xff] %vm1304, %v3326
      %3406 = vst.msk [vmem:[%s3403 + $0x10] sm:$0xff] %vm1304, %v3329
      %3407 = vst.msk [vmem:[%s3403 + $0x18] sm:$0xff] %vm1304, %v3331
      %3408 = vst.msk [vmem:[%s3403 + $0x20] sm:$0xff] %vm1304, %v3334
      %3409 = vst.msk [vmem:[%s3403 + $0x28] sm:$0xff] %vm1304, %v3336
      %3410 = vst.msk [vmem:[%s3403 + $0x30] sm:$0xff] %vm1304, %v3339
      %3411 = vst.msk [vmem:[%s3403 + $0x38] sm:$0xff] %vm1304, %v3341
      %3412 = vst.msk [vmem:[%s3403 + $0x40] sm:$0xff] %vm1304, %v3344
      %3413 = vst.msk [vmem:[%s3403 + $0x48] sm:$0xff] %vm1304, %v3346
      %3414 = vst.msk [vmem:[%s3403 + $0x50] sm:$0xff] %vm1304, %v3349
      %3415 = vst.msk [vmem:[%s3403 + $0x58] sm:$0xff] %vm1304, %v3351
      %3416 = vst.msk [vmem:[%s3403 + $0x60] sm:$0xff] %vm1304, %v3354
      %3417 = vst.msk [vmem:[%s3403 + $0x68] sm:$0xff] %vm1304, %v3356
      %3418 = vst.msk [vmem:[%s3403 + $0x70] sm:$0xff] %vm1304, %v3359
      %3419 = vst.msk [vmem:[%s3403 + $0x78] sm:$0xff] %vm1304, %v3361
      %3420 = vst.msk [vmem:[%s3403 + $0x80] sm:$0xff] %vm1304, %v3364
      %3421 = vst.msk [vmem:[%s3403 + $0x88] sm:$0xff] %vm1304, %v3366
      %3422 = vst.msk [vmem:[%s3403 + $0x90] sm:$0xff] %vm1304, %v3369
      %3423 = vst.msk [vmem:[%s3403 + $0x98] sm:$0xff] %vm1304, %v3371
      %3424 = vst.msk [vmem:[%s3403 + $0xa0] sm:$0xff] %vm1304, %v3374
      %3425 = vst.msk [vmem:[%s3403 + $0xa8] sm:$0xff] %vm1304, %v3376
      %3426 = vst.msk [vmem:[%s3403 + $0xb0] sm:$0xff] %vm1304, %v3379
      %3427 = vst.msk [vmem:[%s3403 + $0xb8] sm:$0xff] %vm1304, %v3381
      %3428 = vst.msk [vmem:[%s3403 + $0xc0] sm:$0xff] %vm1304, %v3384
      %3429 = vst.msk [vmem:[%s3403 + $0xc8] sm:$0xff] %vm1304, %v3386
      %3430 = vst.msk [vmem:[%s3403 + $0xd0] sm:$0xff] %vm1304, %v3389
      %3431 = vst.msk [vmem:[%s3403 + $0xd8] sm:$0xff] %vm1304, %v3391
      %3432 = vst.msk [vmem:[%s3403 + $0xe0] sm:$0xff] %vm1304, %v3394
      %3433 = vst.msk [vmem:[%s3403 + $0xe8] sm:$0xff] %vm1304, %v3396
      %3434 = vst.msk [vmem:[%s3403 + $0xf0] sm:$0xff] %vm1304, %v3399
      %3435 = vst.msk [vmem:[%s3403 + $0xf8] sm:$0xff] %vm1304, %v3401
      %v3436 = vsel %vm1304, %v3324, 0.0
      %v3437 = vsel %vm1304, %v3326, 0.0
      %v3438 = vadd.f32 %v3436, %v3437
      %v3439 = vsel %vm1304, %v3329, 0.0
      %v3440 = vadd.f32 %v3438, %v3439
      %v3441 = vsel %vm1304, %v3331, 0.0
      %v3442 = vadd.f32 %v3440, %v3441
      %v3443 = vsel %vm1304, %v3334, 0.0
      %v3444 = vadd.f32 %v3442, %v3443
      %v3445 = vsel %vm1304, %v3336, 0.0
      %v3446 = vadd.f32 %v3444, %v3445
      %v3447 = vsel %vm1304, %v3339, 0.0
      %v3448 = vadd.f32 %v3446, %v3447
      %v3449 = vsel %vm1304, %v3341, 0.0
      %v3450 = vadd.f32 %v3448, %v3449
      %v3451 = vsel %vm1304, %v3344, 0.0
      %v3452 = vadd.f32 %v3450, %v3451
      %v3453 = vsel %vm1304, %v3346, 0.0
      %v3454 = vadd.f32 %v3452, %v3453
      %v3455 = vsel %vm1304, %v3349, 0.0
      %v3456 = vadd.f32 %v3454, %v3455
      %v3457 = vsel %vm1304, %v3351, 0.0
      %v3458 = vadd.f32 %v3456, %v3457
      %v3459 = vsel %vm1304, %v3354, 0.0
      %v3460 = vadd.f32 %v3458, %v3459
      %v3461 = vsel %vm1304, %v3356, 0.0
      %v3462 = vadd.f32 %v3460, %v3461
      %v3463 = vsel %vm1304, %v3359, 0.0
      %v3464 = vadd.f32 %v3462, %v3463
      %v3465 = vsel %vm1304, %v3361, 0.0
      %v3466 = vadd.f32 %v3464, %v3465
      %v3467 = vsel %vm1304, %v3364, 0.0
      %v3468 = vadd.f32 %v3466, %v3467
      %v3469 = vsel %vm1304, %v3366, 0.0
      %v3470 = vadd.f32 %v3468, %v3469
      %v3471 = vsel %vm1304, %v3369, 0.0
      %v3472 = vadd.f32 %v3470, %v3471
      %v3473 = vsel %vm1304, %v3371, 0.0
      %v3474 = vadd.f32 %v3472, %v3473
      %v3475 = vsel %vm1304, %v3374, 0.0
      %v3476 = vadd.f32 %v3474, %v3475
      %v3477 = vsel %vm1304, %v3376, 0.0
      %v3478 = vadd.f32 %v3476, %v3477
      %v3479 = vsel %vm1304, %v3379, 0.0
      %v3480 = vadd.f32 %v3478, %v3479
      %v3481 = vsel %vm1304, %v3381, 0.0
      %v3482 = vadd.f32 %v3480, %v3481
      %v3483 = vsel %vm1304, %v3384, 0.0
      %v3484 = vadd.f32 %v3482, %v3483
      %v3485 = vsel %vm1304, %v3386, 0.0
      %v3486 = vadd.f32 %v3484, %v3485
      %v3487 = vsel %vm1304, %v3389, 0.0
      %v3488 = vadd.f32 %v3486, %v3487
      %v3489 = vsel %vm1304, %v3391, 0.0
      %v3490 = vadd.f32 %v3488, %v3489
      %v3491 = vsel %vm1304, %v3394, 0.0
      %v3492 = vadd.f32 %v3490, %v3491
      %v3493 = vsel %vm1304, %v3396, 0.0
      %v3494 = vadd.f32 %v3492, %v3493
      %v3495 = vsel %vm1304, %v3399, 0.0
      %v3496 = vadd.f32 %v3494, %v3495
      %v3497 = vsel %vm1304, %v3401, 0.0
      %v3498 = vadd.f32 %v3496, %v3497
      %v3499 = vrot.slane %v3498, 4
      %v3500 = vadd.f32 %v3498, %v3499
      %v3501 = vrot.slane %v3500, 2
      %v3502 = vadd.f32 %v3500, %v3501
      %v3503 = vrot.slane %v3502, 1
      %v3504 = vadd.f32 %v3502, %v3503
      %v3505 = vadd.f32 %v2247, %v3504
      %3506 = vst.msk [vmem:[#allocation2] sm:$0xf] %vm530, %v2344
      %3507 = vst.msk [vmem:[#allocation2 + $0x4] sm:$0xf] %vm530, %v2345
      %3508 = vst.msk [vmem:[#allocation2 + $0x8] sm:$0xf] %vm530, %v2346
      %3509 = vst.msk [vmem:[#allocation2 + $0xc] sm:$0xf] %vm530, %v2347
      %3510 = vst.msk [vmem:[#allocation2 + $0x10] sm:$0xf] %vm530, %v2348
      %3511 = vst.msk [vmem:[#allocation2 + $0x14] sm:$0xf] %vm530, %v2349
      %3512 = vst.msk [vmem:[#allocation2 + $0x18] sm:$0xf] %vm530, %v2350
      %3513 = vst.msk [vmem:[#allocation2 + $0x1c] sm:$0xf] %vm530, %v2351
      %3514 = vst.msk [vmem:[#allocation2 + $0x20] sm:$0xf] %vm530, %v2352
      %3515 = vst.msk [vmem:[#allocation2 + $0x24] sm:$0xf] %vm530, %v2353
      %3516 = vst.msk [vmem:[#allocation2 + $0x28] sm:$0xf] %vm530, %v2354
      %3517 = vst.msk [vmem:[#allocation2 + $0x2c] sm:$0xf] %vm530, %v2355
      %3518 = vst.msk [vmem:[#allocation2 + $0x30] sm:$0xf] %vm530, %v2356
      %3519 = vst.msk [vmem:[#allocation2 + $0x34] sm:$0xf] %vm530, %v2357
      %3520 = vst.msk [vmem:[#allocation2 + $0x38] sm:$0xf] %vm530, %v2358
      %3521 = vst.msk [vmem:[#allocation2 + $0x3c] sm:$0xf] %vm530, %v2359
      %3522 = vst.msk [vmem:[#allocation2 + $0x40] sm:$0xf] %vm530, %v2360
      %3523 = vst.msk [vmem:[#allocation2 + $0x44] sm:$0xf] %vm530, %v2361
      %3524 = vst.msk [vmem:[#allocation2 + $0x48] sm:$0xf] %vm530, %v2362
      %3525 = vst.msk [vmem:[#allocation2 + $0x4c] sm:$0xf] %vm530, %v2363
      %3526 = vst.msk [vmem:[#allocation2 + $0x50] sm:$0xf] %vm530, %v2364
      %3527 = vst.msk [vmem:[#allocation2 + $0x54] sm:$0xf] %vm530, %v2365
      %3528 = vst.msk [vmem:[#allocation2 + $0x58] sm:$0xf] %vm530, %v2366
      %3529 = vst.msk [vmem:[#allocation2 + $0x5c] sm:$0xf] %vm530, %v2367
      %3530 = vst.msk [vmem:[#allocation2 + $0x60] sm:$0xf] %vm530, %v2368
      %3531 = vst.msk [vmem:[#allocation2 + $0x64] sm:$0xf] %vm530, %v2369
      %3532 = vst.msk [vmem:[#allocation2 + $0x68] sm:$0xf] %vm530, %v2370
      %3533 = vst.msk [vmem:[#allocation2 + $0x6c] sm:$0xf] %vm530, %v2371
      %3534 = vst.msk [vmem:[#allocation2 + $0x70] sm:$0xf] %vm530, %v2372
      %3535 = vst.msk [vmem:[#allocation2 + $0x74] sm:$0xf] %vm530, %v2373
      %3536 = vst.msk [vmem:[#allocation2 + $0x78] sm:$0xf] %vm530, %v2374
      %3537 = vst.msk [vmem:[#allocation2 + $0x7c] sm:$0xf] %vm530, %v2375
      %3570 = vrot.lane.b32.xlu0 %v2408, 4
      %v3571 = vpop.permute.xlu0 %3570
      %3572 = vrot.lane.b32.xlu0 %v2409, 4
      %v3573 = vpop.permute.xlu0 %3572
      %3574 = vrot.lane.b32.xlu0 %v2410, 4
      %v3575 = vpop.permute.xlu0 %3574
      %3576 = vrot.lane.b32.xlu0 %v2411, 4
      %v3577 = vpop.permute.xlu0 %3576
      %3578 = vrot.lane.b32.xlu0 %v2412, 4
      %v3579 = vpop.permute.xlu0 %3578
      %3580 = vrot.lane.b32.xlu0 %v2413, 4
      %v3581 = vpop.permute.xlu0 %3580
      %3582 = vrot.lane.b32.xlu0 %v2414, 4
      %v3583 = vpop.permute.xlu0 %3582
      %3584 = vrot.lane.b32.xlu0 %v2415, 4
      %v3585 = vpop.permute.xlu0 %3584
      %3586 = vrot.lane.b32.xlu0 %v2416, 4
      %v3587 = vpop.permute.xlu0 %3586
      %3588 = vrot.lane.b32.xlu0 %v2417, 4
      %v3589 = vpop.permute.xlu0 %3588
      %3590 = vrot.lane.b32.xlu0 %v2418, 4
      %v3591 = vpop.permute.xlu0 %3590
      %3592 = vrot.lane.b32.xlu0 %v2419, 4
      %v3593 = vpop.permute.xlu0 %3592
      %3594 = vrot.lane.b32.xlu0 %v2420, 4
      %v3595 = vpop.permute.xlu0 %3594
      %3596 = vrot.lane.b32.xlu0 %v2421, 4
      %v3597 = vpop.permute.xlu0 %3596
      %3598 = vrot.lane.b32.xlu0 %v2422, 4
      %v3599 = vpop.permute.xlu0 %3598
      %3600 = vrot.lane.b32.xlu0 %v2423, 4
      %v3601 = vpop.permute.xlu0 %3600
      %3602 = vrot.lane.b32.xlu0 %v2424, 4
      %v3603 = vpop.permute.xlu0 %3602
      %3604 = vrot.lane.b32.xlu0 %v2425, 4
      %v3605 = vpop.permute.xlu0 %3604
      %3606 = vrot.lane.b32.xlu0 %v2426, 4
      %v3607 = vpop.permute.xlu0 %3606
      %3608 = vrot.lane.b32.xlu0 %v2427, 4
      %v3609 = vpop.permute.xlu0 %3608
      %3610 = vrot.lane.b32.xlu0 %v2428, 4
      %v3611 = vpop.permute.xlu0 %3610
      %3612 = vrot.lane.b32.xlu0 %v2429, 4
      %v3613 = vpop.permute.xlu0 %3612
      %3614 = vrot.lane.b32.xlu0 %v2430, 4
      %v3615 = vpop.permute.xlu0 %3614
      %3616 = vrot.lane.b32.xlu0 %v2431, 4
      %v3617 = vpop.permute.xlu0 %3616
      %3618 = vrot.lane.b32.xlu0 %v2432, 4
      %v3619 = vpop.permute.xlu0 %3618
      %3620 = vrot.lane.b32.xlu0 %v2433, 4
      %v3621 = vpop.permute.xlu0 %3620
      %3622 = vrot.lane.b32.xlu0 %v2434, 4
      %v3623 = vpop.permute.xlu0 %3622
      %3624 = vrot.lane.b32.xlu0 %v2435, 4
      %v3625 = vpop.permute.xlu0 %3624
      %3626 = vrot.lane.b32.xlu0 %v2436, 4
      %v3627 = vpop.permute.xlu0 %3626
      %3628 = vrot.lane.b32.xlu0 %v2437, 4
      %v3629 = vpop.permute.xlu0 %3628
      %3630 = vrot.lane.b32.xlu0 %v2438, 4
      %v3631 = vpop.permute.xlu0 %3630
      %3632 = vrot.lane.b32.xlu0 %v2439, 4
      %v3633 = vpop.permute.xlu0 %3632
      %3666 = vst.msk [vmem:[#allocation2] sm:$0xf] %vm691, %v3571
      %3667 = vst.msk [vmem:[#allocation2 + $0x4] sm:$0xf] %vm691, %v3573
      %3668 = vst.msk [vmem:[#allocation2 + $0x8] sm:$0xf] %vm691, %v3575
      %3669 = vst.msk [vmem:[#allocation2 + $0xc] sm:$0xf] %vm691, %v3577
      %3670 = vst.msk [vmem:[#allocation2 + $0x10] sm:$0xf] %vm691, %v3579
      %3671 = vst.msk [vmem:[#allocation2 + $0x14] sm:$0xf] %vm691, %v3581
      %3672 = vst.msk [vmem:[#allocation2 + $0x18] sm:$0xf] %vm691, %v3583
      %3673 = vst.msk [vmem:[#allocation2 + $0x1c] sm:$0xf] %vm691, %v3585
      %3674 = vst.msk [vmem:[#allocation2 + $0x20] sm:$0xf] %vm691, %v3587
      %3675 = vst.msk [vmem:[#allocation2 + $0x24] sm:$0xf] %vm691, %v3589
      %3676 = vst.msk [vmem:[#allocation2 + $0x28] sm:$0xf] %vm691, %v3591
      %3677 = vst.msk [vmem:[#allocation2 + $0x2c] sm:$0xf] %vm691, %v3593
      %3678 = vst.msk [vmem:[#allocation2 + $0x30] sm:$0xf] %vm691, %v3595
      %3679 = vst.msk [vmem:[#allocation2 + $0x34] sm:$0xf] %vm691, %v3597
      %3680 = vst.msk [vmem:[#allocation2 + $0x38] sm:$0xf] %vm691, %v3599
      %3681 = vst.msk [vmem:[#allocation2 + $0x3c] sm:$0xf] %vm691, %v3601
      %3682 = vst.msk [vmem:[#allocation2 + $0x40] sm:$0xf] %vm691, %v3603
      %3683 = vst.msk [vmem:[#allocation2 + $0x44] sm:$0xf] %vm691, %v3605
      %3684 = vst.msk [vmem:[#allocation2 + $0x48] sm:$0xf] %vm691, %v3607
      %3685 = vst.msk [vmem:[#allocation2 + $0x4c] sm:$0xf] %vm691, %v3609
      %3686 = vst.msk [vmem:[#allocation2 + $0x50] sm:$0xf] %vm691, %v3611
      %3687 = vst.msk [vmem:[#allocation2 + $0x54] sm:$0xf] %vm691, %v3613
      %3688 = vst.msk [vmem:[#allocation2 + $0x58] sm:$0xf] %vm691, %v3615
      %3689 = vst.msk [vmem:[#allocation2 + $0x5c] sm:$0xf] %vm691, %v3617
      %3690 = vst.msk [vmem:[#allocation2 + $0x60] sm:$0xf] %vm691, %v3619
      %3691 = vst.msk [vmem:[#allocation2 + $0x64] sm:$0xf] %vm691, %v3621
      %3692 = vst.msk [vmem:[#allocation2 + $0x68] sm:$0xf] %vm691, %v3623
      %3693 = vst.msk [vmem:[#allocation2 + $0x6c] sm:$0xf] %vm691, %v3625
      %3694 = vst.msk [vmem:[#allocation2 + $0x70] sm:$0xf] %vm691, %v3627
      %3695 = vst.msk [vmem:[#allocation2 + $0x74] sm:$0xf] %vm691, %v3629
      %3696 = vst.msk [vmem:[#allocation2 + $0x78] sm:$0xf] %vm691, %v3631
      %3697 = vst.msk [vmem:[#allocation2 + $0x7c] sm:$0xf] %vm691, %v3633
      %3698 = vrot.lane.b32.xlu0 %v2537, 8
      %v3699 = vpop.permute.xlu0 %3698
      %3700 = vrot.lane.b32.xlu0 %v2538, 8
      %v3701 = vpop.permute.xlu0 %3700
      %3702 = vrot.lane.b32.xlu0 %v2539, 8
      %v3703 = vpop.permute.xlu0 %3702
      %3704 = vrot.lane.b32.xlu0 %v2540, 8
      %v3705 = vpop.permute.xlu0 %3704
      %3706 = vrot.lane.b32.xlu0 %v2541, 8
      %v3707 = vpop.permute.xlu0 %3706
      %3708 = vrot.lane.b32.xlu0 %v2542, 8
      %v3709 = vpop.permute.xlu0 %3708
      %3710 = vrot.lane.b32.xlu0 %v2543, 8
      %v3711 = vpop.permute.xlu0 %3710
      %3712 = vrot.lane.b32.xlu0 %v2544, 8
      %v3713 = vpop.permute.xlu0 %3712
      %3714 = vrot.lane.b32.xlu0 %v2545, 8
      %v3715 = vpop.permute.xlu0 %3714
      %3716 = vrot.lane.b32.xlu0 %v2546, 8
      %v3717 = vpop.permute.xlu0 %3716
      %3718 = vrot.lane.b32.xlu0 %v2547, 8
      %v3719 = vpop.permute.xlu0 %3718
      %3720 = vrot.lane.b32.xlu0 %v2548, 8
      %v3721 = vpop.permute.xlu0 %3720
      %3722 = vrot.lane.b32.xlu0 %v2549, 8
      %v3723 = vpop.permute.xlu0 %3722
      %3724 = vrot.lane.b32.xlu0 %v2550, 8
      %v3725 = vpop.permute.xlu0 %3724
      %3726 = vrot.lane.b32.xlu0 %v2551, 8
      %v3727 = vpop.permute.xlu0 %3726
      %3728 = vrot.lane.b32.xlu0 %v2552, 8
      %v3729 = vpop.permute.xlu0 %3728
      %3730 = vrot.lane.b32.xlu0 %v2553, 8
      %v3731 = vpop.permute.xlu0 %3730
      %3732 = vrot.lane.b32.xlu0 %v2554, 8
      %v3733 = vpop.permute.xlu0 %3732
      %3734 = vrot.lane.b32.xlu0 %v2555, 8
      %v3735 = vpop.permute.xlu0 %3734
      %3736 = vrot.lane.b32.xlu0 %v2556, 8
      %v3737 = vpop.permute.xlu0 %3736
      %3738 = vrot.lane.b32.xlu0 %v2557, 8
      %v3739 = vpop.permute.xlu0 %3738
      %3740 = vrot.lane.b32.xlu0 %v2558, 8
      %v3741 = vpop.permute.xlu0 %3740
      %3742 = vrot.lane.b32.xlu0 %v2559, 8
      %v3743 = vpop.permute.xlu0 %3742
      %3744 = vrot.lane.b32.xlu0 %v2560, 8
      %v3745 = vpop.permute.xlu0 %3744
      %3746 = vrot.lane.b32.xlu0 %v2561, 8
      %v3747 = vpop.permute.xlu0 %3746
      %3748 = vrot.lane.b32.xlu0 %v2562, 8
      %v3749 = vpop.permute.xlu0 %3748
      %3750 = vrot.lane.b32.xlu0 %v2563, 8
      %v3751 = vpop.permute.xlu0 %3750
      %3752 = vrot.lane.b32.xlu0 %v2564, 8
      %v3753 = vpop.permute.xlu0 %3752
      %3754 = vrot.lane.b32.xlu0 %v2565, 8
      %v3755 = vpop.permute.xlu0 %3754
      %3756 = vrot.lane.b32.xlu0 %v2566, 8
      %v3757 = vpop.permute.xlu0 %3756
      %3758 = vrot.lane.b32.xlu0 %v2567, 8
      %v3759 = vpop.permute.xlu0 %3758
      %3760 = vrot.lane.b32.xlu0 %v2568, 8
      %v3761 = vpop.permute.xlu0 %3760
      %3794 = vst.msk [vmem:[#allocation2] sm:$0xf] %vm852, %v3699
      %3795 = vst.msk [vmem:[#allocation2 + $0x4] sm:$0xf] %vm852, %v3701
      %3796 = vst.msk [vmem:[#allocation2 + $0x8] sm:$0xf] %vm852, %v3703
      %3797 = vst.msk [vmem:[#allocation2 + $0xc] sm:$0xf] %vm852, %v3705
      %3798 = vst.msk [vmem:[#allocation2 + $0x10] sm:$0xf] %vm852, %v3707
      %3799 = vst.msk [vmem:[#allocation2 + $0x14] sm:$0xf] %vm852, %v3709
      %3800 = vst.msk [vmem:[#allocation2 + $0x18] sm:$0xf] %vm852, %v3711
      %3801 = vst.msk [vmem:[#allocation2 + $0x1c] sm:$0xf] %vm852, %v3713
      %3802 = vst.msk [vmem:[#allocation2 + $0x20] sm:$0xf] %vm852, %v3715
      %3803 = vst.msk [vmem:[#allocation2 + $0x24] sm:$0xf] %vm852, %v3717
      %3804 = vst.msk [vmem:[#allocation2 + $0x28] sm:$0xf] %vm852, %v3719
      %3805 = vst.msk [vmem:[#allocation2 + $0x2c] sm:$0xf] %vm852, %v3721
      %3806 = vst.msk [vmem:[#allocation2 + $0x30] sm:$0xf] %vm852, %v3723
      %3807 = vst.msk [vmem:[#allocation2 + $0x34] sm:$0xf] %vm852, %v3725
      %3808 = vst.msk [vmem:[#allocation2 + $0x38] sm:$0xf] %vm852, %v3727
      %3809 = vst.msk [vmem:[#allocation2 + $0x3c] sm:$0xf] %vm852, %v3729
      %3810 = vst.msk [vmem:[#allocation2 + $0x40] sm:$0xf] %vm852, %v3731
      %3811 = vst.msk [vmem:[#allocation2 + $0x44] sm:$0xf] %vm852, %v3733
      %3812 = vst.msk [vmem:[#allocation2 + $0x48] sm:$0xf] %vm852, %v3735
      %3813 = vst.msk [vmem:[#allocation2 + $0x4c] sm:$0xf] %vm852, %v3737
      %3814 = vst.msk [vmem:[#allocation2 + $0x50] sm:$0xf] %vm852, %v3739
      %3815 = vst.msk [vmem:[#allocation2 + $0x54] sm:$0xf] %vm852, %v3741
      %3816 = vst.msk [vmem:[#allocation2 + $0x58] sm:$0xf] %vm852, %v3743
      %3817 = vst.msk [vmem:[#allocation2 + $0x5c] sm:$0xf] %vm852, %v3745
      %3818 = vst.msk [vmem:[#allocation2 + $0x60] sm:$0xf] %vm852, %v3747
      %3819 = vst.msk [vmem:[#allocation2 + $0x64] sm:$0xf] %vm852, %v3749
      %3820 = vst.msk [vmem:[#allocation2 + $0x68] sm:$0xf] %vm852, %v3751
      %3821 = vst.msk [vmem:[#allocation2 + $0x6c] sm:$0xf] %vm852, %v3753
      %3822 = vst.msk [vmem:[#allocation2 + $0x70] sm:$0xf] %vm852, %v3755
      %3823 = vst.msk [vmem:[#allocation2 + $0x74] sm:$0xf] %vm852, %v3757
      %3824 = vst.msk [vmem:[#allocation2 + $0x78] sm:$0xf] %vm852, %v3759
      %3825 = vst.msk [vmem:[#allocation2 + $0x7c] sm:$0xf] %vm852, %v3761
      %3858 = vrot.lane.b32.xlu0 %v2601, 12
      %v3859 = vpop.permute.xlu0 %3858
      %3860 = vrot.lane.b32.xlu0 %v2602, 12
      %v3861 = vpop.permute.xlu0 %3860
      %3862 = vrot.lane.b32.xlu0 %v2603, 12
      %v3863 = vpop.permute.xlu0 %3862
      %3864 = vrot.lane.b32.xlu0 %v2604, 12
      %v3865 = vpop.permute.xlu0 %3864
      %3866 = vrot.lane.b32.xlu0 %v2605, 12
      %v3867 = vpop.permute.xlu0 %3866
      %3868 = vrot.lane.b32.xlu0 %v2606, 12
      %v3869 = vpop.permute.xlu0 %3868
      %3870 = vrot.lane.b32.xlu0 %v2607, 12
      %v3871 = vpop.permute.xlu0 %3870
      %3872 = vrot.lane.b32.xlu0 %v2608, 12
      %v3873 = vpop.permute.xlu0 %3872
      %3874 = vrot.lane.b32.xlu0 %v2609, 12
      %v3875 = vpop.permute.xlu0 %3874
      %3876 = vrot.lane.b32.xlu0 %v2610, 12
      %v3877 = vpop.permute.xlu0 %3876
      %3878 = vrot.lane.b32.xlu0 %v2611, 12
      %v3879 = vpop.permute.xlu0 %3878
      %3880 = vrot.lane.b32.xlu0 %v2612, 12
      %v3881 = vpop.permute.xlu0 %3880
      %3882 = vrot.lane.b32.xlu0 %v2613, 12
      %v3883 = vpop.permute.xlu0 %3882
      %3884 = vrot.lane.b32.xlu0 %v2614, 12
      %v3885 = vpop.permute.xlu0 %3884
      %3886 = vrot.lane.b32.xlu0 %v2615, 12
      %v3887 = vpop.permute.xlu0 %3886
      %3888 = vrot.lane.b32.xlu0 %v2616, 12
      %v3889 = vpop.permute.xlu0 %3888
      %3890 = vrot.lane.b32.xlu0 %v2617, 12
      %v3891 = vpop.permute.xlu0 %3890
      %3892 = vrot.lane.b32.xlu0 %v2618, 12
      %v3893 = vpop.permute.xlu0 %3892
      %3894 = vrot.lane.b32.xlu0 %v2619, 12
      %v3895 = vpop.permute.xlu0 %3894
      %3896 = vrot.lane.b32.xlu0 %v2620, 12
      %v3897 = vpop.permute.xlu0 %3896
      %3898 = vrot.lane.b32.xlu0 %v2621, 12
      %v3899 = vpop.permute.xlu0 %3898
      %3900 = vrot.lane.b32.xlu0 %v2622, 12
      %v3901 = vpop.permute.xlu0 %3900
      %3902 = vrot.lane.b32.xlu0 %v2623, 12
      %v3903 = vpop.permute.xlu0 %3902
      %3904 = vrot.lane.b32.xlu0 %v2624, 12
      %v3905 = vpop.permute.xlu0 %3904
      %3906 = vrot.lane.b32.xlu0 %v2625, 12
      %v3907 = vpop.permute.xlu0 %3906
      %3908 = vrot.lane.b32.xlu0 %v2626, 12
      %v3909 = vpop.permute.xlu0 %3908
      %3910 = vrot.lane.b32.xlu0 %v2627, 12
      %v3911 = vpop.permute.xlu0 %3910
      %3912 = vrot.lane.b32.xlu0 %v2628, 12
      %v3913 = vpop.permute.xlu0 %3912
      %3914 = vrot.lane.b32.xlu0 %v2629, 12
      %v3915 = vpop.permute.xlu0 %3914
      %3916 = vrot.lane.b32.xlu0 %v2630, 12
      %v3917 = vpop.permute.xlu0 %3916
      %3918 = vrot.lane.b32.xlu0 %v2631, 12
      %v3919 = vpop.permute.xlu0 %3918
      %3920 = vrot.lane.b32.xlu0 %v2632, 12
      %v3921 = vpop.permute.xlu0 %3920
      %3954 = vst.msk [vmem:[#allocation2] sm:$0xf] %vm1013, %v3859
      %3955 = vst.msk [vmem:[#allocation2 + $0x4] sm:$0xf] %vm1013, %v3861
      %3956 = vst.msk [vmem:[#allocation2 + $0x8] sm:$0xf] %vm1013, %v3863
      %3957 = vst.msk [vmem:[#allocation2 + $0xc] sm:$0xf] %vm1013, %v3865
      %3958 = vst.msk [vmem:[#allocation2 + $0x10] sm:$0xf] %vm1013, %v3867
      %3959 = vst.msk [vmem:[#allocation2 + $0x14] sm:$0xf] %vm1013, %v3869
      %3960 = vst.msk [vmem:[#allocation2 + $0x18] sm:$0xf] %vm1013, %v3871
      %3961 = vst.msk [vmem:[#allocation2 + $0x1c] sm:$0xf] %vm1013, %v3873
      %3962 = vst.msk [vmem:[#allocation2 + $0x20] sm:$0xf] %vm1013, %v3875
      %3963 = vst.msk [vmem:[#allocation2 + $0x24] sm:$0xf] %vm1013, %v3877
      %3964 = vst.msk [vmem:[#allocation2 + $0x28] sm:$0xf] %vm1013, %v3879
      %3965 = vst.msk [vmem:[#allocation2 + $0x2c] sm:$0xf] %vm1013, %v3881
      %3966 = vst.msk [vmem:[#allocation2 + $0x30] sm:$0xf] %vm1013, %v3883
      %3967 = vst.msk [vmem:[#allocation2 + $0x34] sm:$0xf] %vm1013, %v3885
      %3968 = vst.msk [vmem:[#allocation2 + $0x38] sm:$0xf] %vm1013, %v3887
      %3969 = vst.msk [vmem:[#allocation2 + $0x3c] sm:$0xf] %vm1013, %v3889
      %3970 = vst.msk [vmem:[#allocation2 + $0x40] sm:$0xf] %vm1013, %v3891
      %3971 = vst.msk [vmem:[#allocation2 + $0x44] sm:$0xf] %vm1013, %v3893
      %3972 = vst.msk [vmem:[#allocation2 + $0x48] sm:$0xf] %vm1013, %v3895
      %3973 = vst.msk [vmem:[#allocation2 + $0x4c] sm:$0xf] %vm1013, %v3897
      %3974 = vst.msk [vmem:[#allocation2 + $0x50] sm:$0xf] %vm1013, %v3899
      %3975 = vst.msk [vmem:[#allocation2 + $0x54] sm:$0xf] %vm1013, %v3901
      %3976 = vst.msk [vmem:[#allocation2 + $0x58] sm:$0xf] %vm1013, %v3903
      %3977 = vst.msk [vmem:[#allocation2 + $0x5c] sm:$0xf] %vm1013, %v3905
      %3978 = vst.msk [vmem:[#allocation2 + $0x60] sm:$0xf] %vm1013, %v3907
      %3979 = vst.msk [vmem:[#allocation2 + $0x64] sm:$0xf] %vm1013, %v3909
      %3980 = vst.msk [vmem:[#allocation2 + $0x68] sm:$0xf] %vm1013, %v3911
      %3981 = vst.msk [vmem:[#allocation2 + $0x6c] sm:$0xf] %vm1013, %v3913
      %3982 = vst.msk [vmem:[#allocation2 + $0x70] sm:$0xf] %vm1013, %v3915
      %3983 = vst.msk [vmem:[#allocation2 + $0x74] sm:$0xf] %vm1013, %v3917
      %3984 = vst.msk [vmem:[#allocation2 + $0x78] sm:$0xf] %vm1013, %v3919
      %3985 = vst.msk [vmem:[#allocation2 + $0x7c] sm:$0xf] %vm1013, %v3921
      %v3986 = vld [vmem:[#allocation2] sm:$0xf]
      %v3987 = vld [vmem:[#allocation2 + $0x4] sm:$0xf]
      %v3988 = vld [vmem:[#allocation2 + $0x8] sm:$0xf]
      %v3989 = vld [vmem:[#allocation2 + $0xc] sm:$0xf]
      %v3990 = vld [vmem:[#allocation2 + $0x10] sm:$0xf]
      %v3991 = vld [vmem:[#allocation2 + $0x14] sm:$0xf]
      %v3992 = vld [vmem:[#allocation2 + $0x18] sm:$0xf]
      %v3993 = vld [vmem:[#allocation2 + $0x1c] sm:$0xf]
      %v3994 = vld [vmem:[#allocation2 + $0x20] sm:$0xf]
      %v3995 = vld [vmem:[#allocation2 + $0x24] sm:$0xf]
      %v3996 = vld [vmem:[#allocation2 + $0x28] sm:$0xf]
      %v3997 = vld [vmem:[#allocation2 + $0x2c] sm:$0xf]
      %v3998 = vld [vmem:[#allocation2 + $0x30] sm:$0xf]
      %v3999 = vld [vmem:[#allocation2 + $0x34] sm:$0xf]
      %v4000 = vld [vmem:[#allocation2 + $0x38] sm:$0xf]
      %v4001 = vld [vmem:[#allocation2 + $0x3c] sm:$0xf]
      %v4002 = vld [vmem:[#allocation2 + $0x40] sm:$0xf]
      %v4003 = vld [vmem:[#allocation2 + $0x44] sm:$0xf]
      %v4004 = vld [vmem:[#allocation2 + $0x48] sm:$0xf]
      %v4005 = vld [vmem:[#allocation2 + $0x4c] sm:$0xf]
      %v4006 = vld [vmem:[#allocation2 + $0x50] sm:$0xf]
      %v4007 = vld [vmem:[#allocation2 + $0x54] sm:$0xf]
      %v4008 = vld [vmem:[#allocation2 + $0x58] sm:$0xf]
      %v4009 = vld [vmem:[#allocation2 + $0x5c] sm:$0xf]
      %v4010 = vld [vmem:[#allocation2 + $0x60] sm:$0xf]
      %v4011 = vld [vmem:[#allocation2 + $0x64] sm:$0xf]
      %v4012 = vld [vmem:[#allocation2 + $0x68] sm:$0xf]
      %v4013 = vld [vmem:[#allocation2 + $0x6c] sm:$0xf]
      %v4014 = vld [vmem:[#allocation2 + $0x70] sm:$0xf]
      %v4015 = vld [vmem:[#allocation2 + $0x74] sm:$0xf]
      %v4016 = vld [vmem:[#allocation2 + $0x78] sm:$0xf]
      %v4017 = vld [vmem:[#allocation2 + $0x7c] sm:$0xf]
      %s4018 = scalar_lea.vmem %s1, 24
      %v4019 = vld [vmem:[%s4018] sm:$0xf]
      %v4020 = vld [vmem:[%s4018 + $0x4] sm:$0xf]
      %v4053 = vunpack.c.l.b16 %v3986
      %v4054 = vunpack.c.l.b16 %v3987
      %v4055 = vunpack.c.l.b16 %v3988
      %v4056 = vunpack.c.l.b16 %v3989
      %v4057 = vunpack.c.l.b16 %v3990
      %v4058 = vunpack.c.l.b16 %v3991
      %v4059 = vunpack.c.l.b16 %v3992
      %v4060 = vunpack.c.l.b16 %v3993
      %v4061 = vunpack.c.l.b16 %v3994
      %v4062 = vunpack.c.l.b16 %v3995
      %v4063 = vunpack.c.l.b16 %v3996
      %v4064 = vunpack.c.l.b16 %v3997
      %v4065 = vunpack.c.l.b16 %v3998
      %v4066 = vunpack.c.l.b16 %v3999
      %v4067 = vunpack.c.l.b16 %v4000
      %v4068 = vunpack.c.l.b16 %v4001
      %v4069 = vunpack.c.l.b16 %v4002
      %v4070 = vunpack.c.l.b16 %v4003
      %v4071 = vunpack.c.l.b16 %v4004
      %v4072 = vunpack.c.l.b16 %v4005
      %v4073 = vunpack.c.l.b16 %v4006
      %v4074 = vunpack.c.l.b16 %v4007
      %v4075 = vunpack.c.l.b16 %v4008
      %v4076 = vunpack.c.l.b16 %v4009
      %v4077 = vunpack.c.l.b16 %v4010
      %v4078 = vunpack.c.l.b16 %v4011
      %v4079 = vunpack.c.l.b16 %v4012
      %v4080 = vunpack.c.l.b16 %v4013
      %v4081 = vunpack.c.l.b16 %v4014
      %v4082 = vunpack.c.l.b16 %v4015
      %v4083 = vunpack.c.l.b16 %v4016
      %v4084 = vunpack.c.l.b16 %v4017
      %v4085 = vpack.c.b16 %v4054, %v4053
      %v4086 = vpack.c.b16 %v4056, %v4055
      %v4087 = vpack.c.b16 %v4058, %v4057
      %v4088 = vpack.c.b16 %v4060, %v4059
      %v4089 = vpack.c.b16 %v4062, %v4061
      %v4090 = vpack.c.b16 %v4064, %v4063
      %v4091 = vpack.c.b16 %v4066, %v4065
      %v4092 = vpack.c.b16 %v4068, %v4067
      %v4093 = vpack.c.b16 %v4070, %v4069
      %v4094 = vpack.c.b16 %v4072, %v4071
      %v4095 = vpack.c.b16 %v4074, %v4073
      %v4096 = vpack.c.b16 %v4076, %v4075
      %v4097 = vpack.c.b16 %v4078, %v4077
      %v4098 = vpack.c.b16 %v4080, %v4079
      %v4099 = vpack.c.b16 %v4082, %v4081
      %v4100 = vpack.c.b16 %v4084, %v4083
      %v4103 = vunpack.c.l.b16 %v4019
      %v4104 = vunpack.c.l.b16 %v4020
      %v4105 = vpack.c.b16 %v4104, %v4103
      %v4108 = vsel %vm1166, %v4085, 0
      %v4111 = vsel %vm1166, %v4086, 0
      %v4114 = vsel %vm1166, %v4087, 0
      %v4117 = vsel %vm1166, %v4088, 0
      %v4120 = vsel %vm1166, %v4089, 0
      %v4123 = vsel %vm1166, %v4090, 0
      %v4126 = vsel %vm1166, %v4091, 0
      %v4129 = vsel %vm1166, %v4092, 0
      %v4132 = vsel %vm1166, %v4093, 0
      %v4135 = vsel %vm1166, %v4094, 0
      %v4138 = vsel %vm1166, %v4095, 0
      %v4141 = vsel %vm1166, %v4096, 0
      %v4144 = vsel %vm1166, %v4097, 0
      %v4147 = vsel %vm1166, %v4098, 0
      %v4150 = vsel %vm1166, %v4099, 0
      %v4153 = vsel %vm1166, %v4100, 0
      %4155 = vmatpush.bf16.msra.mxu0 0
      %4156 = vmatpush.bf16.msra.mxu0 0
      %4157 = vmatpush.bf16.msra.mxu0 0
      %4158 = vmatpush.bf16.msra.mxu0 0
      %4159 = vmatpush.bf16.msra.mxu0 0
      %4160 = vmatpush.bf16.msra.mxu0 0
      %4161 = vmatpush.bf16.msra.mxu0 0
      %4162 = vmatpush.bf16.msra.mxu0 %v4105
      %4163 = vmatmul.bf16.gmra.mxu0 %v4108
      %v4164 = vpop.f32.mrf.mxu0
      %v4165 = vadd.f32 0.0, %v4164
      %v4166 = vpop.f32.mrf.mxu0
      %v4167 = vadd.f32 0.0, %v4166
      %4168 = vmatmul.bf16.gmra.mxu0 %v4111
      %v4169 = vpop.f32.mrf.mxu0
      %v4170 = vadd.f32 0.0, %v4169
      %v4171 = vpop.f32.mrf.mxu0
      %v4172 = vadd.f32 0.0, %v4171
      %4173 = vmatmul.bf16.gmra.mxu0 %v4114
      %v4174 = vpop.f32.mrf.mxu0
      %v4175 = vadd.f32 0.0, %v4174
      %v4176 = vpop.f32.mrf.mxu0
      %v4177 = vadd.f32 0.0, %v4176
      %4178 = vmatmul.bf16.gmra.mxu0 %v4117
      %v4179 = vpop.f32.mrf.mxu0
      %v4180 = vadd.f32 0.0, %v4179
      %v4181 = vpop.f32.mrf.mxu0
      %v4182 = vadd.f32 0.0, %v4181
      %4183 = vmatmul.bf16.gmra.mxu0 %v4120
      %v4184 = vpop.f32.mrf.mxu0
      %v4185 = vadd.f32 0.0, %v4184
      %v4186 = vpop.f32.mrf.mxu0
      %v4187 = vadd.f32 0.0, %v4186
      %4188 = vmatmul.bf16.gmra.mxu0 %v4123
      %v4189 = vpop.f32.mrf.mxu0
      %v4190 = vadd.f32 0.0, %v4189
      %v4191 = vpop.f32.mrf.mxu0
      %v4192 = vadd.f32 0.0, %v4191
      %4193 = vmatmul.bf16.gmra.mxu0 %v4126
      %v4194 = vpop.f32.mrf.mxu0
      %v4195 = vadd.f32 0.0, %v4194
      %v4196 = vpop.f32.mrf.mxu0
      %v4197 = vadd.f32 0.0, %v4196
      %4198 = vmatmul.bf16.gmra.mxu0 %v4129
      %v4199 = vpop.f32.mrf.mxu0
      %v4200 = vadd.f32 0.0, %v4199
      %v4201 = vpop.f32.mrf.mxu0
      %v4202 = vadd.f32 0.0, %v4201
      %4203 = vmatmul.bf16.gmra.mxu0 %v4132
      %v4204 = vpop.f32.mrf.mxu0
      %v4205 = vadd.f32 0.0, %v4204
      %v4206 = vpop.f32.mrf.mxu0
      %v4207 = vadd.f32 0.0, %v4206
      %4208 = vmatmul.bf16.gmra.mxu0 %v4135
      %v4209 = vpop.f32.mrf.mxu0
      %v4210 = vadd.f32 0.0, %v4209
      %v4211 = vpop.f32.mrf.mxu0
      %v4212 = vadd.f32 0.0, %v4211
      %4213 = vmatmul.bf16.gmra.mxu0 %v4138
      %v4214 = vpop.f32.mrf.mxu0
      %v4215 = vadd.f32 0.0, %v4214
      %v4216 = vpop.f32.mrf.mxu0
      %v4217 = vadd.f32 0.0, %v4216
      %4218 = vmatmul.bf16.gmra.mxu0 %v4141
      %v4219 = vpop.f32.mrf.mxu0
      %v4220 = vadd.f32 0.0, %v4219
      %v4221 = vpop.f32.mrf.mxu0
      %v4222 = vadd.f32 0.0, %v4221
      %4223 = vmatmul.bf16.gmra.mxu0 %v4144
      %v4224 = vpop.f32.mrf.mxu0
      %v4225 = vadd.f32 0.0, %v4224
      %v4226 = vpop.f32.mrf.mxu0
      %v4227 = vadd.f32 0.0, %v4226
      %4228 = vmatmul.bf16.gmra.mxu0 %v4147
      %v4229 = vpop.f32.mrf.mxu0
      %v4230 = vadd.f32 0.0, %v4229
      %v4231 = vpop.f32.mrf.mxu0
      %v4232 = vadd.f32 0.0, %v4231
      %4233 = vmatmul.bf16.gmra.mxu0 %v4150
      %v4234 = vpop.f32.mrf.mxu0
      %v4235 = vadd.f32 0.0, %v4234
      %v4236 = vpop.f32.mrf.mxu0
      %v4237 = vadd.f32 0.0, %v4236
      %4238 = vmatmul.bf16.gmra.mxu0 %v4153
      %v4239 = vpop.f32.mrf.mxu0
      %v4240 = vadd.f32 0.0, %v4239
      %v4241 = vpop.f32.mrf.mxu0
      %v4242 = vadd.f32 0.0, %v4241
      %4243 = vdwg.mxu0
      %s4244 = scalar_lea.vmem %s143, 768
      %4245 = vst.msk [vmem:[%s4244] sm:$0xff] %vm1304, %v4165
      %4246 = vst.msk [vmem:[%s4244 + $0x8] sm:$0xff] %vm1304, %v4167
      %4247 = vst.msk [vmem:[%s4244 + $0x10] sm:$0xff] %vm1304, %v4170
      %4248 = vst.msk [vmem:[%s4244 + $0x18] sm:$0xff] %vm1304, %v4172
      %4249 = vst.msk [vmem:[%s4244 + $0x20] sm:$0xff] %vm1304, %v4175
      %4250 = vst.msk [vmem:[%s4244 + $0x28] sm:$0xff] %vm1304, %v4177
      %4251 = vst.msk [vmem:[%s4244 + $0x30] sm:$0xff] %vm1304, %v4180
      %4252 = vst.msk [vmem:[%s4244 + $0x38] sm:$0xff] %vm1304, %v4182
      %4253 = vst.msk [vmem:[%s4244 + $0x40] sm:$0xff] %vm1304, %v4185
      %4254 = vst.msk [vmem:[%s4244 + $0x48] sm:$0xff] %vm1304, %v4187
      %4255 = vst.msk [vmem:[%s4244 + $0x50] sm:$0xff] %vm1304, %v4190
      %4256 = vst.msk [vmem:[%s4244 + $0x58] sm:$0xff] %vm1304, %v4192
      %4257 = vst.msk [vmem:[%s4244 + $0x60] sm:$0xff] %vm1304, %v4195
      %4258 = vst.msk [vmem:[%s4244 + $0x68] sm:$0xff] %vm1304, %v4197
      %4259 = vst.msk [vmem:[%s4244 + $0x70] sm:$0xff] %vm1304, %v4200
      %4260 = vst.msk [vmem:[%s4244 + $0x78] sm:$0xff] %vm1304, %v4202
      %4261 = vst.msk [vmem:[%s4244 + $0x80] sm:$0xff] %vm1304, %v4205
      %4262 = vst.msk [vmem:[%s4244 + $0x88] sm:$0xff] %vm1304, %v4207
      %4263 = vst.msk [vmem:[%s4244 + $0x90] sm:$0xff] %vm1304, %v4210
      %4264 = vst.msk [vmem:[%s4244 + $0x98] sm:$0xff] %vm1304, %v4212
      %4265 = vst.msk [vmem:[%s4244 + $0xa0] sm:$0xff] %vm1304, %v4215
      %4266 = vst.msk [vmem:[%s4244 + $0xa8] sm:$0xff] %vm1304, %v4217
      %4267 = vst.msk [vmem:[%s4244 + $0xb0] sm:$0xff] %vm1304, %v4220
      %4268 = vst.msk [vmem:[%s4244 + $0xb8] sm:$0xff] %vm1304, %v4222
      %4269 = vst.msk [vmem:[%s4244 + $0xc0] sm:$0xff] %vm1304, %v4225
      %4270 = vst.msk [vmem:[%s4244 + $0xc8] sm:$0xff] %vm1304, %v4227
      %4271 = vst.msk [vmem:[%s4244 + $0xd0] sm:$0xff] %vm1304, %v4230
      %4272 = vst.msk [vmem:[%s4244 + $0xd8] sm:$0xff] %vm1304, %v4232
      %4273 = vst.msk [vmem:[%s4244 + $0xe0] sm:$0xff] %vm1304, %v4235
      %4274 = vst.msk [vmem:[%s4244 + $0xe8] sm:$0xff] %vm1304, %v4237
      %4275 = vst.msk [vmem:[%s4244 + $0xf0] sm:$0xff] %vm1304, %v4240
      %4276 = vst.msk [vmem:[%s4244 + $0xf8] sm:$0xff] %vm1304, %v4242
      %v4277 = vsel %vm1304, %v4165, 0.0
      %v4278 = vsel %vm1304, %v4167, 0.0
      %v4279 = vadd.f32 %v4277, %v4278
      %v4280 = vsel %vm1304, %v4170, 0.0
      %v4281 = vadd.f32 %v4279, %v4280
      %v4282 = vsel %vm1304, %v4172, 0.0
      %v4283 = vadd.f32 %v4281, %v4282
      %v4284 = vsel %vm1304, %v4175, 0.0
      %v4285 = vadd.f32 %v4283, %v4284
      %v4286 = vsel %vm1304, %v4177, 0.0
      %v4287 = vadd.f32 %v4285, %v4286
      %v4288 = vsel %vm1304, %v4180, 0.0
      %v4289 = vadd.f32 %v4287, %v4288
      %v4290 = vsel %vm1304, %v4182, 0.0
      %v4291 = vadd.f32 %v4289, %v4290
      %v4292 = vsel %vm1304, %v4185, 0.0
      %v4293 = vadd.f32 %v4291, %v4292
      %v4294 = vsel %vm1304, %v4187, 0.0
      %v4295 = vadd.f32 %v4293, %v4294
      %v4296 = vsel %vm1304, %v4190, 0.0
      %v4297 = vadd.f32 %v4295, %v4296
      %v4298 = vsel %vm1304, %v4192, 0.0
      %v4299 = vadd.f32 %v4297, %v4298
      %v4300 = vsel %vm1304, %v4195, 0.0
      %v4301 = vadd.f32 %v4299, %v4300
      %v4302 = vsel %vm1304, %v4197, 0.0
      %v4303 = vadd.f32 %v4301, %v4302
      %v4304 = vsel %vm1304, %v4200, 0.0
      %v4305 = vadd.f32 %v4303, %v4304
      %v4306 = vsel %vm1304, %v4202, 0.0
      %v4307 = vadd.f32 %v4305, %v4306
      %v4308 = vsel %vm1304, %v4205, 0.0
      %v4309 = vadd.f32 %v4307, %v4308
      %v4310 = vsel %vm1304, %v4207, 0.0
      %v4311 = vadd.f32 %v4309, %v4310
      %v4312 = vsel %vm1304, %v4210, 0.0
      %v4313 = vadd.f32 %v4311, %v4312
      %v4314 = vsel %vm1304, %v4212, 0.0
      %v4315 = vadd.f32 %v4313, %v4314
      %v4316 = vsel %vm1304, %v4215, 0.0
      %v4317 = vadd.f32 %v4315, %v4316
      %v4318 = vsel %vm1304, %v4217, 0.0
      %v4319 = vadd.f32 %v4317, %v4318
      %v4320 = vsel %vm1304, %v4220, 0.0
      %v4321 = vadd.f32 %v4319, %v4320
      %v4322 = vsel %vm1304, %v4222, 0.0
      %v4323 = vadd.f32 %v4321, %v4322
      %v4324 = vsel %vm1304, %v4225, 0.0
      %v4325 = vadd.f32 %v4323, %v4324
      %v4326 = vsel %vm1304, %v4227, 0.0
      %v4327 = vadd.f32 %v4325, %v4326
      %v4328 = vsel %vm1304, %v4230, 0.0
      %v4329 = vadd.f32 %v4327, %v4328
      %v4330 = vsel %vm1304, %v4232, 0.0
      %v4331 = vadd.f32 %v4329, %v4330
      %v4332 = vsel %vm1304, %v4235, 0.0
      %v4333 = vadd.f32 %v4331, %v4332
      %v4334 = vsel %vm1304, %v4237, 0.0
      %v4335 = vadd.f32 %v4333, %v4334
      %v4336 = vsel %vm1304, %v4240, 0.0
      %v4337 = vadd.f32 %v4335, %v4336
      %v4338 = vsel %vm1304, %v4242, 0.0
      %v4339 = vadd.f32 %v4337, %v4338
      %v4340 = vrot.slane %v4339, 4
      %v4341 = vadd.f32 %v4339, %v4340
      %v4342 = vrot.slane %v4341, 2
      %v4343 = vadd.f32 %v4341, %v4342
      %v4344 = vrot.slane %v4343, 1
      %v4345 = vadd.f32 %v4343, %v4344
      %v4346 = vadd.f32 %v3505, %v4345
      %v4347 = vmul.f32 %v4346, 0.0009765625
      %v4348 = vld [vmem:[%s143] sm:$0xff]
      %v4349 = vld [vmem:[%s143 + $0x8] sm:$0xff]
      %v4350 = vld [vmem:[%s143 + $0x10] sm:$0xff]
      %v4351 = vld [vmem:[%s143 + $0x18] sm:$0xff]
      %v4352 = vld [vmem:[%s143 + $0x20] sm:$0xff]
      %v4353 = vld [vmem:[%s143 + $0x28] sm:$0xff]
      %v4354 = vld [vmem:[%s143 + $0x30] sm:$0xff]
      %v4355 = vld [vmem:[%s143 + $0x38] sm:$0xff]
      %v4356 = vld [vmem:[%s143 + $0x40] sm:$0xff]
      %v4357 = vld [vmem:[%s143 + $0x48] sm:$0xff]
      %v4358 = vld [vmem:[%s143 + $0x50] sm:$0xff]
      %v4359 = vld [vmem:[%s143 + $0x58] sm:$0xff]
      %v4360 = vld [vmem:[%s143 + $0x60] sm:$0xff]
      %v4361 = vld [vmem:[%s143 + $0x68] sm:$0xff]
      %v4362 = vld [vmem:[%s143 + $0x70] sm:$0xff]
      %v4363 = vld [vmem:[%s143 + $0x78] sm:$0xff]
      %v4364 = vld [vmem:[%s143 + $0x80] sm:$0xff]
      %v4365 = vld [vmem:[%s143 + $0x88] sm:$0xff]
      %v4366 = vld [vmem:[%s143 + $0x90] sm:$0xff]
      %v4367 = vld [vmem:[%s143 + $0x98] sm:$0xff]
      %v4368 = vld [vmem:[%s143 + $0xa0] sm:$0xff]
      %v4369 = vld [vmem:[%s143 + $0xa8] sm:$0xff]
      %v4370 = vld [vmem:[%s143 + $0xb0] sm:$0xff]
      %v4371 = vld [vmem:[%s143 + $0xb8] sm:$0xff]
      %v4372 = vld [vmem:[%s143 + $0xc0] sm:$0xff]
      %v4373 = vld [vmem:[%s143 + $0xc8] sm:$0xff]
      %v4374 = vld [vmem:[%s143 + $0xd0] sm:$0xff]
      %v4375 = vld [vmem:[%s143 + $0xd8] sm:$0xff]
      %v4376 = vld [vmem:[%s143 + $0xe0] sm:$0xff]
      %v4377 = vld [vmem:[%s143 + $0xe8] sm:$0xff]
      %v4378 = vld [vmem:[%s143 + $0xf0] sm:$0xff]
      %v4379 = vld [vmem:[%s143 + $0xf8] sm:$0xff]
      %v4380 = vsub.f32 %v4348, %v4347
      %v4381 = vsub.f32 %v4349, %v4347
      %v4382 = vsub.f32 %v4350, %v4347
      %v4383 = vsub.f32 %v4351, %v4347
      %v4384 = vsub.f32 %v4352, %v4347
      %v4385 = vsub.f32 %v4353, %v4347
      %v4386 = vsub.f32 %v4354, %v4347
      %v4387 = vsub.f32 %v4355, %v4347
      %v4388 = vsub.f32 %v4356, %v4347
      %v4389 = vsub.f32 %v4357, %v4347
      %v4390 = vsub.f32 %v4358, %v4347
      %v4391 = vsub.f32 %v4359, %v4347
      %v4392 = vsub.f32 %v4360, %v4347
      %v4393 = vsub.f32 %v4361, %v4347
      %v4394 = vsub.f32 %v4362, %v4347
      %v4395 = vsub.f32 %v4363, %v4347
      %v4396 = vsub.f32 %v4364, %v4347
      %v4397 = vsub.f32 %v4365, %v4347
      %v4398 = vsub.f32 %v4366, %v4347
      %v4399 = vsub.f32 %v4367, %v4347
      %v4400 = vsub.f32 %v4368, %v4347
      %v4401 = vsub.f32 %v4369, %v4347
      %v4402 = vsub.f32 %v4370, %v4347
      %v4403 = vsub.f32 %v4371, %v4347
      %v4404 = vsub.f32 %v4372, %v4347
      %v4405 = vsub.f32 %v4373, %v4347
      %v4406 = vsub.f32 %v4374, %v4347
      %v4407 = vsub.f32 %v4375, %v4347
      %v4408 = vsub.f32 %v4376, %v4347
      %v4409 = vsub.f32 %v4377, %v4347
      %v4410 = vsub.f32 %v4378, %v4347
      %v4411 = vsub.f32 %v4379, %v4347
      %v4412 = vmul.f32 %v4380, %v4380
      %v4413 = vmul.f32 %v4381, %v4381
      %v4414 = vmul.f32 %v4382, %v4382
      %v4415 = vmul.f32 %v4383, %v4383
      %v4416 = vmul.f32 %v4384, %v4384
      %v4417 = vmul.f32 %v4385, %v4385
      %v4418 = vmul.f32 %v4386, %v4386
      %v4419 = vmul.f32 %v4387, %v4387
      %v4420 = vmul.f32 %v4388, %v4388
      %v4421 = vmul.f32 %v4389, %v4389
      %v4422 = vmul.f32 %v4390, %v4390
      %v4423 = vmul.f32 %v4391, %v4391
      %v4424 = vmul.f32 %v4392, %v4392
      %v4425 = vmul.f32 %v4393, %v4393
      %v4426 = vmul.f32 %v4394, %v4394
      %v4427 = vmul.f32 %v4395, %v4395
      %v4428 = vmul.f32 %v4396, %v4396
      %v4429 = vmul.f32 %v4397, %v4397
      %v4430 = vmul.f32 %v4398, %v4398
      %v4431 = vmul.f32 %v4399, %v4399
      %v4432 = vmul.f32 %v4400, %v4400
      %v4433 = vmul.f32 %v4401, %v4401
      %v4434 = vmul.f32 %v4402, %v4402
      %v4435 = vmul.f32 %v4403, %v4403
      %v4436 = vmul.f32 %v4404, %v4404
      %v4437 = vmul.f32 %v4405, %v4405
      %v4438 = vmul.f32 %v4406, %v4406
      %v4439 = vmul.f32 %v4407, %v4407
      %v4440 = vmul.f32 %v4408, %v4408
      %v4441 = vmul.f32 %v4409, %v4409
      %v4442 = vmul.f32 %v4410, %v4410
      %v4443 = vmul.f32 %v4411, %v4411
      %v4444 = vsel %vm1304, %v4412, 0.0
      %v4445 = vsel %vm1304, %v4413, 0.0
      %v4446 = vadd.f32 %v4444, %v4445
      %v4447 = vsel %vm1304, %v4414, 0.0
      %v4448 = vadd.f32 %v4446, %v4447
      %v4449 = vsel %vm1304, %v4415, 0.0
      %v4450 = vadd.f32 %v4448, %v4449
      %v4451 = vsel %vm1304, %v4416, 0.0
      %v4452 = vadd.f32 %v4450, %v4451
      %v4453 = vsel %vm1304, %v4417, 0.0
      %v4454 = vadd.f32 %v4452, %v4453
      %v4455 = vsel %vm1304, %v4418, 0.0
      %v4456 = vadd.f32 %v4454, %v4455
      %v4457 = vsel %vm1304, %v4419, 0.0
      %v4458 = vadd.f32 %v4456, %v4457
      %v4459 = vsel %vm1304, %v4420, 0.0
      %v4460 = vadd.f32 %v4458, %v4459
      %v4461 = vsel %vm1304, %v4421, 0.0
      %v4462 = vadd.f32 %v4460, %v4461
      %v4463 = vsel %vm1304, %v4422, 0.0
      %v4464 = vadd.f32 %v4462, %v4463
      %v4465 = vsel %vm1304, %v4423, 0.0
      %v4466 = vadd.f32 %v4464, %v4465
      %v4467 = vsel %vm1304, %v4424, 0.0
      %v4468 = vadd.f32 %v4466, %v4467
      %v4469 = vsel %vm1304, %v4425, 0.0
      %v4470 = vadd.f32 %v4468, %v4469
      %v4471 = vsel %vm1304, %v4426, 0.0
      %v4472 = vadd.f32 %v4470, %v4471
      %v4473 = vsel %vm1304, %v4427, 0.0
      %v4474 = vadd.f32 %v4472, %v4473
      %v4475 = vsel %vm1304, %v4428, 0.0
      %v4476 = vadd.f32 %v4474, %v4475
      %v4477 = vsel %vm1304, %v4429, 0.0
      %v4478 = vadd.f32 %v4476, %v4477
      %v4479 = vsel %vm1304, %v4430, 0.0
      %v4480 = vadd.f32 %v4478, %v4479
      %v4481 = vsel %vm1304, %v4431, 0.0
      %v4482 = vadd.f32 %v4480, %v4481
      %v4483 = vsel %vm1304, %v4432, 0.0
      %v4484 = vadd.f32 %v4482, %v4483
      %v4485 = vsel %vm1304, %v4433, 0.0
      %v4486 = vadd.f32 %v4484, %v4485
      %v4487 = vsel %vm1304, %v4434, 0.0
      %v4488 = vadd.f32 %v4486, %v4487
      %v4489 = vsel %vm1304, %v4435, 0.0
      %v4490 = vadd.f32 %v4488, %v4489
      %v4491 = vsel %vm1304, %v4436, 0.0
      %v4492 = vadd.f32 %v4490, %v4491
      %v4493 = vsel %vm1304, %v4437, 0.0
      %v4494 = vadd.f32 %v4492, %v4493
      %v4495 = vsel %vm1304, %v4438, 0.0
      %v4496 = vadd.f32 %v4494, %v4495
      %v4497 = vsel %vm1304, %v4439, 0.0
      %v4498 = vadd.f32 %v4496, %v4497
      %v4499 = vsel %vm1304, %v4440, 0.0
      %v4500 = vadd.f32 %v4498, %v4499
      %v4501 = vsel %vm1304, %v4441, 0.0
      %v4502 = vadd.f32 %v4500, %v4501
      %v4503 = vsel %vm1304, %v4442, 0.0
      %v4504 = vadd.f32 %v4502, %v4503
      %v4505 = vsel %vm1304, %v4443, 0.0
      %v4506 = vadd.f32 %v4504, %v4505
      %v4507 = vrot.slane %v4506, 4
      %v4508 = vadd.f32 %v4506, %v4507
      %v4509 = vrot.slane %v4508, 2
      %v4510 = vadd.f32 %v4508, %v4509
      %v4511 = vrot.slane %v4510, 1
      %v4512 = vadd.f32 %v4510, %v4511
      %v4513 = vadd.f32 %v4512, 0.0
      %v4514 = vld [vmem:[%s2145] sm:$0xff]
      %v4515 = vld [vmem:[%s2145 + $0x8] sm:$0xff]
      %v4516 = vld [vmem:[%s2145 + $0x10] sm:$0xff]
      %v4517 = vld [vmem:[%s2145 + $0x18] sm:$0xff]
      %v4518 = vld [vmem:[%s2145 + $0x20] sm:$0xff]
      %v4519 = vld [vmem:[%s2145 + $0x28] sm:$0xff]
      %v4520 = vld [vmem:[%s2145 + $0x30] sm:$0xff]
      %v4521 = vld [vmem:[%s2145 + $0x38] sm:$0xff]
      %v4522 = vld [vmem:[%s2145 + $0x40] sm:$0xff]
      %v4523 = vld [vmem:[%s2145 + $0x48] sm:$0xff]
      %v4524 = vld [vmem:[%s2145 + $0x50] sm:$0xff]
      %v4525 = vld [vmem:[%s2145 + $0x58] sm:$0xff]
      %v4526 = vld [vmem:[%s2145 + $0x60] sm:$0xff]
      %v4527 = vld [vmem:[%s2145 + $0x68] sm:$0xff]
      %v4528 = vld [vmem:[%s2145 + $0x70] sm:$0xff]
      %v4529 = vld [vmem:[%s2145 + $0x78] sm:$0xff]
      %v4530 = vld [vmem:[%s2145 + $0x80] sm:$0xff]
      %v4531 = vld [vmem:[%s2145 + $0x88] sm:$0xff]
      %v4532 = vld [vmem:[%s2145 + $0x90] sm:$0xff]
      %v4533 = vld [vmem:[%s2145 + $0x98] sm:$0xff]
      %v4534 = vld [vmem:[%s2145 + $0xa0] sm:$0xff]
      %v4535 = vld [vmem:[%s2145 + $0xa8] sm:$0xff]
      %v4536 = vld [vmem:[%s2145 + $0xb0] sm:$0xff]
      %v4537 = vld [vmem:[%s2145 + $0xb8] sm:$0xff]
      %v4538 = vld [vmem:[%s2145 + $0xc0] sm:$0xff]
      %v4539 = vld [vmem:[%s2145 + $0xc8] sm:$0xff]
      %v4540 = vld [vmem:[%s2145 + $0xd0] sm:$0xff]
      %v4541 = vld [vmem:[%s2145 + $0xd8] sm:$0xff]
      %v4542 = vld [vmem:[%s2145 + $0xe0] sm:$0xff]
      %v4543 = vld [vmem:[%s2145 + $0xe8] sm:$0xff]
      %v4544 = vld [vmem:[%s2145 + $0xf0] sm:$0xff]
      %v4545 = vld [vmem:[%s2145 + $0xf8] sm:$0xff]
      %v4546 = vsub.f32 %v4514, %v4347
      %v4547 = vsub.f32 %v4515, %v4347
      %v4548 = vsub.f32 %v4516, %v4347
      %v4549 = vsub.f32 %v4517, %v4347
      %v4550 = vsub.f32 %v4518, %v4347
      %v4551 = vsub.f32 %v4519, %v4347
      %v4552 = vsub.f32 %v4520, %v4347
      %v4553 = vsub.f32 %v4521, %v4347
      %v4554 = vsub.f32 %v4522, %v4347
      %v4555 = vsub.f32 %v4523, %v4347
      %v4556 = vsub.f32 %v4524, %v4347
      %v4557 = vsub.f32 %v4525, %v4347
      %v4558 = vsub.f32 %v4526, %v4347
      %v4559 = vsub.f32 %v4527, %v4347
      %v4560 = vsub.f32 %v4528, %v4347
      %v4561 = vsub.f32 %v4529, %v4347
      %v4562 = vsub.f32 %v4530, %v4347
      %v4563 = vsub.f32 %v4531, %v4347
      %v4564 = vsub.f32 %v4532, %v4347
      %v4565 = vsub.f32 %v4533, %v4347
      %v4566 = vsub.f32 %v4534, %v4347
      %v4567 = vsub.f32 %v4535, %v4347
      %v4568 = vsub.f32 %v4536, %v4347
      %v4569 = vsub.f32 %v4537, %v4347
      %v4570 = vsub.f32 %v4538, %v4347
      %v4571 = vsub.f32 %v4539, %v4347
      %v4572 = vsub.f32 %v4540, %v4347
      %v4573 = vsub.f32 %v4541, %v4347
      %v4574 = vsub.f32 %v4542, %v4347
      %v4575 = vsub.f32 %v4543, %v4347
      %v4576 = vsub.f32 %v4544, %v4347
      %v4577 = vsub.f32 %v4545, %v4347
      %v4578 = vmul.f32 %v4546, %v4546
      %v4579 = vmul.f32 %v4547, %v4547
      %v4580 = vmul.f32 %v4548, %v4548
      %v4581 = vmul.f32 %v4549, %v4549
      %v4582 = vmul.f32 %v4550, %v4550
      %v4583 = vmul.f32 %v4551, %v4551
      %v4584 = vmul.f32 %v4552, %v4552
      %v4585 = vmul.f32 %v4553, %v4553
      %v4586 = vmul.f32 %v4554, %v4554
      %v4587 = vmul.f32 %v4555, %v4555
      %v4588 = vmul.f32 %v4556, %v4556
      %v4589 = vmul.f32 %v4557, %v4557
      %v4590 = vmul.f32 %v4558, %v4558
      %v4591 = vmul.f32 %v4559, %v4559
      %v4592 = vmul.f32 %v4560, %v4560
      %v4593 = vmul.f32 %v4561, %v4561
      %v4594 = vmul.f32 %v4562, %v4562
      %v4595 = vmul.f32 %v4563, %v4563
      %v4596 = vmul.f32 %v4564, %v4564
      %v4597 = vmul.f32 %v4565, %v4565
      %v4598 = vmul.f32 %v4566, %v4566
      %v4599 = vmul.f32 %v4567, %v4567
      %v4600 = vmul.f32 %v4568, %v4568
      %v4601 = vmul.f32 %v4569, %v4569
      %v4602 = vmul.f32 %v4570, %v4570
      %v4603 = vmul.f32 %v4571, %v4571
      %v4604 = vmul.f32 %v4572, %v4572
      %v4605 = vmul.f32 %v4573, %v4573
      %v4606 = vmul.f32 %v4574, %v4574
      %v4607 = vmul.f32 %v4575, %v4575
      %v4608 = vmul.f32 %v4576, %v4576
      %v4609 = vmul.f32 %v4577, %v4577
      %v4610 = vsel %vm1304, %v4578, 0.0
      %v4611 = vsel %vm1304, %v4579, 0.0
      %v4612 = vadd.f32 %v4610, %v4611
      %v4613 = vsel %vm1304, %v4580, 0.0
      %v4614 = vadd.f32 %v4612, %v4613
      %v4615 = vsel %vm1304, %v4581, 0.0
      %v4616 = vadd.f32 %v4614, %v4615
      %v4617 = vsel %vm1304, %v4582, 0.0
      %v4618 = vadd.f32 %v4616, %v4617
      %v4619 = vsel %vm1304, %v4583, 0.0
      %v4620 = vadd.f32 %v4618, %v4619
      %v4621 = vsel %vm1304, %v4584, 0.0
      %v4622 = vadd.f32 %v4620, %v4621
      %v4623 = vsel %vm1304, %v4585, 0.0
      %v4624 = vadd.f32 %v4622, %v4623
      %v4625 = vsel %vm1304, %v4586, 0.0
      %v4626 = vadd.f32 %v4624, %v4625
      %v4627 = vsel %vm1304, %v4587, 0.0
      %v4628 = vadd.f32 %v4626, %v4627
      %v4629 = vsel %vm1304, %v4588, 0.0
      %v4630 = vadd.f32 %v4628, %v4629
      %v4631 = vsel %vm1304, %v4589, 0.0
      %v4632 = vadd.f32 %v4630, %v4631
      %v4633 = vsel %vm1304, %v4590, 0.0
      %v4634 = vadd.f32 %v4632, %v4633
      %v4635 = vsel %vm1304, %v4591, 0.0
      %v4636 = vadd.f32 %v4634, %v4635
      %v4637 = vsel %vm1304, %v4592, 0.0
      %v4638 = vadd.f32 %v4636, %v4637
      %v4639 = vsel %vm1304, %v4593, 0.0
      %v4640 = vadd.f32 %v4638, %v4639
      %v4641 = vsel %vm1304, %v4594, 0.0
      %v4642 = vadd.f32 %v4640, %v4641
      %v4643 = vsel %vm1304, %v4595, 0.0
      %v4644 = vadd.f32 %v4642, %v4643
      %v4645 = vsel %vm1304, %v4596, 0.0
      %v4646 = vadd.f32 %v4644, %v4645
      %v4647 = vsel %vm1304, %v4597, 0.0
      %v4648 = vadd.f32 %v4646, %v4647
      %v4649 = vsel %vm1304, %v4598, 0.0
      %v4650 = vadd.f32 %v4648, %v4649
      %v4651 = vsel %vm1304, %v4599, 0.0
      %v4652 = vadd.f32 %v4650, %v4651
      %v4653 = vsel %vm1304, %v4600, 0.0
      %v4654 = vadd.f32 %v4652, %v4653
      %v4655 = vsel %vm1304, %v4601, 0.0
      %v4656 = vadd.f32 %v4654, %v4655
      %v4657 = vsel %vm1304, %v4602, 0.0
      %v4658 = vadd.f32 %v4656, %v4657
      %v4659 = vsel %vm1304, %v4603, 0.0
      %v4660 = vadd.f32 %v4658, %v4659
      %v4661 = vsel %vm1304, %v4604, 0.0
      %v4662 = vadd.f32 %v4660, %v4661
      %v4663 = vsel %vm1304, %v4605, 0.0
      %v4664 = vadd.f32 %v4662, %v4663
      %v4665 = vsel %vm1304, %v4606, 0.0
      %v4666 = vadd.f32 %v4664, %v4665
      %v4667 = vsel %vm1304, %v4607, 0.0
      %v4668 = vadd.f32 %v4666, %v4667
      %v4669 = vsel %vm1304, %v4608, 0.0
      %v4670 = vadd.f32 %v4668, %v4669
      %v4671 = vsel %vm1304, %v4609, 0.0
      %v4672 = vadd.f32 %v4670, %v4671
      %v4673 = vrot.slane %v4672, 4
      %v4674 = vadd.f32 %v4672, %v4673
      %v4675 = vrot.slane %v4674, 2
      %v4676 = vadd.f32 %v4674, %v4675
      %v4677 = vrot.slane %v4676, 1
      %v4678 = vadd.f32 %v4676, %v4677
      %v4679 = vadd.f32 %v4513, %v4678
      %v4680 = vld [vmem:[%s3403] sm:$0xff]
      %v4681 = vld [vmem:[%s3403 + $0x8] sm:$0xff]
      %v4682 = vld [vmem:[%s3403 + $0x10] sm:$0xff]
      %v4683 = vld [vmem:[%s3403 + $0x18] sm:$0xff]
      %v4684 = vld [vmem:[%s3403 + $0x20] sm:$0xff]
      %v4685 = vld [vmem:[%s3403 + $0x28] sm:$0xff]
      %v4686 = vld [vmem:[%s3403 + $0x30] sm:$0xff]
      %v4687 = vld [vmem:[%s3403 + $0x38] sm:$0xff]
      %v4688 = vld [vmem:[%s3403 + $0x40] sm:$0xff]
      %v4689 = vld [vmem:[%s3403 + $0x48] sm:$0xff]
      %v4690 = vld [vmem:[%s3403 + $0x50] sm:$0xff]
      %v4691 = vld [vmem:[%s3403 + $0x58] sm:$0xff]
      %v4692 = vld [vmem:[%s3403 + $0x60] sm:$0xff]
      %v4693 = vld [vmem:[%s3403 + $0x68] sm:$0xff]
      %v4694 = vld [vmem:[%s3403 + $0x70] sm:$0xff]
      %v4695 = vld [vmem:[%s3403 + $0x78] sm:$0xff]
      %v4696 = vld [vmem:[%s3403 + $0x80] sm:$0xff]
      %v4697 = vld [vmem:[%s3403 + $0x88] sm:$0xff]
      %v4698 = vld [vmem:[%s3403 + $0x90] sm:$0xff]
      %v4699 = vld [vmem:[%s3403 + $0x98] sm:$0xff]
      %v4700 = vld [vmem:[%s3403 + $0xa0] sm:$0xff]
      %v4701 = vld [vmem:[%s3403 + $0xa8] sm:$0xff]
      %v4702 = vld [vmem:[%s3403 + $0xb0] sm:$0xff]
      %v4703 = vld [vmem:[%s3403 + $0xb8] sm:$0xff]
      %v4704 = vld [vmem:[%s3403 + $0xc0] sm:$0xff]
      %v4705 = vld [vmem:[%s3403 + $0xc8] sm:$0xff]
      %v4706 = vld [vmem:[%s3403 + $0xd0] sm:$0xff]
      %v4707 = vld [vmem:[%s3403 + $0xd8] sm:$0xff]
      %v4708 = vld [vmem:[%s3403 + $0xe0] sm:$0xff]
      %v4709 = vld [vmem:[%s3403 + $0xe8] sm:$0xff]
      %v4710 = vld [vmem:[%s3403 + $0xf0] sm:$0xff]
      %v4711 = vld [vmem:[%s3403 + $0xf8] sm:$0xff]
      %v4712 = vsub.f32 %v4680, %v4347
      %v4713 = vsub.f32 %v4681, %v4347
      %v4714 = vsub.f32 %v4682, %v4347
      %v4715 = vsub.f32 %v4683, %v4347
      %v4716 = vsub.f32 %v4684, %v4347
      %v4717 = vsub.f32 %v4685, %v4347
      %v4718 = vsub.f32 %v4686, %v4347
      %v4719 = vsub.f32 %v4687, %v4347
      %v4720 = vsub.f32 %v4688, %v4347
      %v4721 = vsub.f32 %v4689, %v4347
      %v4722 = vsub.f32 %v4690, %v4347
      %v4723 = vsub.f32 %v4691, %v4347
      %v4724 = vsub.f32 %v4692, %v4347
      %v4725 = vsub.f32 %v4693, %v4347
      %v4726 = vsub.f32 %v4694, %v4347
      %v4727 = vsub.f32 %v4695, %v4347
      %v4728 = vsub.f32 %v4696, %v4347
      %v4729 = vsub.f32 %v4697, %v4347
      %v4730 = vsub.f32 %v4698, %v4347
      %v4731 = vsub.f32 %v4699, %v4347
      %v4732 = vsub.f32 %v4700, %v4347
      %v4733 = vsub.f32 %v4701, %v4347
      %v4734 = vsub.f32 %v4702, %v4347
      %v4735 = vsub.f32 %v4703, %v4347
      %v4736 = vsub.f32 %v4704, %v4347
      %v4737 = vsub.f32 %v4705, %v4347
      %v4738 = vsub.f32 %v4706, %v4347
      %v4739 = vsub.f32 %v4707, %v4347
      %v4740 = vsub.f32 %v4708, %v4347
      %v4741 = vsub.f32 %v4709, %v4347
      %v4742 = vsub.f32 %v4710, %v4347
      %v4743 = vsub.f32 %v4711, %v4347
      %v4744 = vmul.f32 %v4712, %v4712
      %v4745 = vmul.f32 %v4713, %v4713
      %v4746 = vmul.f32 %v4714, %v4714
      %v4747 = vmul.f32 %v4715, %v4715
      %v4748 = vmul.f32 %v4716, %v4716
      %v4749 = vmul.f32 %v4717, %v4717
      %v4750 = vmul.f32 %v4718, %v4718
      %v4751 = vmul.f32 %v4719, %v4719
      %v4752 = vmul.f32 %v4720, %v4720
      %v4753 = vmul.f32 %v4721, %v4721
      %v4754 = vmul.f32 %v4722, %v4722
      %v4755 = vmul.f32 %v4723, %v4723
      %v4756 = vmul.f32 %v4724, %v4724
      %v4757 = vmul.f32 %v4725, %v4725
      %v4758 = vmul.f32 %v4726, %v4726
      %v4759 = vmul.f32 %v4727, %v4727
      %v4760 = vmul.f32 %v4728, %v4728
      %v4761 = vmul.f32 %v4729, %v4729
      %v4762 = vmul.f32 %v4730, %v4730
      %v4763 = vmul.f32 %v4731, %v4731
      %v4764 = vmul.f32 %v4732, %v4732
      %v4765 = vmul.f32 %v4733, %v4733
      %v4766 = vmul.f32 %v4734, %v4734
      %v4767 = vmul.f32 %v4735, %v4735
      %v4768 = vmul.f32 %v4736, %v4736
      %v4769 = vmul.f32 %v4737, %v4737
      %v4770 = vmul.f32 %v4738, %v4738
      %v4771 = vmul.f32 %v4739, %v4739
      %v4772 = vmul.f32 %v4740, %v4740
      %v4773 = vmul.f32 %v4741, %v4741
      %v4774 = vmul.f32 %v4742, %v4742
      %v4775 = vmul.f32 %v4743, %v4743
      %v4776 = vsel %vm1304, %v4744, 0.0
      %v4777 = vsel %vm1304, %v4745, 0.0
      %v4778 = vadd.f32 %v4776, %v4777
      %v4779 = vsel %vm1304, %v4746, 0.0
      %v4780 = vadd.f32 %v4778, %v4779
      %v4781 = vsel %vm1304, %v4747, 0.0
      %v4782 = vadd.f32 %v4780, %v4781
      %v4783 = vsel %vm1304, %v4748, 0.0
      %v4784 = vadd.f32 %v4782, %v4783
      %v4785 = vsel %vm1304, %v4749, 0.0
      %v4786 = vadd.f32 %v4784, %v4785
      %v4787 = vsel %vm1304, %v4750, 0.0
      %v4788 = vadd.f32 %v4786, %v4787
      %v4789 = vsel %vm1304, %v4751, 0.0
      %v4790 = vadd.f32 %v4788, %v4789
      %v4791 = vsel %vm1304, %v4752, 0.0
      %v4792 = vadd.f32 %v4790, %v4791
      %v4793 = vsel %vm1304, %v4753, 0.0
      %v4794 = vadd.f32 %v4792, %v4793
      %v4795 = vsel %vm1304, %v4754, 0.0
      %v4796 = vadd.f32 %v4794, %v4795
      %v4797 = vsel %vm1304, %v4755, 0.0
      %v4798 = vadd.f32 %v4796, %v4797
      %v4799 = vsel %vm1304, %v4756, 0.0
      %v4800 = vadd.f32 %v4798, %v4799
      %v4801 = vsel %vm1304, %v4757, 0.0
      %v4802 = vadd.f32 %v4800, %v4801
      %v4803 = vsel %vm1304, %v4758, 0.0
      %v4804 = vadd.f32 %v4802, %v4803
      %v4805 = vsel %vm1304, %v4759, 0.0
      %v4806 = vadd.f32 %v4804, %v4805
      %v4807 = vsel %vm1304, %v4760, 0.0
      %v4808 = vadd.f32 %v4806, %v4807
      %v4809 = vsel %vm1304, %v4761, 0.0
      %v4810 = vadd.f32 %v4808, %v4809
      %v4811 = vsel %vm1304, %v4762, 0.0
      %v4812 = vadd.f32 %v4810, %v4811
      %v4813 = vsel %vm1304, %v4763, 0.0
      %v4814 = vadd.f32 %v4812, %v4813
      %v4815 = vsel %vm1304, %v4764, 0.0
      %v4816 = vadd.f32 %v4814, %v4815
      %v4817 = vsel %vm1304, %v4765, 0.0
      %v4818 = vadd.f32 %v4816, %v4817
      %v4819 = vsel %vm1304, %v4766, 0.0
      %v4820 = vadd.f32 %v4818, %v4819
      %v4821 = vsel %vm1304, %v4767, 0.0
      %v4822 = vadd.f32 %v4820, %v4821
      %v4823 = vsel %vm1304, %v4768, 0.0
      %v4824 = vadd.f32 %v4822, %v4823
      %v4825 = vsel %vm1304, %v4769, 0.0
      %v4826 = vadd.f32 %v4824, %v4825
      %v4827 = vsel %vm1304, %v4770, 0.0
      %v4828 = vadd.f32 %v4826, %v4827
      %v4829 = vsel %vm1304, %v4771, 0.0
      %v4830 = vadd.f32 %v4828, %v4829
      %v4831 = vsel %vm1304, %v4772, 0.0
      %v4832 = vadd.f32 %v4830, %v4831
      %v4833 = vsel %vm1304, %v4773, 0.0
      %v4834 = vadd.f32 %v4832, %v4833
      %v4835 = vsel %vm1304, %v4774, 0.0
      %v4836 = vadd.f32 %v4834, %v4835
      %v4837 = vsel %vm1304, %v4775, 0.0
      %v4838 = vadd.f32 %v4836, %v4837
      %v4839 = vrot.slane %v4838, 4
      %v4840 = vadd.f32 %v4838, %v4839
      %v4841 = vrot.slane %v4840, 2
      %v4842 = vadd.f32 %v4840, %v4841
      %v4843 = vrot.slane %v4842, 1
      %v4844 = vadd.f32 %v4842, %v4843
      %v4845 = vadd.f32 %v4679, %v4844
      %v4846 = vld [vmem:[%s4244] sm:$0xff]
      %v4847 = vld [vmem:[%s4244 + $0x8] sm:$0xff]
      %v4848 = vld [vmem:[%s4244 + $0x10] sm:$0xff]
      %v4849 = vld [vmem:[%s4244 + $0x18] sm:$0xff]
      %v4850 = vld [vmem:[%s4244 + $0x20] sm:$0xff]
      %v4851 = vld [vmem:[%s4244 + $0x28] sm:$0xff]
      %v4852 = vld [vmem:[%s4244 + $0x30] sm:$0xff]
      %v4853 = vld [vmem:[%s4244 + $0x38] sm:$0xff]
      %v4854 = vld [vmem:[%s4244 + $0x40] sm:$0xff]
      %v4855 = vld [vmem:[%s4244 + $0x48] sm:$0xff]
      %v4856 = vld [vmem:[%s4244 + $0x50] sm:$0xff]
      %v4857 = vld [vmem:[%s4244 + $0x58] sm:$0xff]
      %v4858 = vld [vmem:[%s4244 + $0x60] sm:$0xff]
      %v4859 = vld [vmem:[%s4244 + $0x68] sm:$0xff]
      %v4860 = vld [vmem:[%s4244 + $0x70] sm:$0xff]
      %v4861 = vld [vmem:[%s4244 + $0x78] sm:$0xff]
      %v4862 = vld [vmem:[%s4244 + $0x80] sm:$0xff]
      %v4863 = vld [vmem:[%s4244 + $0x88] sm:$0xff]
      %v4864 = vld [vmem:[%s4244 + $0x90] sm:$0xff]
      %v4865 = vld [vmem:[%s4244 + $0x98] sm:$0xff]
      %v4866 = vld [vmem:[%s4244 + $0xa0] sm:$0xff]
      %v4867 = vld [vmem:[%s4244 + $0xa8] sm:$0xff]
      %v4868 = vld [vmem:[%s4244 + $0xb0] sm:$0xff]
      %v4869 = vld [vmem:[%s4244 + $0xb8] sm:$0xff]
      %v4870 = vld [vmem:[%s4244 + $0xc0] sm:$0xff]
      %v4871 = vld [vmem:[%s4244 + $0xc8] sm:$0xff]
      %v4872 = vld [vmem:[%s4244 + $0xd0] sm:$0xff]
      %v4873 = vld [vmem:[%s4244 + $0xd8] sm:$0xff]
      %v4874 = vld [vmem:[%s4244 + $0xe0] sm:$0xff]
      %v4875 = vld [vmem:[%s4244 + $0xe8] sm:$0xff]
      %v4876 = vld [vmem:[%s4244 + $0xf0] sm:$0xff]
      %v4877 = vld [vmem:[%s4244 + $0xf8] sm:$0xff]
      %v4878 = vsub.f32 %v4846, %v4347
      %v4879 = vsub.f32 %v4847, %v4347
      %v4880 = vsub.f32 %v4848, %v4347
      %v4881 = vsub.f32 %v4849, %v4347
      %v4882 = vsub.f32 %v4850, %v4347
      %v4883 = vsub.f32 %v4851, %v4347
      %v4884 = vsub.f32 %v4852, %v4347
      %v4885 = vsub.f32 %v4853, %v4347
      %v4886 = vsub.f32 %v4854, %v4347
      %v4887 = vsub.f32 %v4855, %v4347
      %v4888 = vsub.f32 %v4856, %v4347
      %v4889 = vsub.f32 %v4857, %v4347
      %v4890 = vsub.f32 %v4858, %v4347
      %v4891 = vsub.f32 %v4859, %v4347
      %v4892 = vsub.f32 %v4860, %v4347
      %v4893 = vsub.f32 %v4861, %v4347
      %v4894 = vsub.f32 %v4862, %v4347
      %v4895 = vsub.f32 %v4863, %v4347
      %v4896 = vsub.f32 %v4864, %v4347
      %v4897 = vsub.f32 %v4865, %v4347
      %v4898 = vsub.f32 %v4866, %v4347
      %v4899 = vsub.f32 %v4867, %v4347
      %v4900 = vsub.f32 %v4868, %v4347
      %v4901 = vsub.f32 %v4869, %v4347
      %v4902 = vsub.f32 %v4870, %v4347
      %v4903 = vsub.f32 %v4871, %v4347
      %v4904 = vsub.f32 %v4872, %v4347
      %v4905 = vsub.f32 %v4873, %v4347
      %v4906 = vsub.f32 %v4874, %v4347
      %v4907 = vsub.f32 %v4875, %v4347
      %v4908 = vsub.f32 %v4876, %v4347
      %v4909 = vsub.f32 %v4877, %v4347
      %v4910 = vmul.f32 %v4878, %v4878
      %v4911 = vmul.f32 %v4879, %v4879
      %v4912 = vmul.f32 %v4880, %v4880
      %v4913 = vmul.f32 %v4881, %v4881
      %v4914 = vmul.f32 %v4882, %v4882
      %v4915 = vmul.f32 %v4883, %v4883
      %v4916 = vmul.f32 %v4884, %v4884
      %v4917 = vmul.f32 %v4885, %v4885
      %v4918 = vmul.f32 %v4886, %v4886
      %v4919 = vmul.f32 %v4887, %v4887
      %v4920 = vmul.f32 %v4888, %v4888
      %v4921 = vmul.f32 %v4889, %v4889
      %v4922 = vmul.f32 %v4890, %v4890
      %v4923 = vmul.f32 %v4891, %v4891
      %v4924 = vmul.f32 %v4892, %v4892
      %v4925 = vmul.f32 %v4893, %v4893
      %v4926 = vmul.f32 %v4894, %v4894
      %v4927 = vmul.f32 %v4895, %v4895
      %v4928 = vmul.f32 %v4896, %v4896
      %v4929 = vmul.f32 %v4897, %v4897
      %v4930 = vmul.f32 %v4898, %v4898
      %v4931 = vmul.f32 %v4899, %v4899
      %v4932 = vmul.f32 %v4900, %v4900
      %v4933 = vmul.f32 %v4901, %v4901
      %v4934 = vmul.f32 %v4902, %v4902
      %v4935 = vmul.f32 %v4903, %v4903
      %v4936 = vmul.f32 %v4904, %v4904
      %v4937 = vmul.f32 %v4905, %v4905
      %v4938 = vmul.f32 %v4906, %v4906
      %v4939 = vmul.f32 %v4907, %v4907
      %v4940 = vmul.f32 %v4908, %v4908
      %v4941 = vmul.f32 %v4909, %v4909
      %v4942 = vsel %vm1304, %v4910, 0.0
      %v4943 = vsel %vm1304, %v4911, 0.0
      %v4944 = vadd.f32 %v4942, %v4943
      %v4945 = vsel %vm1304, %v4912, 0.0
      %v4946 = vadd.f32 %v4944, %v4945
      %v4947 = vsel %vm1304, %v4913, 0.0
      %v4948 = vadd.f32 %v4946, %v4947
      %v4949 = vsel %vm1304, %v4914, 0.0
      %v4950 = vadd.f32 %v4948, %v4949
      %v4951 = vsel %vm1304, %v4915, 0.0
      %v4952 = vadd.f32 %v4950, %v4951
      %v4953 = vsel %vm1304, %v4916, 0.0
      %v4954 = vadd.f32 %v4952, %v4953
      %v4955 = vsel %vm1304, %v4917, 0.0
      %v4956 = vadd.f32 %v4954, %v4955
      %v4957 = vsel %vm1304, %v4918, 0.0
      %v4958 = vadd.f32 %v4956, %v4957
      %v4959 = vsel %vm1304, %v4919, 0.0
      %v4960 = vadd.f32 %v4958, %v4959
      %v4961 = vsel %vm1304, %v4920, 0.0
      %v4962 = vadd.f32 %v4960, %v4961
      %v4963 = vsel %vm1304, %v4921, 0.0
      %v4964 = vadd.f32 %v4962, %v4963
      %v4965 = vsel %vm1304, %v4922, 0.0
      %v4966 = vadd.f32 %v4964, %v4965
      %v4967 = vsel %vm1304, %v4923, 0.0
      %v4968 = vadd.f32 %v4966, %v4967
      %v4969 = vsel %vm1304, %v4924, 0.0
      %v4970 = vadd.f32 %v4968, %v4969
      %v4971 = vsel %vm1304, %v4925, 0.0
      %v4972 = vadd.f32 %v4970, %v4971
      %v4973 = vsel %vm1304, %v4926, 0.0
      %v4974 = vadd.f32 %v4972, %v4973
      %v4975 = vsel %vm1304, %v4927, 0.0
      %v4976 = vadd.f32 %v4974, %v4975
      %v4977 = vsel %vm1304, %v4928, 0.0
      %v4978 = vadd.f32 %v4976, %v4977
      %v4979 = vsel %vm1304, %v4929, 0.0
      %v4980 = vadd.f32 %v4978, %v4979
      %v4981 = vsel %vm1304, %v4930, 0.0
      %v4982 = vadd.f32 %v4980, %v4981
      %v4983 = vsel %vm1304, %v4931, 0.0
      %v4984 = vadd.f32 %v4982, %v4983
      %v4985 = vsel %vm1304, %v4932, 0.0
      %v4986 = vadd.f32 %v4984, %v4985
      %v4987 = vsel %vm1304, %v4933, 0.0
      %v4988 = vadd.f32 %v4986, %v4987
      %v4989 = vsel %vm1304, %v4934, 0.0
      %v4990 = vadd.f32 %v4988, %v4989
      %v4991 = vsel %vm1304, %v4935, 0.0
      %v4992 = vadd.f32 %v4990, %v4991
      %v4993 = vsel %vm1304, %v4936, 0.0
      %v4994 = vadd.f32 %v4992, %v4993
      %v4995 = vsel %vm1304, %v4937, 0.0
      %v4996 = vadd.f32 %v4994, %v4995
      %v4997 = vsel %vm1304, %v4938, 0.0
      %v4998 = vadd.f32 %v4996, %v4997
      %v4999 = vsel %vm1304, %v4939, 0.0
      %v5000 = vadd.f32 %v4998, %v4999
      %v5001 = vsel %vm1304, %v4940, 0.0
      %v5002 = vadd.f32 %v5000, %v5001
      %v5003 = vsel %vm1304, %v4941, 0.0
      %v5004 = vadd.f32 %v5002, %v5003
      %v5005 = vrot.slane %v5004, 4
      %v5006 = vadd.f32 %v5004, %v5005
      %v5007 = vrot.slane %v5006, 2
      %v5008 = vadd.f32 %v5006, %v5007
      %v5009 = vrot.slane %v5008, 1
      %v5010 = vadd.f32 %v5008, %v5009
      %v5011 = vadd.f32 %v4845, %v5010
      %v5012 = vmul.f32 %v5011, 0.0009765625
      %v5013 = vadd.f32 %v5012, 1e-05
      %v5014 = vrsqrt.pop %v5013
      %v5015 = vmul.f32 %v5014, %v5013
      %v5016 = vmul.f32 %v5015, %v5014
      %v5017 = vmul.f32 0.5, %v5016
      %v5018 = vsub.f32 1.5, %v5017
      %v5019 = vmul.f32 %v5014, %v5018
      %vm5020 = vweird.f32 %v5013
      %vm5021 = vweird.f32 %v5014
      %vm5022 = vmor %vm5020, %vm5021
      %v5023 = vsel %vm5022, %v5014, %v5019
      %v5024 = vmul.f32 %v4380, %v5023
      %v5025 = vmul.f32 %v4381, %v5023
      %v5026 = vmul.f32 %v4382, %v5023
      %v5027 = vmul.f32 %v4383, %v5023
      %v5028 = vmul.f32 %v4384, %v5023
      %v5029 = vmul.f32 %v4385, %v5023
      %v5030 = vmul.f32 %v4386, %v5023
      %v5031 = vmul.f32 %v4387, %v5023
      %v5032 = vmul.f32 %v4388, %v5023
      %v5033 = vmul.f32 %v4389, %v5023
      %v5034 = vmul.f32 %v4390, %v5023
      %v5035 = vmul.f32 %v4391, %v5023
      %v5036 = vmul.f32 %v4392, %v5023
      %v5037 = vmul.f32 %v4393, %v5023
      %v5038 = vmul.f32 %v4394, %v5023
      %v5039 = vmul.f32 %v4395, %v5023
      %v5040 = vmul.f32 %v4396, %v5023
      %v5041 = vmul.f32 %v4397, %v5023
      %v5042 = vmul.f32 %v4398, %v5023
      %v5043 = vmul.f32 %v4399, %v5023
      %v5044 = vmul.f32 %v4400, %v5023
      %v5045 = vmul.f32 %v4401, %v5023
      %v5046 = vmul.f32 %v4402, %v5023
      %v5047 = vmul.f32 %v4403, %v5023
      %v5048 = vmul.f32 %v4404, %v5023
      %v5049 = vmul.f32 %v4405, %v5023
      %v5050 = vmul.f32 %v4406, %v5023
      %v5051 = vmul.f32 %v4407, %v5023
      %v5052 = vmul.f32 %v4408, %v5023
      %v5053 = vmul.f32 %v4409, %v5023
      %v5054 = vmul.f32 %v4410, %v5023
      %v5055 = vmul.f32 %v4411, %v5023
      %v5056 = vmax.f32 %v5024, 0.0
      %v5057 = vmax.f32 %v5025, 0.0
      %v5058 = vmax.f32 %v5026, 0.0
      %v5059 = vmax.f32 %v5027, 0.0
      %v5060 = vmax.f32 %v5028, 0.0
      %v5061 = vmax.f32 %v5029, 0.0
      %v5062 = vmax.f32 %v5030, 0.0
      %v5063 = vmax.f32 %v5031, 0.0
      %v5064 = vmax.f32 %v5032, 0.0
      %v5065 = vmax.f32 %v5033, 0.0
      %v5066 = vmax.f32 %v5034, 0.0
      %v5067 = vmax.f32 %v5035, 0.0
      %v5068 = vmax.f32 %v5036, 0.0
      %v5069 = vmax.f32 %v5037, 0.0
      %v5070 = vmax.f32 %v5038, 0.0
      %v5071 = vmax.f32 %v5039, 0.0
      %v5072 = vmax.f32 %v5040, 0.0
      %v5073 = vmax.f32 %v5041, 0.0
      %v5074 = vmax.f32 %v5042, 0.0
      %v5075 = vmax.f32 %v5043, 0.0
      %v5076 = vmax.f32 %v5044, 0.0
      %v5077 = vmax.f32 %v5045, 0.0
      %v5078 = vmax.f32 %v5046, 0.0
      %v5079 = vmax.f32 %v5047, 0.0
      %v5080 = vmax.f32 %v5048, 0.0
      %v5081 = vmax.f32 %v5049, 0.0
      %v5082 = vmax.f32 %v5050, 0.0
      %v5083 = vmax.f32 %v5051, 0.0
      %v5084 = vmax.f32 %v5052, 0.0
      %v5085 = vmax.f32 %v5053, 0.0
      %v5086 = vmax.f32 %v5054, 0.0
      %v5087 = vmax.f32 %v5055, 0.0
      %5088 = vst.msk [vmem:[%s143] sm:$0xff] %vm1304, %v5056
      %5089 = vst.msk [vmem:[%s143 + $0x8] sm:$0xff] %vm1304, %v5057
      %5090 = vst.msk [vmem:[%s143 + $0x10] sm:$0xff] %vm1304, %v5058
      %5091 = vst.msk [vmem:[%s143 + $0x18] sm:$0xff] %vm1304, %v5059
      %5092 = vst.msk [vmem:[%s143 + $0x20] sm:$0xff] %vm1304, %v5060
      %5093 = vst.msk [vmem:[%s143 + $0x28] sm:$0xff] %vm1304, %v5061
      %5094 = vst.msk [vmem:[%s143 + $0x30] sm:$0xff] %vm1304, %v5062
      %5095 = vst.msk [vmem:[%s143 + $0x38] sm:$0xff] %vm1304, %v5063
      %5096 = vst.msk [vmem:[%s143 + $0x40] sm:$0xff] %vm1304, %v5064
      %5097 = vst.msk [vmem:[%s143 + $0x48] sm:$0xff] %vm1304, %v5065
      %5098 = vst.msk [vmem:[%s143 + $0x50] sm:$0xff] %vm1304, %v5066
      %5099 = vst.msk [vmem:[%s143 + $0x58] sm:$0xff] %vm1304, %v5067
      %5100 = vst.msk [vmem:[%s143 + $0x60] sm:$0xff] %vm1304, %v5068
      %5101 = vst.msk [vmem:[%s143 + $0x68] sm:$0xff] %vm1304, %v5069
      %5102 = vst.msk [vmem:[%s143 + $0x70] sm:$0xff] %vm1304, %v5070
      %5103 = vst.msk [vmem:[%s143 + $0x78] sm:$0xff] %vm1304, %v5071
      %5104 = vst.msk [vmem:[%s143 + $0x80] sm:$0xff] %vm1304, %v5072
      %5105 = vst.msk [vmem:[%s143 + $0x88] sm:$0xff] %vm1304, %v5073
      %5106 = vst.msk [vmem:[%s143 + $0x90] sm:$0xff] %vm1304, %v5074
      %5107 = vst.msk [vmem:[%s143 + $0x98] sm:$0xff] %vm1304, %v5075
      %5108 = vst.msk [vmem:[%s143 + $0xa0] sm:$0xff] %vm1304, %v5076
      %5109 = vst.msk [vmem:[%s143 + $0xa8] sm:$0xff] %vm1304, %v5077
      %5110 = vst.msk [vmem:[%s143 + $0xb0] sm:$0xff] %vm1304, %v5078
      %5111 = vst.msk [vmem:[%s143 + $0xb8] sm:$0xff] %vm1304, %v5079
      %5112 = vst.msk [vmem:[%s143 + $0xc0] sm:$0xff] %vm1304, %v5080
      %5113 = vst.msk [vmem:[%s143 + $0xc8] sm:$0xff] %vm1304, %v5081
      %5114 = vst.msk [vmem:[%s143 + $0xd0] sm:$0xff] %vm1304, %v5082
      %5115 = vst.msk [vmem:[%s143 + $0xd8] sm:$0xff] %vm1304, %v5083
      %5116 = vst.msk [vmem:[%s143 + $0xe0] sm:$0xff] %vm1304, %v5084
      %5117 = vst.msk [vmem:[%s143 + $0xe8] sm:$0xff] %vm1304, %v5085
      %5118 = vst.msk [vmem:[%s143 + $0xf0] sm:$0xff] %vm1304, %v5086
      %5119 = vst.msk [vmem:[%s143 + $0xf8] sm:$0xff] %vm1304, %v5087
      %v5120 = vld [vmem:[%s2145] sm:$0xff]
      %v5121 = vld [vmem:[%s2145 + $0x8] sm:$0xff]
      %v5122 = vld [vmem:[%s2145 + $0x10] sm:$0xff]
      %v5123 = vld [vmem:[%s2145 + $0x18] sm:$0xff]
      %v5124 = vld [vmem:[%s2145 + $0x20] sm:$0xff]
      %v5125 = vld [vmem:[%s2145 + $0x28] sm:$0xff]
      %v5126 = vld [vmem:[%s2145 + $0x30] sm:$0xff]
      %v5127 = vld [vmem:[%s2145 + $0x38] sm:$0xff]
      %v5128 = vld [vmem:[%s2145 + $0x40] sm:$0xff]
      %v5129 = vld [vmem:[%s2145 + $0x48] sm:$0xff]
      %v5130 = vld [vmem:[%s2145 + $0x50] sm:$0xff]
      %v5131 = vld [vmem:[%s2145 + $0x58] sm:$0xff]
      %v5132 = vld [vmem:[%s2145 + $0x60] sm:$0xff]
      %v5133 = vld [vmem:[%s2145 + $0x68] sm:$0xff]
      %v5134 = vld [vmem:[%s2145 + $0x70] sm:$0xff]
      %v5135 = vld [vmem:[%s2145 + $0x78] sm:$0xff]
      %v5136 = vld [vmem:[%s2145 + $0x80] sm:$0xff]
      %v5137 = vld [vmem:[%s2145 + $0x88] sm:$0xff]
      %v5138 = vld [vmem:[%s2145 + $0x90] sm:$0xff]
      %v5139 = vld [vmem:[%s2145 + $0x98] sm:$0xff]
      %v5140 = vld [vmem:[%s2145 + $0xa0] sm:$0xff]
      %v5141 = vld [vmem:[%s2145 + $0xa8] sm:$0xff]
      %v5142 = vld [vmem:[%s2145 + $0xb0] sm:$0xff]
      %v5143 = vld [vmem:[%s2145 + $0xb8] sm:$0xff]
      %v5144 = vld [vmem:[%s2145 + $0xc0] sm:$0xff]
      %v5145 = vld [vmem:[%s2145 + $0xc8] sm:$0xff]
      %v5146 = vld [vmem:[%s2145 + $0xd0] sm:$0xff]
      %v5147 = vld [vmem:[%s2145 + $0xd8] sm:$0xff]
      %v5148 = vld [vmem:[%s2145 + $0xe0] sm:$0xff]
      %v5149 = vld [vmem:[%s2145 + $0xe8] sm:$0xff]
      %v5150 = vld [vmem:[%s2145 + $0xf0] sm:$0xff]
      %v5151 = vld [vmem:[%s2145 + $0xf8] sm:$0xff]
      %v5152 = vsub.f32 %v5120, %v4347
      %v5153 = vsub.f32 %v5121, %v4347
      %v5154 = vsub.f32 %v5122, %v4347
      %v5155 = vsub.f32 %v5123, %v4347
      %v5156 = vsub.f32 %v5124, %v4347
      %v5157 = vsub.f32 %v5125, %v4347
      %v5158 = vsub.f32 %v5126, %v4347
      %v5159 = vsub.f32 %v5127, %v4347
      %v5160 = vsub.f32 %v5128, %v4347
      %v5161 = vsub.f32 %v5129, %v4347
      %v5162 = vsub.f32 %v5130, %v4347
      %v5163 = vsub.f32 %v5131, %v4347
      %v5164 = vsub.f32 %v5132, %v4347
      %v5165 = vsub.f32 %v5133, %v4347
      %v5166 = vsub.f32 %v5134, %v4347
      %v5167 = vsub.f32 %v5135, %v4347
      %v5168 = vsub.f32 %v5136, %v4347
      %v5169 = vsub.f32 %v5137, %v4347
      %v5170 = vsub.f32 %v5138, %v4347
      %v5171 = vsub.f32 %v5139, %v4347
      %v5172 = vsub.f32 %v5140, %v4347
      %v5173 = vsub.f32 %v5141, %v4347
      %v5174 = vsub.f32 %v5142, %v4347
      %v5175 = vsub.f32 %v5143, %v4347
      %v5176 = vsub.f32 %v5144, %v4347
      %v5177 = vsub.f32 %v5145, %v4347
      %v5178 = vsub.f32 %v5146, %v4347
      %v5179 = vsub.f32 %v5147, %v4347
      %v5180 = vsub.f32 %v5148, %v4347
      %v5181 = vsub.f32 %v5149, %v4347
      %v5182 = vsub.f32 %v5150, %v4347
      %v5183 = vsub.f32 %v5151, %v4347
      %v5184 = vmul.f32 %v5152, %v5023
      %v5185 = vmul.f32 %v5153, %v5023
      %v5186 = vmul.f32 %v5154, %v5023
      %v5187 = vmul.f32 %v5155, %v5023
      %v5188 = vmul.f32 %v5156, %v5023
      %v5189 = vmul.f32 %v5157, %v5023
      %v5190 = vmul.f32 %v5158, %v5023
      %v5191 = vmul.f32 %v5159, %v5023
      %v5192 = vmul.f32 %v5160, %v5023
      %v5193 = vmul.f32 %v5161, %v5023
      %v5194 = vmul.f32 %v5162, %v5023
      %v5195 = vmul.f32 %v5163, %v5023
      %v5196 = vmul.f32 %v5164, %v5023
      %v5197 = vmul.f32 %v5165, %v5023
      %v5198 = vmul.f32 %v5166, %v5023
      %v5199 = vmul.f32 %v5167, %v5023
      %v5200 = vmul.f32 %v5168, %v5023
      %v5201 = vmul.f32 %v5169, %v5023
      %v5202 = vmul.f32 %v5170, %v5023
      %v5203 = vmul.f32 %v5171, %v5023
      %v5204 = vmul.f32 %v5172, %v5023
      %v5205 = vmul.f32 %v5173, %v5023
      %v5206 = vmul.f32 %v5174, %v5023
      %v5207 = vmul.f32 %v5175, %v5023
      %v5208 = vmul.f32 %v5176, %v5023
      %v5209 = vmul.f32 %v5177, %v5023
      %v5210 = vmul.f32 %v5178, %v5023
      %v5211 = vmul.f32 %v5179, %v5023
      %v5212 = vmul.f32 %v5180, %v5023
      %v5213 = vmul.f32 %v5181, %v5023
      %v5214 = vmul.f32 %v5182, %v5023
      %v5215 = vmul.f32 %v5183, %v5023
      %v5216 = vmax.f32 %v5184, 0.0
      %v5217 = vmax.f32 %v5185, 0.0
      %v5218 = vmax.f32 %v5186, 0.0
      %v5219 = vmax.f32 %v5187, 0.0
      %v5220 = vmax.f32 %v5188, 0.0
      %v5221 = vmax.f32 %v5189, 0.0
      %v5222 = vmax.f32 %v5190, 0.0
      %v5223 = vmax.f32 %v5191, 0.0
      %v5224 = vmax.f32 %v5192, 0.0
      %v5225 = vmax.f32 %v5193, 0.0
      %v5226 = vmax.f32 %v5194, 0.0
      %v5227 = vmax.f32 %v5195, 0.0
      %v5228 = vmax.f32 %v5196, 0.0
      %v5229 = vmax.f32 %v5197, 0.0
      %v5230 = vmax.f32 %v5198, 0.0
      %v5231 = vmax.f32 %v5199, 0.0
      %v5232 = vmax.f32 %v5200, 0.0
      %v5233 = vmax.f32 %v5201, 0.0
      %v5234 = vmax.f32 %v5202, 0.0
      %v5235 = vmax.f32 %v5203, 0.0
      %v5236 = vmax.f32 %v5204, 0.0
      %v5237 = vmax.f32 %v5205, 0.0
      %v5238 = vmax.f32 %v5206, 0.0
      %v5239 = vmax.f32 %v5207, 0.0
      %v5240 = vmax.f32 %v5208, 0.0
      %v5241 = vmax.f32 %v5209, 0.0
      %v5242 = vmax.f32 %v5210, 0.0
      %v5243 = vmax.f32 %v5211, 0.0
      %v5244 = vmax.f32 %v5212, 0.0
      %v5245 = vmax.f32 %v5213, 0.0
      %v5246 = vmax.f32 %v5214, 0.0
      %v5247 = vmax.f32 %v5215, 0.0
      %5248 = vst.msk [vmem:[%s2145] sm:$0xff] %vm1304, %v5216
      %5249 = vst.msk [vmem:[%s2145 + $0x8] sm:$0xff] %vm1304, %v5217
      %5250 = vst.msk [vmem:[%s2145 + $0x10] sm:$0xff] %vm1304, %v5218
      %5251 = vst.msk [vmem:[%s2145 + $0x18] sm:$0xff] %vm1304, %v5219
      %5252 = vst.msk [vmem:[%s2145 + $0x20] sm:$0xff] %vm1304, %v5220
      %5253 = vst.msk [vmem:[%s2145 + $0x28] sm:$0xff] %vm1304, %v5221
      %5254 = vst.msk [vmem:[%s2145 + $0x30] sm:$0xff] %vm1304, %v5222
      %5255 = vst.msk [vmem:[%s2145 + $0x38] sm:$0xff] %vm1304, %v5223
      %5256 = vst.msk [vmem:[%s2145 + $0x40] sm:$0xff] %vm1304, %v5224
      %5257 = vst.msk [vmem:[%s2145 + $0x48] sm:$0xff] %vm1304, %v5225
      %5258 = vst.msk [vmem:[%s2145 + $0x50] sm:$0xff] %vm1304, %v5226
      %5259 = vst.msk [vmem:[%s2145 + $0x58] sm:$0xff] %vm1304, %v5227
      %5260 = vst.msk [vmem:[%s2145 + $0x60] sm:$0xff] %vm1304, %v5228
      %5261 = vst.msk [vmem:[%s2145 + $0x68] sm:$0xff] %vm1304, %v5229
      %5262 = vst.msk [vmem:[%s2145 + $0x70] sm:$0xff] %vm1304, %v5230
      %5263 = vst.msk [vmem:[%s2145 + $0x78] sm:$0xff] %vm1304, %v5231
      %5264 = vst.msk [vmem:[%s2145 + $0x80] sm:$0xff] %vm1304, %v5232
      %5265 = vst.msk [vmem:[%s2145 + $0x88] sm:$0xff] %vm1304, %v5233
      %5266 = vst.msk [vmem:[%s2145 + $0x90] sm:$0xff] %vm1304, %v5234
      %5267 = vst.msk [vmem:[%s2145 + $0x98] sm:$0xff] %vm1304, %v5235
      %5268 = vst.msk [vmem:[%s2145 + $0xa0] sm:$0xff] %vm1304, %v5236
      %5269 = vst.msk [vmem:[%s2145 + $0xa8] sm:$0xff] %vm1304, %v5237
      %5270 = vst.msk [vmem:[%s2145 + $0xb0] sm:$0xff] %vm1304, %v5238
      %5271 = vst.msk [vmem:[%s2145 + $0xb8] sm:$0xff] %vm1304, %v5239
      %5272 = vst.msk [vmem:[%s2145 + $0xc0] sm:$0xff] %vm1304, %v5240
      %5273 = vst.msk [vmem:[%s2145 + $0xc8] sm:$0xff] %vm1304, %v5241
      %5274 = vst.msk [vmem:[%s2145 + $0xd0] sm:$0xff] %vm1304, %v5242
      %5275 = vst.msk [vmem:[%s2145 + $0xd8] sm:$0xff] %vm1304, %v5243
      %5276 = vst.msk [vmem:[%s2145 + $0xe0] sm:$0xff] %vm1304, %v5244
      %5277 = vst.msk [vmem:[%s2145 + $0xe8] sm:$0xff] %vm1304, %v5245
      %5278 = vst.msk [vmem:[%s2145 + $0xf0] sm:$0xff] %vm1304, %v5246
      %5279 = vst.msk [vmem:[%s2145 + $0xf8] sm:$0xff] %vm1304, %v5247
      %v5280 = vld [vmem:[%s3403] sm:$0xff]
      %v5281 = vld [vmem:[%s3403 + $0x8] sm:$0xff]
      %v5282 = vld [vmem:[%s3403 + $0x10] sm:$0xff]
      %v5283 = vld [vmem:[%s3403 + $0x18] sm:$0xff]
      %v5284 = vld [vmem:[%s3403 + $0x20] sm:$0xff]
      %v5285 = vld [vmem:[%s3403 + $0x28] sm:$0xff]
      %v5286 = vld [vmem:[%s3403 + $0x30] sm:$0xff]
      %v5287 = vld [vmem:[%s3403 + $0x38] sm:$0xff]
      %v5288 = vld [vmem:[%s3403 + $0x40] sm:$0xff]
      %v5289 = vld [vmem:[%s3403 + $0x48] sm:$0xff]
      %v5290 = vld [vmem:[%s3403 + $0x50] sm:$0xff]
      %v5291 = vld [vmem:[%s3403 + $0x58] sm:$0xff]
      %v5292 = vld [vmem:[%s3403 + $0x60] sm:$0xff]
      %v5293 = vld [vmem:[%s3403 + $0x68] sm:$0xff]
      %v5294 = vld [vmem:[%s3403 + $0x70] sm:$0xff]
      %v5295 = vld [vmem:[%s3403 + $0x78] sm:$0xff]
      %v5296 = vld [vmem:[%s3403 + $0x80] sm:$0xff]
      %v5297 = vld [vmem:[%s3403 + $0x88] sm:$0xff]
      %v5298 = vld [vmem:[%s3403 + $0x90] sm:$0xff]
      %v5299 = vld [vmem:[%s3403 + $0x98] sm:$0xff]
      %v5300 = vld [vmem:[%s3403 + $0xa0] sm:$0xff]
      %v5301 = vld [vmem:[%s3403 + $0xa8] sm:$0xff]
      %v5302 = vld [vmem:[%s3403 + $0xb0] sm:$0xff]
      %v5303 = vld [vmem:[%s3403 + $0xb8] sm:$0xff]
      %v5304 = vld [vmem:[%s3403 + $0xc0] sm:$0xff]
      %v5305 = vld [vmem:[%s3403 + $0xc8] sm:$0xff]
      %v5306 = vld [vmem:[%s3403 + $0xd0] sm:$0xff]
      %v5307 = vld [vmem:[%s3403 + $0xd8] sm:$0xff]
      %v5308 = vld [vmem:[%s3403 + $0xe0] sm:$0xff]
      %v5309 = vld [vmem:[%s3403 + $0xe8] sm:$0xff]
      %v5310 = vld [vmem:[%s3403 + $0xf0] sm:$0xff]
      %v5311 = vld [vmem:[%s3403 + $0xf8] sm:$0xff]
      %v5312 = vsub.f32 %v5280, %v4347
      %v5313 = vsub.f32 %v5281, %v4347
      %v5314 = vsub.f32 %v5282, %v4347
      %v5315 = vsub.f32 %v5283, %v4347
      %v5316 = vsub.f32 %v5284, %v4347
      %v5317 = vsub.f32 %v5285, %v4347
      %v5318 = vsub.f32 %v5286, %v4347
      %v5319 = vsub.f32 %v5287, %v4347
      %v5320 = vsub.f32 %v5288, %v4347
      %v5321 = vsub.f32 %v5289, %v4347
      %v5322 = vsub.f32 %v5290, %v4347
      %v5323 = vsub.f32 %v5291, %v4347
      %v5324 = vsub.f32 %v5292, %v4347
      %v5325 = vsub.f32 %v5293, %v4347
      %v5326 = vsub.f32 %v5294, %v4347
      %v5327 = vsub.f32 %v5295, %v4347
      %v5328 = vsub.f32 %v5296, %v4347
      %v5329 = vsub.f32 %v5297, %v4347
      %v5330 = vsub.f32 %v5298, %v4347
      %v5331 = vsub.f32 %v5299, %v4347
      %v5332 = vsub.f32 %v5300, %v4347
      %v5333 = vsub.f32 %v5301, %v4347
      %v5334 = vsub.f32 %v5302, %v4347
      %v5335 = vsub.f32 %v5303, %v4347
      %v5336 = vsub.f32 %v5304, %v4347
      %v5337 = vsub.f32 %v5305, %v4347
      %v5338 = vsub.f32 %v5306, %v4347
      %v5339 = vsub.f32 %v5307, %v4347
      %v5340 = vsub.f32 %v5308, %v4347
      %v5341 = vsub.f32 %v5309, %v4347
      %v5342 = vsub.f32 %v5310, %v4347
      %v5343 = vsub.f32 %v5311, %v4347
      %v5344 = vmul.f32 %v5312, %v5023
      %v5345 = vmul.f32 %v5313, %v5023
      %v5346 = vmul.f32 %v5314, %v5023
      %v5347 = vmul.f32 %v5315, %v5023
      %v5348 = vmul.f32 %v5316, %v5023
      %v5349 = vmul.f32 %v5317, %v5023
      %v5350 = vmul.f32 %v5318, %v5023
      %v5351 = vmul.f32 %v5319, %v5023
      %v5352 = vmul.f32 %v5320, %v5023
      %v5353 = vmul.f32 %v5321, %v5023
      %v5354 = vmul.f32 %v5322, %v5023
      %v5355 = vmul.f32 %v5323, %v5023
      %v5356 = vmul.f32 %v5324, %v5023
      %v5357 = vmul.f32 %v5325, %v5023
      %v5358 = vmul.f32 %v5326, %v5023
      %v5359 = vmul.f32 %v5327, %v5023
      %v5360 = vmul.f32 %v5328, %v5023
      %v5361 = vmul.f32 %v5329, %v5023
      %v5362 = vmul.f32 %v5330, %v5023
      %v5363 = vmul.f32 %v5331, %v5023
      %v5364 = vmul.f32 %v5332, %v5023
      %v5365 = vmul.f32 %v5333, %v5023
      %v5366 = vmul.f32 %v5334, %v5023
      %v5367 = vmul.f32 %v5335, %v5023
      %v5368 = vmul.f32 %v5336, %v5023
      %v5369 = vmul.f32 %v5337, %v5023
      %v5370 = vmul.f32 %v5338, %v5023
      %v5371 = vmul.f32 %v5339, %v5023
      %v5372 = vmul.f32 %v5340, %v5023
      %v5373 = vmul.f32 %v5341, %v5023
      %v5374 = vmul.f32 %v5342, %v5023
      %v5375 = vmul.f32 %v5343, %v5023
      %v5376 = vmax.f32 %v5344, 0.0
      %v5377 = vmax.f32 %v5345, 0.0
      %v5378 = vmax.f32 %v5346, 0.0
      %v5379 = vmax.f32 %v5347, 0.0
      %v5380 = vmax.f32 %v5348, 0.0
      %v5381 = vmax.f32 %v5349, 0.0
      %v5382 = vmax.f32 %v5350, 0.0
      %v5383 = vmax.f32 %v5351, 0.0
      %v5384 = vmax.f32 %v5352, 0.0
      %v5385 = vmax.f32 %v5353, 0.0
      %v5386 = vmax.f32 %v5354, 0.0
      %v5387 = vmax.f32 %v5355, 0.0
      %v5388 = vmax.f32 %v5356, 0.0
      %v5389 = vmax.f32 %v5357, 0.0
      %v5390 = vmax.f32 %v5358, 0.0
      %v5391 = vmax.f32 %v5359, 0.0
      %v5392 = vmax.f32 %v5360, 0.0
      %v5393 = vmax.f32 %v5361, 0.0
      %v5394 = vmax.f32 %v5362, 0.0
      %v5395 = vmax.f32 %v5363, 0.0
      %v5396 = vmax.f32 %v5364, 0.0
      %v5397 = vmax.f32 %v5365, 0.0
      %v5398 = vmax.f32 %v5366, 0.0
      %v5399 = vmax.f32 %v5367, 0.0
      %v5400 = vmax.f32 %v5368, 0.0
      %v5401 = vmax.f32 %v5369, 0.0
      %v5402 = vmax.f32 %v5370, 0.0
      %v5403 = vmax.f32 %v5371, 0.0
      %v5404 = vmax.f32 %v5372, 0.0
      %v5405 = vmax.f32 %v5373, 0.0
      %v5406 = vmax.f32 %v5374, 0.0
      %v5407 = vmax.f32 %v5375, 0.0
      %5408 = vst.msk [vmem:[%s3403] sm:$0xff] %vm1304, %v5376
      %5409 = vst.msk [vmem:[%s3403 + $0x8] sm:$0xff] %vm1304, %v5377
      %5410 = vst.msk [vmem:[%s3403 + $0x10] sm:$0xff] %vm1304, %v5378
      %5411 = vst.msk [vmem:[%s3403 + $0x18] sm:$0xff] %vm1304, %v5379
      %5412 = vst.msk [vmem:[%s3403 + $0x20] sm:$0xff] %vm1304, %v5380
      %5413 = vst.msk [vmem:[%s3403 + $0x28] sm:$0xff] %vm1304, %v5381
      %5414 = vst.msk [vmem:[%s3403 + $0x30] sm:$0xff] %vm1304, %v5382
      %5415 = vst.msk [vmem:[%s3403 + $0x38] sm:$0xff] %vm1304, %v5383
      %5416 = vst.msk [vmem:[%s3403 + $0x40] sm:$0xff] %vm1304, %v5384
      %5417 = vst.msk [vmem:[%s3403 + $0x48] sm:$0xff] %vm1304, %v5385
      %5418 = vst.msk [vmem:[%s3403 + $0x50] sm:$0xff] %vm1304, %v5386
      %5419 = vst.msk [vmem:[%s3403 + $0x58] sm:$0xff] %vm1304, %v5387
      %5420 = vst.msk [vmem:[%s3403 + $0x60] sm:$0xff] %vm1304, %v5388
      %5421 = vst.msk [vmem:[%s3403 + $0x68] sm:$0xff] %vm1304, %v5389
      %5422 = vst.msk [vmem:[%s3403 + $0x70] sm:$0xff] %vm1304, %v5390
      %5423 = vst.msk [vmem:[%s3403 + $0x78] sm:$0xff] %vm1304, %v5391
      %5424 = vst.msk [vmem:[%s3403 + $0x80] sm:$0xff] %vm1304, %v5392
      %5425 = vst.msk [vmem:[%s3403 + $0x88] sm:$0xff] %vm1304, %v5393
      %5426 = vst.msk [vmem:[%s3403 + $0x90] sm:$0xff] %vm1304, %v5394
      %5427 = vst.msk [vmem:[%s3403 + $0x98] sm:$0xff] %vm1304, %v5395
      %5428 = vst.msk [vmem:[%s3403 + $0xa0] sm:$0xff] %vm1304, %v5396
      %5429 = vst.msk [vmem:[%s3403 + $0xa8] sm:$0xff] %vm1304, %v5397
      %5430 = vst.msk [vmem:[%s3403 + $0xb0] sm:$0xff] %vm1304, %v5398
      %5431 = vst.msk [vmem:[%s3403 + $0xb8] sm:$0xff] %vm1304, %v5399
      %5432 = vst.msk [vmem:[%s3403 + $0xc0] sm:$0xff] %vm1304, %v5400
      %5433 = vst.msk [vmem:[%s3403 + $0xc8] sm:$0xff] %vm1304, %v5401
      %5434 = vst.msk [vmem:[%s3403 + $0xd0] sm:$0xff] %vm1304, %v5402
      %5435 = vst.msk [vmem:[%s3403 + $0xd8] sm:$0xff] %vm1304, %v5403
      %5436 = vst.msk [vmem:[%s3403 + $0xe0] sm:$0xff] %vm1304, %v5404
      %5437 = vst.msk [vmem:[%s3403 + $0xe8] sm:$0xff] %vm1304, %v5405
      %5438 = vst.msk [vmem:[%s3403 + $0xf0] sm:$0xff] %vm1304, %v5406
      %5439 = vst.msk [vmem:[%s3403 + $0xf8] sm:$0xff] %vm1304, %v5407
      %v5440 = vld [vmem:[%s4244] sm:$0xff]
      %v5441 = vld [vmem:[%s4244 + $0x8] sm:$0xff]
      %v5442 = vld [vmem:[%s4244 + $0x10] sm:$0xff]
      %v5443 = vld [vmem:[%s4244 + $0x18] sm:$0xff]
      %v5444 = vld [vmem:[%s4244 + $0x20] sm:$0xff]
      %v5445 = vld [vmem:[%s4244 + $0x28] sm:$0xff]
      %v5446 = vld [vmem:[%s4244 + $0x30] sm:$0xff]
      %v5447 = vld [vmem:[%s4244 + $0x38] sm:$0xff]
      %v5448 = vld [vmem:[%s4244 + $0x40] sm:$0xff]
      %v5449 = vld [vmem:[%s4244 + $0x48] sm:$0xff]
      %v5450 = vld [vmem:[%s4244 + $0x50] sm:$0xff]
      %v5451 = vld [vmem:[%s4244 + $0x58] sm:$0xff]
      %v5452 = vld [vmem:[%s4244 + $0x60] sm:$0xff]
      %v5453 = vld [vmem:[%s4244 + $0x68] sm:$0xff]
      %v5454 = vld [vmem:[%s4244 + $0x70] sm:$0xff]
      %v5455 = vld [vmem:[%s4244 + $0x78] sm:$0xff]
      %v5456 = vld [vmem:[%s4244 + $0x80] sm:$0xff]
      %v5457 = vld [vmem:[%s4244 + $0x88] sm:$0xff]
      %v5458 = vld [vmem:[%s4244 + $0x90] sm:$0xff]
      %v5459 = vld [vmem:[%s4244 + $0x98] sm:$0xff]
      %v5460 = vld [vmem:[%s4244 + $0xa0] sm:$0xff]
      %v5461 = vld [vmem:[%s4244 + $0xa8] sm:$0xff]
      %v5462 = vld [vmem:[%s4244 + $0xb0] sm:$0xff]
      %v5463 = vld [vmem:[%s4244 + $0xb8] sm:$0xff]
      %v5464 = vld [vmem:[%s4244 + $0xc0] sm:$0xff]
      %v5465 = vld [vmem:[%s4244 + $0xc8] sm:$0xff]
      %v5466 = vld [vmem:[%s4244 + $0xd0] sm:$0xff]
      %v5467 = vld [vmem:[%s4244 + $0xd8] sm:$0xff]
      %v5468 = vld [vmem:[%s4244 + $0xe0] sm:$0xff]
      %v5469 = vld [vmem:[%s4244 + $0xe8] sm:$0xff]
      %v5470 = vld [vmem:[%s4244 + $0xf0] sm:$0xff]
      %v5471 = vld [vmem:[%s4244 + $0xf8] sm:$0xff]
      %v5472 = vsub.f32 %v5440, %v4347
      %v5473 = vsub.f32 %v5441, %v4347
      %v5474 = vsub.f32 %v5442, %v4347
      %v5475 = vsub.f32 %v5443, %v4347
      %v5476 = vsub.f32 %v5444, %v4347
      %v5477 = vsub.f32 %v5445, %v4347
      %v5478 = vsub.f32 %v5446, %v4347
      %v5479 = vsub.f32 %v5447, %v4347
      %v5480 = vsub.f32 %v5448, %v4347
      %v5481 = vsub.f32 %v5449, %v4347
      %v5482 = vsub.f32 %v5450, %v4347
      %v5483 = vsub.f32 %v5451, %v4347
      %v5484 = vsub.f32 %v5452, %v4347
      %v5485 = vsub.f32 %v5453, %v4347
      %v5486 = vsub.f32 %v5454, %v4347
      %v5487 = vsub.f32 %v5455, %v4347
      %v5488 = vsub.f32 %v5456, %v4347
      %v5489 = vsub.f32 %v5457, %v4347
      %v5490 = vsub.f32 %v5458, %v4347
      %v5491 = vsub.f32 %v5459, %v4347
      %v5492 = vsub.f32 %v5460, %v4347
      %v5493 = vsub.f32 %v5461, %v4347
      %v5494 = vsub.f32 %v5462, %v4347
      %v5495 = vsub.f32 %v5463, %v4347
      %v5496 = vsub.f32 %v5464, %v4347
      %v5497 = vsub.f32 %v5465, %v4347
      %v5498 = vsub.f32 %v5466, %v4347
      %v5499 = vsub.f32 %v5467, %v4347
      %v5500 = vsub.f32 %v5468, %v4347
      %v5501 = vsub.f32 %v5469, %v4347
      %v5502 = vsub.f32 %v5470, %v4347
      %v5503 = vsub.f32 %v5471, %v4347
      %v5504 = vmul.f32 %v5472, %v5023
      %v5505 = vmul.f32 %v5473, %v5023
      %v5506 = vmul.f32 %v5474, %v5023
      %v5507 = vmul.f32 %v5475, %v5023
      %v5508 = vmul.f32 %v5476, %v5023
      %v5509 = vmul.f32 %v5477, %v5023
      %v5510 = vmul.f32 %v5478, %v5023
      %v5511 = vmul.f32 %v5479, %v5023
      %v5512 = vmul.f32 %v5480, %v5023
      %v5513 = vmul.f32 %v5481, %v5023
      %v5514 = vmul.f32 %v5482, %v5023
      %v5515 = vmul.f32 %v5483, %v5023
      %v5516 = vmul.f32 %v5484, %v5023
      %v5517 = vmul.f32 %v5485, %v5023
      %v5518 = vmul.f32 %v5486, %v5023
      %v5519 = vmul.f32 %v5487, %v5023
      %v5520 = vmul.f32 %v5488, %v5023
      %v5521 = vmul.f32 %v5489, %v5023
      %v5522 = vmul.f32 %v5490, %v5023
      %v5523 = vmul.f32 %v5491, %v5023
      %v5524 = vmul.f32 %v5492, %v5023
      %v5525 = vmul.f32 %v5493, %v5023
      %v5526 = vmul.f32 %v5494, %v5023
      %v5527 = vmul.f32 %v5495, %v5023
      %v5528 = vmul.f32 %v5496, %v5023
      %v5529 = vmul.f32 %v5497, %v5023
      %v5530 = vmul.f32 %v5498, %v5023
      %v5531 = vmul.f32 %v5499, %v5023
      %v5532 = vmul.f32 %v5500, %v5023
      %v5533 = vmul.f32 %v5501, %v5023
      %v5534 = vmul.f32 %v5502, %v5023
      %v5535 = vmul.f32 %v5503, %v5023
      %v5536 = vmax.f32 %v5504, 0.0
      %v5537 = vmax.f32 %v5505, 0.0
      %v5538 = vmax.f32 %v5506, 0.0
      %v5539 = vmax.f32 %v5507, 0.0
      %v5540 = vmax.f32 %v5508, 0.0
      %v5541 = vmax.f32 %v5509, 0.0
      %v5542 = vmax.f32 %v5510, 0.0
      %v5543 = vmax.f32 %v5511, 0.0
      %v5544 = vmax.f32 %v5512, 0.0
      %v5545 = vmax.f32 %v5513, 0.0
      %v5546 = vmax.f32 %v5514, 0.0
      %v5547 = vmax.f32 %v5515, 0.0
      %v5548 = vmax.f32 %v5516, 0.0
      %v5549 = vmax.f32 %v5517, 0.0
      %v5550 = vmax.f32 %v5518, 0.0
      %v5551 = vmax.f32 %v5519, 0.0
      %v5552 = vmax.f32 %v5520, 0.0
      %v5553 = vmax.f32 %v5521, 0.0
      %v5554 = vmax.f32 %v5522, 0.0
      %v5555 = vmax.f32 %v5523, 0.0
      %v5556 = vmax.f32 %v5524, 0.0
      %v5557 = vmax.f32 %v5525, 0.0
      %v5558 = vmax.f32 %v5526, 0.0
      %v5559 = vmax.f32 %v5527, 0.0
      %v5560 = vmax.f32 %v5528, 0.0
      %v5561 = vmax.f32 %v5529, 0.0
      %v5562 = vmax.f32 %v5530, 0.0
      %v5563 = vmax.f32 %v5531, 0.0
      %v5564 = vmax.f32 %v5532, 0.0
      %v5565 = vmax.f32 %v5533, 0.0
      %v5566 = vmax.f32 %v5534, 0.0
      %v5567 = vmax.f32 %v5535, 0.0
      %5568 = vst.msk [vmem:[%s4244] sm:$0xff] %vm1304, %v5536
      %5569 = vst.msk [vmem:[%s4244 + $0x8] sm:$0xff] %vm1304, %v5537
      %5570 = vst.msk [vmem:[%s4244 + $0x10] sm:$0xff] %vm1304, %v5538
      %5571 = vst.msk [vmem:[%s4244 + $0x18] sm:$0xff] %vm1304, %v5539
      %5572 = vst.msk [vmem:[%s4244 + $0x20] sm:$0xff] %vm1304, %v5540
      %5573 = vst.msk [vmem:[%s4244 + $0x28] sm:$0xff] %vm1304, %v5541
      %5574 = vst.msk [vmem:[%s4244 + $0x30] sm:$0xff] %vm1304, %v5542
      %5575 = vst.msk [vmem:[%s4244 + $0x38] sm:$0xff] %vm1304, %v5543
      %5576 = vst.msk [vmem:[%s4244 + $0x40] sm:$0xff] %vm1304, %v5544
      %5577 = vst.msk [vmem:[%s4244 + $0x48] sm:$0xff] %vm1304, %v5545
      %5578 = vst.msk [vmem:[%s4244 + $0x50] sm:$0xff] %vm1304, %v5546
      %5579 = vst.msk [vmem:[%s4244 + $0x58] sm:$0xff] %vm1304, %v5547
      %5580 = vst.msk [vmem:[%s4244 + $0x60] sm:$0xff] %vm1304, %v5548
      %5581 = vst.msk [vmem:[%s4244 + $0x68] sm:$0xff] %vm1304, %v5549
      %5582 = vst.msk [vmem:[%s4244 + $0x70] sm:$0xff] %vm1304, %v5550
      %5583 = vst.msk [vmem:[%s4244 + $0x78] sm:$0xff] %vm1304, %v5551
      %5584 = vst.msk [vmem:[%s4244 + $0x80] sm:$0xff] %vm1304, %v5552
      %5585 = vst.msk [vmem:[%s4244 + $0x88] sm:$0xff] %vm1304, %v5553
      %5586 = vst.msk [vmem:[%s4244 + $0x90] sm:$0xff] %vm1304, %v5554
      %5587 = vst.msk [vmem:[%s4244 + $0x98] sm:$0xff] %vm1304, %v5555
      %5588 = vst.msk [vmem:[%s4244 + $0xa0] sm:$0xff] %vm1304, %v5556
      %5589 = vst.msk [vmem:[%s4244 + $0xa8] sm:$0xff] %vm1304, %v5557
      %5590 = vst.msk [vmem:[%s4244 + $0xb0] sm:$0xff] %vm1304, %v5558
      %5591 = vst.msk [vmem:[%s4244 + $0xb8] sm:$0xff] %vm1304, %v5559
      %5592 = vst.msk [vmem:[%s4244 + $0xc0] sm:$0xff] %vm1304, %v5560
      %5593 = vst.msk [vmem:[%s4244 + $0xc8] sm:$0xff] %vm1304, %v5561
      %5594 = vst.msk [vmem:[%s4244 + $0xd0] sm:$0xff] %vm1304, %v5562
      %5595 = vst.msk [vmem:[%s4244 + $0xd8] sm:$0xff] %vm1304, %v5563
      %5596 = vst.msk [vmem:[%s4244 + $0xe0] sm:$0xff] %vm1304, %v5564
      %5597 = vst.msk [vmem:[%s4244 + $0xe8] sm:$0xff] %vm1304, %v5565
      %5598 = vst.msk [vmem:[%s4244 + $0xf0] sm:$0xff] %vm1304, %v5566
      %5599 = vst.msk [vmem:[%s4244 + $0xf8] sm:$0xff] %vm1304, %v5567
      %p5600 = scmp.lt.s32.totalorder %s13, 1
      %s5601 = scalar_select %p5600, %s13, 1
      %s5602 = smul.addr %s5601, 128
      %s5603 = smul.addr %s5602, 8
      %s5604 = scalar_lea.vmem %s2, %s5603
      // Predicated region
      $region29: #{unet_up_forward.1} parent=27 // pred_check
        %p5605 = pneg %p78
      $region30: #{unet_up_forward.1} parent=27 // pred_check_branch
        %5607 = sbr.rel (%p5605) target = $region32
      $region31: #{unet_up_forward.1} parent=27 // pred_region
        _
      $region32: #{unet_up_forward.1} parent=27 // pred_fallthru
        _
    $region28: #{unet_up_forward.1} parent=5 // pred_fallthru
      _
    %p5608 = scmp.le.s32.totalorder 2, %s8
    // Predicated region
    $region33: #{unet_up_forward.1} parent=5 // pred_check
      %p5609 = pneg %p5608
    $region34: #{unet_up_forward.1} parent=5 // pred_check_branch
      %5611 = sbr.rel (%p5609) target = $region36
    $region35: #{unet_up_forward.1} parent=5 // pred_region
      %s5612 = ssub.s32 %s8, 2
      // Predicated region
      $region37: #{unet_up_forward.1} parent=35 // pred_check
        %p5613 = pneg %p84
      $region38: #{unet_up_forward.1} parent=35 // pred_check_branch
        %5615 = sbr.rel (%p5613) target = $region40
      $region39: #{unet_up_forward.1} parent=35 // pred_region
        %p5616 = scmp.lt.s32.totalorder %s14, 1
        %s5617 = scalar_select %p5616, %s14, 1
        %s5618 = smul.addr %s5617, 128
        %s5619 = smul.addr %s5618, 8
        %s5620 = scalar_lea.vmem %s2, %s5619
      $region40: #{unet_up_forward.1} parent=35 // pred_fallthru
        _
    $region36: #{unet_up_forward.1} parent=5 // pred_fallthru
      _
  $region6: #{unet_up_forward.1} parent=0 // loop_footer
    %s12 = sadd.s32 1, %s8
  $region7: #{unet_up_forward.1} parent=0 // loop_footer_branch
    %7 = sbr.rel target = $region3
  $region8: #{unet_up_forward.1} parent=0 // loop_exit
    _

</llo_original>
